<compile_context>
chip_gen: v5e
topology: v5e:2x2
jax: 0.10.0
libtpu: 0.0.40
codegen_flags: <defaults>
</compile_context>

<pallas_src>
import jax
import jax.numpy as jnp
from jax.experimental import pallas as pl
from jax.experimental.pallas import tpu as pltpu


def _round_up(x, m):
    return ((x + m - 1) // m) * m


def _pick_tile(batch, tile_b):
    """Batch-tile selection.

    * Cap the tile so tiny batches don't pad all the way up to `tile_b`.
    * Keep >= 2 grid steps whenever the batch spans more than one minimal
      128-row tile, so the "parallel" batch axis can be sharded across both
      v7x TensorCores (no-op on v5e/v6e which have a single TC).
    """
    tile = min(tile_b, max(128, _round_up(batch, 128)))
    if batch > 128 and pl.cdiv(batch, tile) < 2:
        tile = max(128, _round_up(pl.cdiv(batch, 2), 128))
    return tile


def critic_ppo_kernel(x_ref,
                      w0_ref, b0_ref,
                      w1_ref, b1_ref,
                      w2_ref, b2_ref,
                      w3_ref, b3_ref,
                      o_ref):
    # MXU matmuls: bf16 operands, f32 accumulation.
    x = x_ref[...].astype(jnp.bfloat16)

    # Layer 0: Linear -> ReLU (ReLU applied after the bf16 downcast that the
    # next matmul needs anyway; exact since relu commutes with the downcast).
    h = jnp.dot(x, w0_ref[...], preferred_element_type=jnp.float32) + b0_ref[...]
    h = jnp.maximum(h.astype(jnp.bfloat16), 0.0)

    # Layer 1: Linear -> ReLU
    h = jnp.dot(h, w1_ref[...], preferred_element_type=jnp.float32) + b1_ref[...]
    h = jnp.maximum(h.astype(jnp.bfloat16), 0.0)

    # Layer 2: Linear -> Hardswish core.  hardswish(h) = h * relu6(h+3) / 6;
    # the 1/6 is pre-folded into w3 (w3_ref already holds w3 / 6).
    h = jnp.dot(h, w2_ref[...], preferred_element_type=jnp.float32) + b2_ref[...]
    hs = h * jnp.clip(h + 3.0, 0.0, 6.0)          # = 6 * hardswish(h), f32

    # Layer 3: (mid -> 1) projection on the VPU + XLU lane reduction
    # (avoids a degenerate N=1 MXU matmul).
    o_ref[...] = jnp.sum(hs * w3_ref[...], axis=-1, keepdims=True) + b3_ref[...]


def critic_ppo_forward(state, prepared, *, tile_b=512):
    """state: (B, state_dim) f32.  prepared: output of prepare_params()."""
    B, state_dim = state.shape
    mid = prepared["w1"].shape[0]

    tile = _pick_tile(B, tile_b)
    n_tiles = pl.cdiv(B, tile)
    b_pad = n_tiles * tile
    if b_pad != B:
        # TODO(synk): for very large ragged batches, replace this pad with an
        # in-kernel masked last tile to avoid one extra HBM round trip.
        state = jnp.pad(state, ((0, b_pad - B), (0, 0)))

    const = lambda i: (0, 0)  # weights/biases: same block for every batch tile

    compiler_kwargs = dict(dimension_semantics=("parallel",))
    # At tile <= 1024 total VMEM (bf16 weights ~1 MiB + a few (tile, mid) f32
    # activation slabs + double-buffered state tile) stays well under the
    # 32 MiB default scoped limit on all generations; only bump for huge tiles.
    if tile >= 2048:
        compiler_kwargs["vmem_limit_bytes"] = 48 * 1024 * 1024

    out = pl.pallas_call(
        critic_ppo_kernel,
        out_shape=jax.ShapeDtypeStruct((b_pad, 1), jnp.float32),
        grid=(n_tiles,),
        in_specs=[
            pl.BlockSpec((tile, state_dim), lambda i: (i, 0)),  # state tile
            pl.BlockSpec((state_dim, mid), const),              # w0 (bf16)
            pl.BlockSpec((1, mid), const),                      # b0
            pl.BlockSpec((mid, mid), const),                    # w1 (bf16)
            pl.BlockSpec((1, mid), const),                      # b1
            pl.BlockSpec((mid, mid), const),                    # w2 (bf16)
            pl.BlockSpec((1, mid), const),                      # b2
            pl.BlockSpec((1, mid), const),                      # w3 / 6
            pl.BlockSpec((1, 1), const),                        # b3
        ],
        out_specs=pl.BlockSpec((tile, 1), lambda i: (i, 0)),
        compiler_params=pltpu.CompilerParams(**compiler_kwargs),
    )(state,
      prepared["w0"], prepared["b0"],
      prepared["w1"], prepared["b1"],
      prepared["w2"], prepared["b2"],
      prepared["w3_over_6"], prepared["b3"])

    return out[:B]


def init_params(key, state_dim, mid_dim):
    """Deterministic init mimicking nn.Linear default (uniform ±1/sqrt(fan_in))."""
    def linear(k, fan_in, fan_out):
        kw, kb = jax.random.split(k)
        bound = 1.0 / jnp.sqrt(float(fan_in))
        w = jax.random.uniform(kw, (fan_in, fan_out), jnp.float32, -bound, bound)
        b = jax.random.uniform(kb, (1, fan_out), jnp.float32, -bound, bound)
        return w, b

    k0, k1, k2, k3 = jax.random.split(key, 4)
    w0, b0 = linear(k0, state_dim, mid_dim)
    w1, b1 = linear(k1, mid_dim, mid_dim)
    w2, b2 = linear(k2, mid_dim, mid_dim)
    w3, b3 = linear(k3, mid_dim, 1)
    return {"w0": w0, "b0": b0, "w1": w1, "b1": b1,
            "w2": w2, "b2": b2, "w3": w3, "b3": b3}


def prepare_params(params):
    """One-time kernel-parameter prep (do NOT call per forward).

    * Casts the three big matmul weights to bf16 (MXU-native; halves weight
      DMA and avoids a per-call astype op in the wrapper).
    * Folds the hardswish 1/6 into the final projection row.
    * Reshapes biases / final row to lane-dense 2-D layouts.
    """
    mid = params["w1"].shape[0]
    return {
        "w0": params["w0"].astype(jnp.bfloat16),
        "b0": params["b0"].reshape(1, -1).astype(jnp.float32),
        "w1": params["w1"].astype(jnp.bfloat16),
        "b1": params["b1"].reshape(1, -1).astype(jnp.float32),
        "w2": params["w2"].astype(jnp.bfloat16),
        "b2": params["b2"].reshape(1, -1).astype(jnp.float32),
        "w3_over_6": (params["w3"].reshape(1, mid) / 6.0).astype(jnp.float32),
        "b3": params["b3"].reshape(1, 1).astype(jnp.float32),
    }


def reference_forward(state, p):
    """Pure-JAX reference with the same bf16-operand / f32-accumulate semantics."""
    def mm(x, w):
        return jnp.dot(x.astype(jnp.bfloat16), w,
                       preferred_element_type=jnp.float32)

    h = jnp.maximum(mm(state, p["w0"]) + p["b0"], 0.0)
    h = jnp.maximum(mm(h, p["w1"]) + p["b1"], 0.0)
    h = mm(h, p["w2"]) + p["b2"]
    hs = h * jnp.clip(h + 3.0, 0.0, 6.0)          # 6 * hardswish(h)
    return jnp.sum(hs * p["w3_over_6"], axis=-1, keepdims=True) + p["b3"]


if __name__ == "__main__":
    key = jax.random.PRNGKey(0)
    k_state, k_params = jax.random.split(key)

    batch = 4
    state_dim = 32
    mid_dim = 512  # module default

    state = jax.random.normal(k_state, (batch, state_dim), jnp.float32)
    params = prepare_params(init_params(k_params, state_dim, mid_dim))

    out = jax.block_until_ready(critic_ppo_forward(state, params))
    ref = reference_forward(state, params)

    assert out.shape == (batch, 1), out.shape
    assert jnp.allclose(out, ref, atol=1e-3, rtol=1e-3), (out, ref)

    print("KERNEL_OK")
</pallas_src>

<mosaic_0001>
module attributes {stable_mosaic.version = 11 : i64} {
  func.func @critic_ppo_kernel(%arg0: i32, %arg1: memref<128x32xf32, #tpu.memory_space<vmem>>, %arg2: memref<32x512xbf16, #tpu.memory_space<vmem>>, %arg3: memref<1x512xf32, #tpu.memory_space<vmem>>, %arg4: memref<512x512xbf16, #tpu.memory_space<vmem>>, %arg5: memref<1x512xf32, #tpu.memory_space<vmem>>, %arg6: memref<512x512xbf16, #tpu.memory_space<vmem>>, %arg7: memref<1x512xf32, #tpu.memory_space<vmem>>, %arg8: memref<1x512xf32, #tpu.memory_space<vmem>>, %arg9: memref<1x1xf32, #tpu.memory_space<vmem>>, %arg10: memref<128x1xf32, #tpu.memory_space<vmem>>) attributes {dimension_semantics = [#tpu.dimension_semantics<parallel>], iteration_bounds = array<i64: 1>, scalar_prefetch = 0 : i64, scratch_operands = 0 : i64, tpu.core_type = #tpu.core_type<tc>, window_params = [{transform_indices = @transform_0, window_bounds = array<i64: 128, 32>}, {pipeline_mode = #tpu.pipeline_mode<synchronous>, transform_indices = @transform_1, window_bounds = array<i64: 32, 512>}, {pipeline_mode = #tpu.pipeline_mode<synchronous>, transform_indices = @transform_2, window_bounds = array<i64: 1, 512>}, {pipeline_mode = #tpu.pipeline_mode<synchronous>, transform_indices = @transform_3, window_bounds = array<i64: 512, 512>}, {pipeline_mode = #tpu.pipeline_mode<synchronous>, transform_indices = @transform_4, window_bounds = array<i64: 1, 512>}, {pipeline_mode = #tpu.pipeline_mode<synchronous>, transform_indices = @transform_5, window_bounds = array<i64: 512, 512>}, {pipeline_mode = #tpu.pipeline_mode<synchronous>, transform_indices = @transform_6, window_bounds = array<i64: 1, 512>}, {pipeline_mode = #tpu.pipeline_mode<synchronous>, transform_indices = @transform_7, window_bounds = array<i64: 1, 512>}, {pipeline_mode = #tpu.pipeline_mode<synchronous>, transform_indices = @transform_8, window_bounds = array<i64: 1, 1>}, {transform_indices = @transform_9, window_bounds = array<i64: 128, 1>}]} {
    %c0 = arith.constant 0 : index
    %c0_0 = arith.constant 0 : index
    %0 = vector.load %arg1[%c0, %c0_0] : memref<128x32xf32, #tpu.memory_space<vmem>>, vector<128x32xf32>
    %1 = arith.truncf %0 : vector<128x32xf32> to vector<128x32xbf16>
    %c0_1 = arith.constant 0 : index
    %c0_2 = arith.constant 0 : index
    %2 = vector.load %arg2[%c0_1, %c0_2] : memref<32x512xbf16, #tpu.memory_space<vmem>>, vector<32x512xbf16>
    %cst = arith.constant dense<0.000000e+00> : vector<128x512xf32>
    %3 = tpu.matmul %1, %2, %cst {dimension_numbers = #tpu.dot_dimension_numbers<[1], [0], [0], [1], [0, 0, 1, 1], [], []>} : vector<128x32xbf16>, vector<32x512xbf16>, vector<128x512xf32> -> vector<128x512xf32>
    %c0_3 = arith.constant 0 : index
    %c0_4 = arith.constant 0 : index
    %4 = vector.load %arg3[%c0_3, %c0_4] : memref<1x512xf32, #tpu.memory_space<vmem>>, vector<1x512xf32>
    %5 = vector.broadcast %4 : vector<1x512xf32> to vector<128x512xf32>
    %6 = arith.addf %3, %5 : vector<128x512xf32>
    %7 = arith.truncf %6 : vector<128x512xf32> to vector<128x512xbf16>
    %cst_5 = arith.constant 0.000000e+00 : bf16
    %8 = vector.broadcast %cst_5 : bf16 to vector<128x512xbf16>
    %9 = arith.maximumf %7, %8 : vector<128x512xbf16>
    %c0_6 = arith.constant 0 : index
    %c0_7 = arith.constant 0 : index
    %10 = vector.load %arg4[%c0_6, %c0_7] : memref<512x512xbf16, #tpu.memory_space<vmem>>, vector<512x512xbf16>
    %cst_8 = arith.constant dense<0.000000e+00> : vector<128x512xf32>
    %11 = tpu.matmul %9, %10, %cst_8 {dimension_numbers = #tpu.dot_dimension_numbers<[1], [0], [0], [1], [0, 0, 1, 1], [], []>} : vector<128x512xbf16>, vector<512x512xbf16>, vector<128x512xf32> -> vector<128x512xf32>
    %c0_9 = arith.constant 0 : index
    %c0_10 = arith.constant 0 : index
    %12 = vector.load %arg5[%c0_9, %c0_10] : memref<1x512xf32, #tpu.memory_space<vmem>>, vector<1x512xf32>
    %13 = vector.broadcast %12 : vector<1x512xf32> to vector<128x512xf32>
    %14 = arith.addf %11, %13 : vector<128x512xf32>
    %15 = arith.truncf %14 : vector<128x512xf32> to vector<128x512xbf16>
    %cst_11 = arith.constant 0.000000e+00 : bf16
    %16 = vector.broadcast %cst_11 : bf16 to vector<128x512xbf16>
    %17 = arith.maximumf %15, %16 : vector<128x512xbf16>
    %c0_12 = arith.constant 0 : index
    %c0_13 = arith.constant 0 : index
    %18 = vector.load %arg6[%c0_12, %c0_13] : memref<512x512xbf16, #tpu.memory_space<vmem>>, vector<512x512xbf16>
    %cst_14 = arith.constant dense<0.000000e+00> : vector<128x512xf32>
    %19 = tpu.matmul %17, %18, %cst_14 {dimension_numbers = #tpu.dot_dimension_numbers<[1], [0], [0], [1], [0, 0, 1, 1], [], []>} : vector<128x512xbf16>, vector<512x512xbf16>, vector<128x512xf32> -> vector<128x512xf32>
    %c0_15 = arith.constant 0 : index
    %c0_16 = arith.constant 0 : index
    %20 = vector.load %arg7[%c0_15, %c0_16] : memref<1x512xf32, #tpu.memory_space<vmem>>, vector<1x512xf32>
    %21 = vector.broadcast %20 : vector<1x512xf32> to vector<128x512xf32>
    %22 = arith.addf %19, %21 : vector<128x512xf32>
    %cst_17 = arith.constant 3.000000e+00 : f32
    %23 = vector.broadcast %cst_17 : f32 to vector<128x512xf32>
    %24 = arith.addf %22, %23 : vector<128x512xf32>
    %cst_18 = arith.constant 0.000000e+00 : f32
    %cst_19 = arith.constant 6.000000e+00 : f32
    %25 = vector.broadcast %cst_18 : f32 to vector<128x512xf32>
    %26 = arith.maximumf %25, %24 : vector<128x512xf32>
    %27 = vector.broadcast %cst_19 : f32 to vector<128x512xf32>
    %28 = arith.minimumf %27, %26 : vector<128x512xf32>
    %29 = arith.mulf %22, %28 : vector<128x512xf32>
    %c0_20 = arith.constant 0 : index
    %c0_21 = arith.constant 0 : index
    %30 = vector.load %arg8[%c0_20, %c0_21] : memref<1x512xf32, #tpu.memory_space<vmem>>, vector<1x512xf32>
    %31 = vector.broadcast %30 : vector<1x512xf32> to vector<128x512xf32>
    %32 = arith.mulf %29, %31 : vector<128x512xf32>
    %cst_22 = arith.constant dense<0.000000e+00> : vector<128xf32>
    %33 = vector.multi_reduction <add>, %32, %cst_22 [1] : vector<128x512xf32> to vector<128xf32>
    %34 = vector.shape_cast %33 : vector<128xf32> to vector<128x1xf32>
    %c0_23 = arith.constant 0 : index
    %c0_24 = arith.constant 0 : index
    %35 = vector.load %arg9[%c0_23, %c0_24] : memref<1x1xf32, #tpu.memory_space<vmem>>, vector<1x1xf32>
    %36 = vector.broadcast %35 : vector<1x1xf32> to vector<128x1xf32>
    %37 = arith.addf %34, %36 : vector<128x1xf32>
    %c0_25 = arith.constant 0 : index
    %c0_26 = arith.constant 0 : index
    %38 = vector.load %arg10[%c0_25, %c0_26] : memref<128x1xf32, #tpu.memory_space<vmem>>, vector<128x1xf32>
    tpu.vector_store %arg10[%c0_25, %c0_26], %37 {strides = array<i32>} : memref<128x1xf32, #tpu.memory_space<vmem>>, vector<128x1xf32>,
    return
  }
  func.func @transform_0(%arg0: i32) -> (i32, i32) {
    %c0_i32 = arith.constant 0 : i32
    %c0_i32_0 = arith.constant 0 : i32
    return %arg0, %c0_i32 : i32, i32
  }
  func.func @transform_1(%arg0: i32) -> (i32, i32) {
    %c0_i32 = arith.constant 0 : i32
    %c0_i32_0 = arith.constant 0 : i32
    %c0_i32_1 = arith.constant 0 : i32
    return %c0_i32, %c0_i32_0 : i32, i32
  }
  func.func @transform_2(%arg0: i32) -> (i32, i32) {
    %c0_i32 = arith.constant 0 : i32
    %c0_i32_0 = arith.constant 0 : i32
    %c0_i32_1 = arith.constant 0 : i32
    return %c0_i32, %c0_i32_0 : i32, i32
  }
  func.func @transform_3(%arg0: i32) -> (i32, i32) {
    %c0_i32 = arith.constant 0 : i32
    %c0_i32_0 = arith.constant 0 : i32
    %c0_i32_1 = arith.constant 0 : i32
    return %c0_i32, %c0_i32_0 : i32, i32
  }
  func.func @transform_4(%arg0: i32) -> (i32, i32) {
    %c0_i32 = arith.constant 0 : i32
    %c0_i32_0 = arith.constant 0 : i32
    %c0_i32_1 = arith.constant 0 : i32
    return %c0_i32, %c0_i32_0 : i32, i32
  }
  func.func @transform_5(%arg0: i32) -> (i32, i32) {
    %c0_i32 = arith.constant 0 : i32
    %c0_i32_0 = arith.constant 0 : i32
    %c0_i32_1 = arith.constant 0 : i32
    return %c0_i32, %c0_i32_0 : i32, i32
  }
  func.func @transform_6(%arg0: i32) -> (i32, i32) {
    %c0_i32 = arith.constant 0 : i32
    %c0_i32_0 = arith.constant 0 : i32
    %c0_i32_1 = arith.constant 0 : i32
    return %c0_i32, %c0_i32_0 : i32, i32
  }
  func.func @transform_7(%arg0: i32) -> (i32, i32) {
    %c0_i32 = arith.constant 0 : i32
    %c0_i32_0 = arith.constant 0 : i32
    %c0_i32_1 = arith.constant 0 : i32
    return %c0_i32, %c0_i32_0 : i32, i32
  }
  func.func @transform_8(%arg0: i32) -> (i32, i32) {
    %c0_i32 = arith.constant 0 : i32
    %c0_i32_0 = arith.constant 0 : i32
    %c0_i32_1 = arith.constant 0 : i32
    return %c0_i32, %c0_i32_0 : i32, i32
  }
  func.func @transform_9(%arg0: i32) -> (i32, i32) {
    %c0_i32 = arith.constant 0 : i32
    %c0_i32_0 = arith.constant 0 : i32
    return %arg0, %c0_i32 : i32, i32
  }
}

</mosaic_0001>

<llo_original>
// kernel: tpu_custom_call.1
$region0: #{tpu_custom_call.1}
  #allocation0 [shape = 'u32[]', space=smem, size = 0x4, offset = 0x4, fixed_abs, tag = 'smem constant byte address 0x4 - core index']
  #allocation1 [shape = 'u32[72,128]{1,0:T(1,128)}', space=vmem, size = 0x9000, scoped, tag = 'internal scratch']
  #allocation2 [shape = 'f32[1,1]{1,0:T(1,128)S(1)}', space=vmem, size = 0x200, scoped, tag = 'scoped memory for tpu_custom_call.1']
  %s0 = inlined_call_operand.vmem [shape: f32[128,32], index: 0, kind: input, shape index: {}]
  %s1 = inlined_call_operand.vmem [shape: bf16[32,512], index: 1, kind: input, shape index: {}]
  %s2 = inlined_call_operand.vmem [shape: f32[1,512], index: 2, kind: input, shape index: {}]
  %s3 = inlined_call_operand.hbm [shape: bf16[512,512], index: 3, kind: input, shape index: {}]
  %s4 = inlined_call_operand.vmem [shape: f32[1,512], index: 4, kind: input, shape index: {}]
  %s5 = inlined_call_operand.hbm [shape: bf16[512,512], index: 5, kind: input, shape index: {}]
  %s6 = inlined_call_operand.vmem [shape: f32[1,512], index: 6, kind: input, shape index: {}]
  %s7 = inlined_call_operand.vmem [shape: f32[1,512], index: 7, kind: input, shape index: {}]
  %s8 = inlined_call_operand.<no memory space> [shape: f32[1,1], index: 8, kind: input, shape index: {}]
  %s9 = inlined_call_operand.vmem [shape: f32[128,1], index: 9, kind: output, shape index: {}]
  %s10 = sld [smem:[#allocation0]]
  $region54: #{tpu_custom_call.1} parent=0
    _
  %s12 = ssub.s32 1, %s10
  %s13 = scalar_select 0, %s12, %s10
  %v14 = vstv %s8
  %15 = vst [vmem:[#allocation2] sm:$0x1] %v14
  $region1: #{tpu_custom_call.1} parent=0
    #allocation3 [shape = 'u8[524288]{0}', space=vmem, size = 0x80000, scoped, tag = 'input window, operand 3, single buffered']
    #allocation4 [shape = 's32[1]{0}', space=sflag, size = 0x4, scoped, tag = 'scoped memory for tpu_custom_call.1']
    #allocation5 [shape = 'u8[524288]{0}', space=vmem, size = 0x80000, scoped, tag = 'input window, operand 5, single buffered']
    #allocation6 [shape = 's32[1]{0}', space=sflag, size = 0x4, scoped, tag = 'scoped memory for tpu_custom_call.1']
    %16 = vsyncpa [#allocation4], 0
    %17 = vsyncpa [#allocation6], 0
    // Predicated region
    $region2: #{tpu_custom_call.1} parent=1 // pred_check
      _
    $region3: #{tpu_custom_call.1} parent=1 // pred_check_branch
      %19 = sbr.rel (0) target = $region5
    $region4: #{tpu_custom_call.1} parent=1 // pred_region
      _
    $region5: #{tpu_custom_call.1} parent=1 // pred_fallthru
      _
    // Predicated region
    $region6: #{tpu_custom_call.1} parent=1 // pred_check
      _
    $region7: #{tpu_custom_call.1} parent=1 // pred_check_branch
      %21 = sbr.rel (0) target = $region9
    $region8: #{tpu_custom_call.1} parent=1 // pred_region
      _
    $region9: #{tpu_custom_call.1} parent=1 // pred_fallthru
      _
    // Predicated region
    $region10: #{tpu_custom_call.1} parent=1 // pred_check
      _
    $region11: #{tpu_custom_call.1} parent=1 // pred_check_branch
      %23 = sbr.rel (0) target = $region13
    $region12: #{tpu_custom_call.1} parent=1 // pred_region
      _
    $region13: #{tpu_custom_call.1} parent=1 // pred_fallthru
      _
    // Predicated region
    $region14: #{tpu_custom_call.1} parent=1 // pred_check
      _
    $region15: #{tpu_custom_call.1} parent=1 // pred_check_branch
      %25 = sbr.rel (0) target = $region17
    $region16: #{tpu_custom_call.1} parent=1 // pred_region
      %27 = vsyncadd [#allocation4], 0
      %s28 = sshll.u32 %s3, 4
      %s29 = int_to_ptr.hbm [resolvable:$true] %s28
      %s30 = sshll.u32 [#allocation3], 4
      %s31 = int_to_ptr.vmem [resolvable:$true] %s30
      %36 = dma.hbm_to_vmem [thread:$0]  %s29, 16384, %s31, [#allocation4], 256, 256, 16
    $region17: #{tpu_custom_call.1} parent=1 // pred_fallthru
      _
    // Predicated region
    $region18: #{tpu_custom_call.1} parent=1 // pred_check
      _
    $region19: #{tpu_custom_call.1} parent=1 // pred_check_branch
      %38 = sbr.rel (0) target = $region21
    $region20: #{tpu_custom_call.1} parent=1 // pred_region
      _
    $region21: #{tpu_custom_call.1} parent=1 // pred_fallthru
      _
    // Predicated region
    $region22: #{tpu_custom_call.1} parent=1 // pred_check
      _
    $region23: #{tpu_custom_call.1} parent=1 // pred_check_branch
      %40 = sbr.rel (0) target = $region25
    $region24: #{tpu_custom_call.1} parent=1 // pred_region
      %42 = vsyncadd [#allocation6], 0
      %s43 = sshll.u32 %s5, 4
      %s44 = int_to_ptr.hbm [resolvable:$true] %s43
      %s45 = sshll.u32 [#allocation5], 4
      %s46 = int_to_ptr.vmem [resolvable:$true] %s45
      %51 = dma.hbm_to_vmem [thread:$0]  %s44, 16384, %s46, [#allocation6], 256, 256, 16
    $region25: #{tpu_custom_call.1} parent=1 // pred_fallthru
      _
    // Predicated region
    $region26: #{tpu_custom_call.1} parent=1 // pred_check
      _
    $region27: #{tpu_custom_call.1} parent=1 // pred_check_branch
      %53 = sbr.rel (0) target = $region29
    $region28: #{tpu_custom_call.1} parent=1 // pred_region
      _
    $region29: #{tpu_custom_call.1} parent=1 // pred_fallthru
      _
    // Predicated region
    $region30: #{tpu_custom_call.1} parent=1 // pred_check
      _
    $region31: #{tpu_custom_call.1} parent=1 // pred_check_branch
      %55 = sbr.rel (0) target = $region33
    $region32: #{tpu_custom_call.1} parent=1 // pred_region
      _
    $region33: #{tpu_custom_call.1} parent=1 // pred_fallthru
      _
    // Predicated region
    $region34: #{tpu_custom_call.1} parent=1 // pred_check
      _
    $region35: #{tpu_custom_call.1} parent=1 // pred_check_branch
      %57 = sbr.rel (0) target = $region37
    $region36: #{tpu_custom_call.1} parent=1 // pred_region
      _
    $region37: #{tpu_custom_call.1} parent=1 // pred_fallthru
      _
    // Predicated region
    $region38: #{tpu_custom_call.1} parent=1 // pred_check
      _
    $region39: #{tpu_custom_call.1} parent=1 // pred_check_branch
      %59 = sbr.rel (0) target = $region41
    $region40: #{tpu_custom_call.1} parent=1 // pred_region
      %61 = dma.done [#allocation4], 16384
    $region41: #{tpu_custom_call.1} parent=1 // pred_fallthru
      _
    // Predicated region
    $region42: #{tpu_custom_call.1} parent=1 // pred_check
      _
    $region43: #{tpu_custom_call.1} parent=1 // pred_check_branch
      %63 = sbr.rel (0) target = $region45
    $region44: #{tpu_custom_call.1} parent=1 // pred_region
      %65 = dma.done [#allocation6], 16384
    $region45: #{tpu_custom_call.1} parent=1 // pred_fallthru
      _
    %v67 = vld [vmem:[%s0] sm:$0xff]
    %v68 = vld [vmem:[%s0 + $0x8] sm:$0xff]
    %v69 = vld [vmem:[%s0 + $0x10] sm:$0xff]
    %v70 = vld [vmem:[%s0 + $0x18] sm:$0xff]
    %v71 = vld [vmem:[%s0 + $0x20] sm:$0xff]
    %v72 = vld [vmem:[%s0 + $0x28] sm:$0xff]
    %v73 = vld [vmem:[%s0 + $0x30] sm:$0xff]
    %v74 = vld [vmem:[%s0 + $0x38] sm:$0xff]
    %v75 = vld [vmem:[%s0 + $0x40] sm:$0xff]
    %v76 = vld [vmem:[%s0 + $0x48] sm:$0xff]
    %v77 = vld [vmem:[%s0 + $0x50] sm:$0xff]
    %v78 = vld [vmem:[%s0 + $0x58] sm:$0xff]
    %v79 = vld [vmem:[%s0 + $0x60] sm:$0xff]
    %v80 = vld [vmem:[%s0 + $0x68] sm:$0xff]
    %v81 = vld [vmem:[%s0 + $0x70] sm:$0xff]
    %v82 = vld [vmem:[%s0 + $0x78] sm:$0xff]
    %v83 = vpack.c.bf16 %v68, %v67
    %v84 = vpack.c.bf16 %v70, %v69
    %v85 = vpack.c.bf16 %v72, %v71
    %v86 = vpack.c.bf16 %v74, %v73
    %v87 = vpack.c.bf16 %v76, %v75
    %v88 = vpack.c.bf16 %v78, %v77
    %v89 = vpack.c.bf16 %v80, %v79
    %v90 = vpack.c.bf16 %v82, %v81
    %v91 = vld [vmem:[%s1] sm:$0xff]
    %v92 = vld [vmem:[%s1 + $0x8] sm:$0xff]
    %v93 = vld [vmem:[%s1 + $0x10] sm:$0xff]
    %v94 = vld [vmem:[%s1 + $0x18] sm:$0xff]
    %v95 = vld [vmem:[%s1 + $0x20] sm:$0xff]
    %v96 = vld [vmem:[%s1 + $0x28] sm:$0xff]
    %v97 = vld [vmem:[%s1 + $0x30] sm:$0xff]
    %v98 = vld [vmem:[%s1 + $0x38] sm:$0xff]
    %v99 = vld [vmem:[%s2] sm:$0xf]
    %v101 = vperm.slane %v99, 0
    %v102 = vperm.slane %v99, 1
    %v103 = vperm.slane %v99, 2
    %v104 = vperm.slane %v99, 3
    %v117 = vunpack.c.l.b16 %v91
    %v118 = vunpack.c.h.b16 %v91
    %v119 = vunpack.c.l.b16 %v92
    %v120 = vunpack.c.h.b16 %v92
    %v121 = vunpack.c.l.b16 %v93
    %v122 = vunpack.c.h.b16 %v93
    %v123 = vunpack.c.l.b16 %v94
    %v124 = vunpack.c.h.b16 %v94
    %v125 = vunpack.c.l.b16 %v95
    %v126 = vunpack.c.h.b16 %v95
    %v127 = vunpack.c.l.b16 %v96
    %v128 = vunpack.c.h.b16 %v96
    %v129 = vunpack.c.l.b16 %v97
    %v130 = vunpack.c.h.b16 %v97
    %v131 = vunpack.c.l.b16 %v98
    %v132 = vunpack.c.h.b16 %v98
    %v133 = vpack.c.b16 %v121, %v117
    %v134 = vpack.c.b16 %v122, %v118
    %v135 = vpack.c.b16 %v123, %v119
    %v136 = vpack.c.b16 %v124, %v120
    %v137 = vpack.c.b16 %v129, %v125
    %v138 = vpack.c.b16 %v130, %v126
    %v139 = vpack.c.b16 %v131, %v127
    %v140 = vpack.c.b16 %v132, %v128
    %vm149 = vcmask 261120
    %v151 = vsel %vm149, %v83, 0
    %v154 = vsel %vm149, %v84, 0
    %v157 = vsel %vm149, %v85, 0
    %v160 = vsel %vm149, %v86, 0
    %v163 = vsel %vm149, %v87, 0
    %v166 = vsel %vm149, %v88, 0
    %v169 = vsel %vm149, %v89, 0
    %v172 = vsel %vm149, %v90, 0
    %174 = vmatpush.bf16.msra.mxu0 0
    %175 = vmatpush.bf16.msra.mxu0 0
    %176 = vmatpush.bf16.msra.mxu0 0
    %177 = vmatpush.bf16.msra.mxu0 0
    %178 = vmatpush.bf16.msra.mxu0 0
    %179 = vmatpush.bf16.msra.mxu0 0
    %180 = vmatpush.bf16.msra.mxu0 %v137
    %181 = vmatpush.bf16.msra.mxu0 %v133
    %182 = vmatmul.bf16.gmra.mxu0 %v151
    %v183 = vpop.f32.mrf.mxu0
    %v184 = vadd.f32 %v101, %v183
    %v185 = vpop.f32.mrf.mxu0
    %v186 = vadd.f32 %v101, %v185
    %187 = vmatmul.bf16.gmra.mxu0 %v154
    %v188 = vpop.f32.mrf.mxu0
    %v189 = vadd.f32 %v101, %v188
    %v190 = vpop.f32.mrf.mxu0
    %v191 = vadd.f32 %v101, %v190
    %192 = vmatmul.bf16.gmra.mxu0 %v157
    %v193 = vpop.f32.mrf.mxu0
    %v194 = vadd.f32 %v101, %v193
    %v195 = vpop.f32.mrf.mxu0
    %v196 = vadd.f32 %v101, %v195
    %197 = vmatmul.bf16.gmra.mxu0 %v160
    %v198 = vpop.f32.mrf.mxu0
    %v199 = vadd.f32 %v101, %v198
    %v200 = vpop.f32.mrf.mxu0
    %v201 = vadd.f32 %v101, %v200
    %202 = vmatmul.bf16.gmra.mxu0 %v163
    %v203 = vpop.f32.mrf.mxu0
    %v204 = vadd.f32 %v101, %v203
    %v205 = vpop.f32.mrf.mxu0
    %v206 = vadd.f32 %v101, %v205
    %207 = vmatmul.bf16.gmra.mxu0 %v166
    %v208 = vpop.f32.mrf.mxu0
    %v209 = vadd.f32 %v101, %v208
    %v210 = vpop.f32.mrf.mxu0
    %v211 = vadd.f32 %v101, %v210
    %212 = vmatmul.bf16.gmra.mxu0 %v169
    %v213 = vpop.f32.mrf.mxu0
    %v214 = vadd.f32 %v101, %v213
    %v215 = vpop.f32.mrf.mxu0
    %v216 = vadd.f32 %v101, %v215
    %217 = vmatmul.bf16.gmra.mxu0 %v172
    %v218 = vpop.f32.mrf.mxu0
    %v219 = vadd.f32 %v101, %v218
    %v220 = vpop.f32.mrf.mxu0
    %v221 = vadd.f32 %v101, %v220
    %222 = vdwg.mxu0
    %223 = vmatpush.bf16.msra.mxu0 0
    %224 = vmatpush.bf16.msra.mxu0 0
    %225 = vmatpush.bf16.msra.mxu0 0
    %226 = vmatpush.bf16.msra.mxu0 0
    %227 = vmatpush.bf16.msra.mxu0 0
    %228 = vmatpush.bf16.msra.mxu0 0
    %229 = vmatpush.bf16.msra.mxu0 %v138
    %230 = vmatpush.bf16.msra.mxu0 %v134
    %231 = vmatmul.bf16.gmra.mxu0 %v151
    %v232 = vpop.f32.mrf.mxu0
    %v233 = vadd.f32 %v102, %v232
    %v234 = vpop.f32.mrf.mxu0
    %v235 = vadd.f32 %v102, %v234
    %236 = vmatmul.bf16.gmra.mxu0 %v154
    %v237 = vpop.f32.mrf.mxu0
    %v238 = vadd.f32 %v102, %v237
    %v239 = vpop.f32.mrf.mxu0
    %v240 = vadd.f32 %v102, %v239
    %241 = vmatmul.bf16.gmra.mxu0 %v157
    %v242 = vpop.f32.mrf.mxu0
    %v243 = vadd.f32 %v102, %v242
    %v244 = vpop.f32.mrf.mxu0
    %v245 = vadd.f32 %v102, %v244
    %246 = vmatmul.bf16.gmra.mxu0 %v160
    %v247 = vpop.f32.mrf.mxu0
    %v248 = vadd.f32 %v102, %v247
    %v249 = vpop.f32.mrf.mxu0
    %v250 = vadd.f32 %v102, %v249
    %251 = vmatmul.bf16.gmra.mxu0 %v163
    %v252 = vpop.f32.mrf.mxu0
    %v253 = vadd.f32 %v102, %v252
    %v254 = vpop.f32.mrf.mxu0
    %v255 = vadd.f32 %v102, %v254
    %256 = vmatmul.bf16.gmra.mxu0 %v166
    %v257 = vpop.f32.mrf.mxu0
    %v258 = vadd.f32 %v102, %v257
    %v259 = vpop.f32.mrf.mxu0
    %v260 = vadd.f32 %v102, %v259
    %261 = vmatmul.bf16.gmra.mxu0 %v169
    %v262 = vpop.f32.mrf.mxu0
    %v263 = vadd.f32 %v102, %v262
    %v264 = vpop.f32.mrf.mxu0
    %v265 = vadd.f32 %v102, %v264
    %266 = vmatmul.bf16.gmra.mxu0 %v172
    %v267 = vpop.f32.mrf.mxu0
    %v268 = vadd.f32 %v102, %v267
    %v269 = vpop.f32.mrf.mxu0
    %v270 = vadd.f32 %v102, %v269
    %271 = vdwg.mxu0
    %272 = vmatpush.bf16.msra.mxu0 0
    %273 = vmatpush.bf16.msra.mxu0 0
    %274 = vmatpush.bf16.msra.mxu0 0
    %275 = vmatpush.bf16.msra.mxu0 0
    %276 = vmatpush.bf16.msra.mxu0 0
    %277 = vmatpush.bf16.msra.mxu0 0
    %278 = vmatpush.bf16.msra.mxu0 %v139
    %279 = vmatpush.bf16.msra.mxu0 %v135
    %280 = vmatmul.bf16.gmra.mxu0 %v151
    %v281 = vpop.f32.mrf.mxu0
    %v282 = vadd.f32 %v103, %v281
    %v283 = vpop.f32.mrf.mxu0
    %v284 = vadd.f32 %v103, %v283
    %285 = vmatmul.bf16.gmra.mxu0 %v154
    %v286 = vpop.f32.mrf.mxu0
    %v287 = vadd.f32 %v103, %v286
    %v288 = vpop.f32.mrf.mxu0
    %v289 = vadd.f32 %v103, %v288
    %290 = vmatmul.bf16.gmra.mxu0 %v157
    %v291 = vpop.f32.mrf.mxu0
    %v292 = vadd.f32 %v103, %v291
    %v293 = vpop.f32.mrf.mxu0
    %v294 = vadd.f32 %v103, %v293
    %295 = vmatmul.bf16.gmra.mxu0 %v160
    %v296 = vpop.f32.mrf.mxu0
    %v297 = vadd.f32 %v103, %v296
    %v298 = vpop.f32.mrf.mxu0
    %v299 = vadd.f32 %v103, %v298
    %300 = vmatmul.bf16.gmra.mxu0 %v163
    %v301 = vpop.f32.mrf.mxu0
    %v302 = vadd.f32 %v103, %v301
    %v303 = vpop.f32.mrf.mxu0
    %v304 = vadd.f32 %v103, %v303
    %305 = vmatmul.bf16.gmra.mxu0 %v166
    %v306 = vpop.f32.mrf.mxu0
    %v307 = vadd.f32 %v103, %v306
    %v308 = vpop.f32.mrf.mxu0
    %v309 = vadd.f32 %v103, %v308
    %310 = vmatmul.bf16.gmra.mxu0 %v169
    %v311 = vpop.f32.mrf.mxu0
    %v312 = vadd.f32 %v103, %v311
    %v313 = vpop.f32.mrf.mxu0
    %v314 = vadd.f32 %v103, %v313
    %315 = vmatmul.bf16.gmra.mxu0 %v172
    %v316 = vpop.f32.mrf.mxu0
    %v317 = vadd.f32 %v103, %v316
    %v318 = vpop.f32.mrf.mxu0
    %v319 = vadd.f32 %v103, %v318
    %320 = vdwg.mxu0
    %321 = vmatpush.bf16.msra.mxu0 0
    %322 = vmatpush.bf16.msra.mxu0 0
    %323 = vmatpush.bf16.msra.mxu0 0
    %324 = vmatpush.bf16.msra.mxu0 0
    %325 = vmatpush.bf16.msra.mxu0 0
    %326 = vmatpush.bf16.msra.mxu0 0
    %327 = vmatpush.bf16.msra.mxu0 %v140
    %328 = vmatpush.bf16.msra.mxu0 %v136
    %329 = vmatmul.bf16.gmra.mxu0 %v151
    %v330 = vpop.f32.mrf.mxu0
    %v331 = vadd.f32 %v104, %v330
    %v332 = vpop.f32.mrf.mxu0
    %v333 = vadd.f32 %v104, %v332
    %334 = vmatmul.bf16.gmra.mxu0 %v154
    %v335 = vpop.f32.mrf.mxu0
    %v336 = vadd.f32 %v104, %v335
    %v337 = vpop.f32.mrf.mxu0
    %v338 = vadd.f32 %v104, %v337
    %339 = vmatmul.bf16.gmra.mxu0 %v157
    %v340 = vpop.f32.mrf.mxu0
    %v341 = vadd.f32 %v104, %v340
    %v342 = vpop.f32.mrf.mxu0
    %v343 = vadd.f32 %v104, %v342
    %344 = vmatmul.bf16.gmra.mxu0 %v160
    %v345 = vpop.f32.mrf.mxu0
    %v346 = vadd.f32 %v104, %v345
    %v347 = vpop.f32.mrf.mxu0
    %v348 = vadd.f32 %v104, %v347
    %349 = vmatmul.bf16.gmra.mxu0 %v163
    %v350 = vpop.f32.mrf.mxu0
    %v351 = vadd.f32 %v104, %v350
    %v352 = vpop.f32.mrf.mxu0
    %v353 = vadd.f32 %v104, %v352
    %354 = vmatmul.bf16.gmra.mxu0 %v166
    %v355 = vpop.f32.mrf.mxu0
    %v356 = vadd.f32 %v104, %v355
    %v357 = vpop.f32.mrf.mxu0
    %v358 = vadd.f32 %v104, %v357
    %359 = vmatmul.bf16.gmra.mxu0 %v169
    %v360 = vpop.f32.mrf.mxu0
    %v361 = vadd.f32 %v104, %v360
    %v362 = vpop.f32.mrf.mxu0
    %v363 = vadd.f32 %v104, %v362
    %364 = vmatmul.bf16.gmra.mxu0 %v172
    %v365 = vpop.f32.mrf.mxu0
    %v366 = vadd.f32 %v104, %v365
    %v367 = vpop.f32.mrf.mxu0
    %v368 = vadd.f32 %v104, %v367
    %369 = vdwg.mxu0
    %v370 = vpack.c.bf16 %v233, %v184
    %v371 = vpack.c.bf16 %v331, %v282
    %v372 = vpack.c.bf16 %v235, %v186
    %v373 = vpack.c.bf16 %v333, %v284
    %v374 = vpack.c.bf16 %v238, %v189
    %v375 = vpack.c.bf16 %v336, %v287
    %v376 = vpack.c.bf16 %v240, %v191
    %v377 = vpack.c.bf16 %v338, %v289
    %v378 = vpack.c.bf16 %v243, %v194
    %v379 = vpack.c.bf16 %v341, %v292
    %v380 = vpack.c.bf16 %v245, %v196
    %v381 = vpack.c.bf16 %v343, %v294
    %v382 = vpack.c.bf16 %v248, %v199
    %v383 = vpack.c.bf16 %v346, %v297
    %v384 = vpack.c.bf16 %v250, %v201
    %v385 = vpack.c.bf16 %v348, %v299
    %v386 = vpack.c.bf16 %v253, %v204
    %v387 = vpack.c.bf16 %v351, %v302
    %v388 = vpack.c.bf16 %v255, %v206
    %v389 = vpack.c.bf16 %v353, %v304
    %v390 = vpack.c.bf16 %v258, %v209
    %v391 = vpack.c.bf16 %v356, %v307
    %v392 = vpack.c.bf16 %v260, %v211
    %v393 = vpack.c.bf16 %v358, %v309
    %v394 = vpack.c.bf16 %v263, %v214
    %v395 = vpack.c.bf16 %v361, %v312
    %v396 = vpack.c.bf16 %v265, %v216
    %v397 = vpack.c.bf16 %v363, %v314
    %v398 = vpack.c.bf16 %v268, %v219
    %v399 = vpack.c.bf16 %v366, %v317
    %v400 = vpack.c.bf16 %v270, %v221
    %v401 = vpack.c.bf16 %v368, %v319
    %v402 = vunpack.c.l.bf16 %v370
    %v403 = vunpack.c.h.bf16 %v370
    %v404 = vunpack.c.l.bf16 %v371
    %v405 = vunpack.c.h.bf16 %v371
    %v406 = vunpack.c.l.bf16 %v372
    %v407 = vunpack.c.h.bf16 %v372
    %v408 = vunpack.c.l.bf16 %v373
    %v409 = vunpack.c.h.bf16 %v373
    %v410 = vunpack.c.l.bf16 %v374
    %v411 = vunpack.c.h.bf16 %v374
    %v412 = vunpack.c.l.bf16 %v375
    %v413 = vunpack.c.h.bf16 %v375
    %v414 = vunpack.c.l.bf16 %v376
    %v415 = vunpack.c.h.bf16 %v376
    %v416 = vunpack.c.l.bf16 %v377
    %v417 = vunpack.c.h.bf16 %v377
    %v418 = vunpack.c.l.bf16 %v378
    %v419 = vunpack.c.h.bf16 %v378
    %v420 = vunpack.c.l.bf16 %v379
    %v421 = vunpack.c.h.bf16 %v379
    %v422 = vunpack.c.l.bf16 %v380
    %v423 = vunpack.c.h.bf16 %v380
    %v424 = vunpack.c.l.bf16 %v381
    %v425 = vunpack.c.h.bf16 %v381
    %v426 = vunpack.c.l.bf16 %v382
    %v427 = vunpack.c.h.bf16 %v382
    %v428 = vunpack.c.l.bf16 %v383
    %v429 = vunpack.c.h.bf16 %v383
    %v430 = vunpack.c.l.bf16 %v384
    %v431 = vunpack.c.h.bf16 %v384
    %v432 = vunpack.c.l.bf16 %v385
    %v433 = vunpack.c.h.bf16 %v385
    %v434 = vunpack.c.l.bf16 %v386
    %v435 = vunpack.c.h.bf16 %v386
    %v436 = vunpack.c.l.bf16 %v387
    %v437 = vunpack.c.h.bf16 %v387
    %v438 = vunpack.c.l.bf16 %v388
    %v439 = vunpack.c.h.bf16 %v388
    %v440 = vunpack.c.l.bf16 %v389
    %v441 = vunpack.c.h.bf16 %v389
    %v442 = vunpack.c.l.bf16 %v390
    %v443 = vunpack.c.h.bf16 %v390
    %v444 = vunpack.c.l.bf16 %v391
    %v445 = vunpack.c.h.bf16 %v391
    %v446 = vunpack.c.l.bf16 %v392
    %v447 = vunpack.c.h.bf16 %v392
    %v448 = vunpack.c.l.bf16 %v393
    %v449 = vunpack.c.h.bf16 %v393
    %v450 = vunpack.c.l.bf16 %v394
    %v451 = vunpack.c.h.bf16 %v394
    %v452 = vunpack.c.l.bf16 %v395
    %v453 = vunpack.c.h.bf16 %v395
    %v454 = vunpack.c.l.bf16 %v396
    %v455 = vunpack.c.h.bf16 %v396
    %v456 = vunpack.c.l.bf16 %v397
    %v457 = vunpack.c.h.bf16 %v397
    %v458 = vunpack.c.l.bf16 %v398
    %v459 = vunpack.c.h.bf16 %v398
    %v460 = vunpack.c.l.bf16 %v399
    %v461 = vunpack.c.h.bf16 %v399
    %v462 = vunpack.c.l.bf16 %v400
    %v463 = vunpack.c.h.bf16 %v400
    %v464 = vunpack.c.l.bf16 %v401
    %v465 = vunpack.c.h.bf16 %v401
    %v466 = vmax.f32 %v402, 0.0
    %v467 = vmax.f32 %v403, 0.0
    %v468 = vmax.f32 %v404, 0.0
    %v469 = vmax.f32 %v405, 0.0
    %v470 = vmax.f32 %v406, 0.0
    %v471 = vmax.f32 %v407, 0.0
    %v472 = vmax.f32 %v408, 0.0
    %v473 = vmax.f32 %v409, 0.0
    %v474 = vmax.f32 %v410, 0.0
    %v475 = vmax.f32 %v411, 0.0
    %v476 = vmax.f32 %v412, 0.0
    %v477 = vmax.f32 %v413, 0.0
    %v478 = vmax.f32 %v414, 0.0
    %v479 = vmax.f32 %v415, 0.0
    %v480 = vmax.f32 %v416, 0.0
    %v481 = vmax.f32 %v417, 0.0
    %v482 = vmax.f32 %v418, 0.0
    %v483 = vmax.f32 %v419, 0.0
    %v484 = vmax.f32 %v420, 0.0
    %v485 = vmax.f32 %v421, 0.0
    %v486 = vmax.f32 %v422, 0.0
    %v487 = vmax.f32 %v423, 0.0
    %v488 = vmax.f32 %v424, 0.0
    %v489 = vmax.f32 %v425, 0.0
    %v490 = vmax.f32 %v426, 0.0
    %v491 = vmax.f32 %v427, 0.0
    %v492 = vmax.f32 %v428, 0.0
    %v493 = vmax.f32 %v429, 0.0
    %v494 = vmax.f32 %v430, 0.0
    %v495 = vmax.f32 %v431, 0.0
    %v496 = vmax.f32 %v432, 0.0
    %v497 = vmax.f32 %v433, 0.0
    %v498 = vmax.f32 %v434, 0.0
    %v499 = vmax.f32 %v435, 0.0
    %v500 = vmax.f32 %v436, 0.0
    %v501 = vmax.f32 %v437, 0.0
    %v502 = vmax.f32 %v438, 0.0
    %v503 = vmax.f32 %v439, 0.0
    %v504 = vmax.f32 %v440, 0.0
    %v505 = vmax.f32 %v441, 0.0
    %v506 = vmax.f32 %v442, 0.0
    %v507 = vmax.f32 %v443, 0.0
    %v508 = vmax.f32 %v444, 0.0
    %v509 = vmax.f32 %v445, 0.0
    %v510 = vmax.f32 %v446, 0.0
    %v511 = vmax.f32 %v447, 0.0
    %v512 = vmax.f32 %v448, 0.0
    %v513 = vmax.f32 %v449, 0.0
    %v514 = vmax.f32 %v450, 0.0
    %v515 = vmax.f32 %v451, 0.0
    %v516 = vmax.f32 %v452, 0.0
    %v517 = vmax.f32 %v453, 0.0
    %v518 = vmax.f32 %v454, 0.0
    %v519 = vmax.f32 %v455, 0.0
    %v520 = vmax.f32 %v456, 0.0
    %v521 = vmax.f32 %v457, 0.0
    %v522 = vmax.f32 %v458, 0.0
    %v523 = vmax.f32 %v459, 0.0
    %v524 = vmax.f32 %v460, 0.0
    %v525 = vmax.f32 %v461, 0.0
    %v526 = vmax.f32 %v462, 0.0
    %v527 = vmax.f32 %v463, 0.0
    %v528 = vmax.f32 %v464, 0.0
    %v529 = vmax.f32 %v465, 0.0
    %v530 = vpack.c.bf16 %v470, %v466
    %v531 = vpack.c.bf16 %v471, %v467
    %v532 = vpack.c.bf16 %v472, %v468
    %v533 = vpack.c.bf16 %v473, %v469
    %v534 = vpack.c.bf16 %v478, %v474
    %v535 = vpack.c.bf16 %v479, %v475
    %v536 = vpack.c.bf16 %v480, %v476
    %v537 = vpack.c.bf16 %v481, %v477
    %v538 = vpack.c.bf16 %v486, %v482
    %v539 = vpack.c.bf16 %v487, %v483
    %v540 = vpack.c.bf16 %v488, %v484
    %v541 = vpack.c.bf16 %v489, %v485
    %v542 = vpack.c.bf16 %v494, %v490
    %v543 = vpack.c.bf16 %v495, %v491
    %v544 = vpack.c.bf16 %v496, %v492
    %v545 = vpack.c.bf16 %v497, %v493
    %v546 = vpack.c.bf16 %v502, %v498
    %v547 = vpack.c.bf16 %v503, %v499
    %v548 = vpack.c.bf16 %v504, %v500
    %v549 = vpack.c.bf16 %v505, %v501
    %v550 = vpack.c.bf16 %v510, %v506
    %v551 = vpack.c.bf16 %v511, %v507
    %v552 = vpack.c.bf16 %v512, %v508
    %v553 = vpack.c.bf16 %v513, %v509
    %v554 = vpack.c.bf16 %v518, %v514
    %v555 = vpack.c.bf16 %v519, %v515
    %v556 = vpack.c.bf16 %v520, %v516
    %v557 = vpack.c.bf16 %v521, %v517
    %v558 = vpack.c.bf16 %v526, %v522
    %v559 = vpack.c.bf16 %v527, %v523
    %v560 = vpack.c.bf16 %v528, %v524
    %v561 = vpack.c.bf16 %v529, %v525
    %v562 = vld [vmem:[#allocation3] sm:$0xff]
    %v563 = vld [vmem:[#allocation3 + $0x8] sm:$0xff]
    %v564 = vld [vmem:[#allocation3 + $0x10] sm:$0xff]
    %v565 = vld [vmem:[#allocation3 + $0x18] sm:$0xff]
    %v566 = vld [vmem:[#allocation3 + $0x20] sm:$0xff]
    %v567 = vld [vmem:[#allocation3 + $0x28] sm:$0xff]
    %v568 = vld [vmem:[#allocation3 + $0x30] sm:$0xff]
    %v569 = vld [vmem:[#allocation3 + $0x38] sm:$0xff]
    %v570 = vld [vmem:[#allocation3 + $0x40] sm:$0xff]
    %v571 = vld [vmem:[#allocation3 + $0x48] sm:$0xff]
    %v572 = vld [vmem:[#allocation3 + $0x50] sm:$0xff]
    %v573 = vld [vmem:[#allocation3 + $0x58] sm:$0xff]
    %v574 = vld [vmem:[#allocation3 + $0x60] sm:$0xff]
    %v575 = vld [vmem:[#allocation3 + $0x68] sm:$0xff]
    %v576 = vld [vmem:[#allocation3 + $0x70] sm:$0xff]
    %v577 = vld [vmem:[#allocation3 + $0x78] sm:$0xff]
    %v578 = vld [vmem:[#allocation3 + $0x80] sm:$0xff]
    %v579 = vld [vmem:[#allocation3 + $0x88] sm:$0xff]
    %v580 = vld [vmem:[#allocation3 + $0x90] sm:$0xff]
    %v581 = vld [vmem:[#allocation3 + $0x98] sm:$0xff]
    %v582 = vld [vmem:[#allocation3 + $0xa0] sm:$0xff]
    %v583 = vld [vmem:[#allocation3 + $0xa8] sm:$0xff]
    %v584 = vld [vmem:[#allocation3 + $0xb0] sm:$0xff]
    %v585 = vld [vmem:[#allocation3 + $0xb8] sm:$0xff]
    %v586 = vld [vmem:[#allocation3 + $0xc0] sm:$0xff]
    %v587 = vld [vmem:[#allocation3 + $0xc8] sm:$0xff]
    %v588 = vld [vmem:[#allocation3 + $0xd0] sm:$0xff]
    %v589 = vld [vmem:[#allocation3 + $0xd8] sm:$0xff]
    %v590 = vld [vmem:[#allocation3 + $0xe0] sm:$0xff]
    %v591 = vld [vmem:[#allocation3 + $0xe8] sm:$0xff]
    %v592 = vld [vmem:[#allocation3 + $0xf0] sm:$0xff]
    %v593 = vld [vmem:[#allocation3 + $0xf8] sm:$0xff]
    %v594 = vld [vmem:[#allocation3 + $0x100] sm:$0xff]
    %v595 = vld [vmem:[#allocation3 + $0x108] sm:$0xff]
    %v596 = vld [vmem:[#allocation3 + $0x110] sm:$0xff]
    %v597 = vld [vmem:[#allocation3 + $0x118] sm:$0xff]
    %v598 = vld [vmem:[#allocation3 + $0x120] sm:$0xff]
    %v599 = vld [vmem:[#allocation3 + $0x128] sm:$0xff]
    %v600 = vld [vmem:[#allocation3 + $0x130] sm:$0xff]
    %v601 = vld [vmem:[#allocation3 + $0x138] sm:$0xff]
    %v602 = vld [vmem:[#allocation3 + $0x140] sm:$0xff]
    %v603 = vld [vmem:[#allocation3 + $0x148] sm:$0xff]
    %v604 = vld [vmem:[#allocation3 + $0x150] sm:$0xff]
    %v605 = vld [vmem:[#allocation3 + $0x158] sm:$0xff]
    %v606 = vld [vmem:[#allocation3 + $0x160] sm:$0xff]
    %v607 = vld [vmem:[#allocation3 + $0x168] sm:$0xff]
    %v608 = vld [vmem:[#allocation3 + $0x170] sm:$0xff]
    %v609 = vld [vmem:[#allocation3 + $0x178] sm:$0xff]
    %v610 = vld [vmem:[#allocation3 + $0x180] sm:$0xff]
    %v611 = vld [vmem:[#allocation3 + $0x188] sm:$0xff]
    %v612 = vld [vmem:[#allocation3 + $0x190] sm:$0xff]
    %v613 = vld [vmem:[#allocation3 + $0x198] sm:$0xff]
    %v614 = vld [vmem:[#allocation3 + $0x1a0] sm:$0xff]
    %v615 = vld [vmem:[#allocation3 + $0x1a8] sm:$0xff]
    %v616 = vld [vmem:[#allocation3 + $0x1b0] sm:$0xff]
    %v617 = vld [vmem:[#allocation3 + $0x1b8] sm:$0xff]
    %v618 = vld [vmem:[#allocation3 + $0x1c0] sm:$0xff]
    %v619 = vld [vmem:[#allocation3 + $0x1c8] sm:$0xff]
    %v620 = vld [vmem:[#allocation3 + $0x1d0] sm:$0xff]
    %v621 = vld [vmem:[#allocation3 + $0x1d8] sm:$0xff]
    %v622 = vld [vmem:[#allocation3 + $0x1e0] sm:$0xff]
    %v623 = vld [vmem:[#allocation3 + $0x1e8] sm:$0xff]
    %v624 = vld [vmem:[#allocation3 + $0x1f0] sm:$0xff]
    %v625 = vld [vmem:[#allocation3 + $0x1f8] sm:$0xff]
    %v626 = vld [vmem:[#allocation3 + $0x200] sm:$0xff]
    %v627 = vld [vmem:[#allocation3 + $0x208] sm:$0xff]
    %v628 = vld [vmem:[#allocation3 + $0x210] sm:$0xff]
    %v629 = vld [vmem:[#allocation3 + $0x218] sm:$0xff]
    %v630 = vld [vmem:[#allocation3 + $0x220] sm:$0xff]
    %v631 = vld [vmem:[#allocation3 + $0x228] sm:$0xff]
    %v632 = vld [vmem:[#allocation3 + $0x230] sm:$0xff]
    %v633 = vld [vmem:[#allocation3 + $0x238] sm:$0xff]
    %v634 = vld [vmem:[#allocation3 + $0x240] sm:$0xff]
    %v635 = vld [vmem:[#allocation3 + $0x248] sm:$0xff]
    %v636 = vld [vmem:[#allocation3 + $0x250] sm:$0xff]
    %v637 = vld [vmem:[#allocation3 + $0x258] sm:$0xff]
    %v638 = vld [vmem:[#allocation3 + $0x260] sm:$0xff]
    %v639 = vld [vmem:[#allocation3 + $0x268] sm:$0xff]
    %v640 = vld [vmem:[#allocation3 + $0x270] sm:$0xff]
    %v641 = vld [vmem:[#allocation3 + $0x278] sm:$0xff]
    %v642 = vld [vmem:[#allocation3 + $0x280] sm:$0xff]
    %v643 = vld [vmem:[#allocation3 + $0x288] sm:$0xff]
    %v644 = vld [vmem:[#allocation3 + $0x290] sm:$0xff]
    %v645 = vld [vmem:[#allocation3 + $0x298] sm:$0xff]
    %v646 = vld [vmem:[#allocation3 + $0x2a0] sm:$0xff]
    %v647 = vld [vmem:[#allocation3 + $0x2a8] sm:$0xff]
    %v648 = vld [vmem:[#allocation3 + $0x2b0] sm:$0xff]
    %v649 = vld [vmem:[#allocation3 + $0x2b8] sm:$0xff]
    %v650 = vld [vmem:[#allocation3 + $0x2c0] sm:$0xff]
    %v651 = vld [vmem:[#allocation3 + $0x2c8] sm:$0xff]
    %v652 = vld [vmem:[#allocation3 + $0x2d0] sm:$0xff]
    %v653 = vld [vmem:[#allocation3 + $0x2d8] sm:$0xff]
    %v654 = vld [vmem:[#allocation3 + $0x2e0] sm:$0xff]
    %v655 = vld [vmem:[#allocation3 + $0x2e8] sm:$0xff]
    %v656 = vld [vmem:[#allocation3 + $0x2f0] sm:$0xff]
    %v657 = vld [vmem:[#allocation3 + $0x2f8] sm:$0xff]
    %v658 = vld [vmem:[#allocation3 + $0x300] sm:$0xff]
    %v659 = vld [vmem:[#allocation3 + $0x308] sm:$0xff]
    %v660 = vld [vmem:[#allocation3 + $0x310] sm:$0xff]
    %v661 = vld [vmem:[#allocation3 + $0x318] sm:$0xff]
    %v662 = vld [vmem:[#allocation3 + $0x320] sm:$0xff]
    %v663 = vld [vmem:[#allocation3 + $0x328] sm:$0xff]
    %v664 = vld [vmem:[#allocation3 + $0x330] sm:$0xff]
    %v665 = vld [vmem:[#allocation3 + $0x338] sm:$0xff]
    %v666 = vld [vmem:[#allocation3 + $0x340] sm:$0xff]
    %v667 = vld [vmem:[#allocation3 + $0x348] sm:$0xff]
    %v668 = vld [vmem:[#allocation3 + $0x350] sm:$0xff]
    %v669 = vld [vmem:[#allocation3 + $0x358] sm:$0xff]
    %v670 = vld [vmem:[#allocation3 + $0x360] sm:$0xff]
    %v671 = vld [vmem:[#allocation3 + $0x368] sm:$0xff]
    %v672 = vld [vmem:[#allocation3 + $0x370] sm:$0xff]
    %v673 = vld [vmem:[#allocation3 + $0x378] sm:$0xff]
    %v674 = vld [vmem:[#allocation3 + $0x380] sm:$0xff]
    %v675 = vld [vmem:[#allocation3 + $0x388] sm:$0xff]
    %v676 = vld [vmem:[#allocation3 + $0x390] sm:$0xff]
    %v677 = vld [vmem:[#allocation3 + $0x398] sm:$0xff]
    %v678 = vld [vmem:[#allocation3 + $0x3a0] sm:$0xff]
    %v679 = vld [vmem:[#allocation3 + $0x3a8] sm:$0xff]
    %v680 = vld [vmem:[#allocation3 + $0x3b0] sm:$0xff]
    %v681 = vld [vmem:[#allocation3 + $0x3b8] sm:$0xff]
    %v682 = vld [vmem:[#allocation3 + $0x3c0] sm:$0xff]
    %v683 = vld [vmem:[#allocation3 + $0x3c8] sm:$0xff]
    %v684 = vld [vmem:[#allocation3 + $0x3d0] sm:$0xff]
    %v685 = vld [vmem:[#allocation3 + $0x3d8] sm:$0xff]
    %v686 = vld [vmem:[#allocation3 + $0x3e0] sm:$0xff]
    %v687 = vld [vmem:[#allocation3 + $0x3e8] sm:$0xff]
    %v688 = vld [vmem:[#allocation3 + $0x3f0] sm:$0xff]
    %v689 = vld [vmem:[#allocation3 + $0x3f8] sm:$0xff]
    %v690 = vld [vmem:[%s4] sm:$0xf]
    %v692 = vperm.slane %v690, 0
    %v693 = vperm.slane %v690, 1
    %v694 = vperm.slane %v690, 2
    %v695 = vperm.slane %v690, 3
    %v828 = vunpack.c.l.b16 %v562
    %v829 = vunpack.c.h.b16 %v562
    %v830 = vunpack.c.l.b16 %v563
    %v831 = vunpack.c.h.b16 %v563
    %v832 = vunpack.c.l.b16 %v564
    %v833 = vunpack.c.h.b16 %v564
    %v834 = vunpack.c.l.b16 %v565
    %v835 = vunpack.c.h.b16 %v565
    %v836 = vunpack.c.l.b16 %v566
    %v837 = vunpack.c.h.b16 %v566
    %v838 = vunpack.c.l.b16 %v567
    %v839 = vunpack.c.h.b16 %v567
    %v840 = vunpack.c.l.b16 %v568
    %v841 = vunpack.c.h.b16 %v568
    %v842 = vunpack.c.l.b16 %v569
    %v843 = vunpack.c.h.b16 %v569
    %v844 = vunpack.c.l.b16 %v570
    %v845 = vunpack.c.h.b16 %v570
    %v846 = vunpack.c.l.b16 %v571
    %v847 = vunpack.c.h.b16 %v571
    %v848 = vunpack.c.l.b16 %v572
    %v849 = vunpack.c.h.b16 %v572
    %v850 = vunpack.c.l.b16 %v573
    %v851 = vunpack.c.h.b16 %v573
    %v852 = vunpack.c.l.b16 %v574
    %v853 = vunpack.c.h.b16 %v574
    %v854 = vunpack.c.l.b16 %v575
    %v855 = vunpack.c.h.b16 %v575
    %v856 = vunpack.c.l.b16 %v576
    %v857 = vunpack.c.h.b16 %v576
    %v858 = vunpack.c.l.b16 %v577
    %v859 = vunpack.c.h.b16 %v577
    %v860 = vunpack.c.l.b16 %v578
    %v861 = vunpack.c.h.b16 %v578
    %v862 = vunpack.c.l.b16 %v579
    %v863 = vunpack.c.h.b16 %v579
    %v864 = vunpack.c.l.b16 %v580
    %v865 = vunpack.c.h.b16 %v580
    %v866 = vunpack.c.l.b16 %v581
    %v867 = vunpack.c.h.b16 %v581
    %v868 = vunpack.c.l.b16 %v582
    %v869 = vunpack.c.h.b16 %v582
    %v870 = vunpack.c.l.b16 %v583
    %v871 = vunpack.c.h.b16 %v583
    %v872 = vunpack.c.l.b16 %v584
    %v873 = vunpack.c.h.b16 %v584
    %v874 = vunpack.c.l.b16 %v585
    %v875 = vunpack.c.h.b16 %v585
    %v876 = vunpack.c.l.b16 %v586
    %v877 = vunpack.c.h.b16 %v586
    %v878 = vunpack.c.l.b16 %v587
    %v879 = vunpack.c.h.b16 %v587
    %v880 = vunpack.c.l.b16 %v588
    %v881 = vunpack.c.h.b16 %v588
    %v882 = vunpack.c.l.b16 %v589
    %v883 = vunpack.c.h.b16 %v589
    %v884 = vunpack.c.l.b16 %v590
    %v885 = vunpack.c.h.b16 %v590
    %v886 = vunpack.c.l.b16 %v591
    %v887 = vunpack.c.h.b16 %v591
    %v888 = vunpack.c.l.b16 %v592
    %v889 = vunpack.c.h.b16 %v592
    %v890 = vunpack.c.l.b16 %v593
    %v891 = vunpack.c.h.b16 %v593
    %v892 = vunpack.c.l.b16 %v594
    %v893 = vunpack.c.h.b16 %v594
    %v894 = vunpack.c.l.b16 %v595
    %v895 = vunpack.c.h.b16 %v595
    %v896 = vunpack.c.l.b16 %v596
    %v897 = vunpack.c.h.b16 %v596
    %v898 = vunpack.c.l.b16 %v597
    %v899 = vunpack.c.h.b16 %v597
    %v900 = vunpack.c.l.b16 %v598
    %v901 = vunpack.c.h.b16 %v598
    %v902 = vunpack.c.l.b16 %v599
    %v903 = vunpack.c.h.b16 %v599
    %v904 = vunpack.c.l.b16 %v600
    %v905 = vunpack.c.h.b16 %v600
    %v906 = vunpack.c.l.b16 %v601
    %v907 = vunpack.c.h.b16 %v601
    %v908 = vunpack.c.l.b16 %v602
    %v909 = vunpack.c.h.b16 %v602
    %v910 = vunpack.c.l.b16 %v603
    %v911 = vunpack.c.h.b16 %v603
    %v912 = vunpack.c.l.b16 %v604
    %v913 = vunpack.c.h.b16 %v604
    %v914 = vunpack.c.l.b16 %v605
    %v915 = vunpack.c.h.b16 %v605
    %v916 = vunpack.c.l.b16 %v606
    %v917 = vunpack.c.h.b16 %v606
    %v918 = vunpack.c.l.b16 %v607
    %v919 = vunpack.c.h.b16 %v607
    %v920 = vunpack.c.l.b16 %v608
    %v921 = vunpack.c.h.b16 %v608
    %v922 = vunpack.c.l.b16 %v609
    %v923 = vunpack.c.h.b16 %v609
    %v924 = vunpack.c.l.b16 %v610
    %v925 = vunpack.c.h.b16 %v610
    %v926 = vunpack.c.l.b16 %v611
    %v927 = vunpack.c.h.b16 %v611
    %v928 = vunpack.c.l.b16 %v612
    %v929 = vunpack.c.h.b16 %v612
    %v930 = vunpack.c.l.b16 %v613
    %v931 = vunpack.c.h.b16 %v613
    %v932 = vunpack.c.l.b16 %v614
    %v933 = vunpack.c.h.b16 %v614
    %v934 = vunpack.c.l.b16 %v615
    %v935 = vunpack.c.h.b16 %v615
    %v936 = vunpack.c.l.b16 %v616
    %v937 = vunpack.c.h.b16 %v616
    %v938 = vunpack.c.l.b16 %v617
    %v939 = vunpack.c.h.b16 %v617
    %v940 = vunpack.c.l.b16 %v618
    %v941 = vunpack.c.h.b16 %v618
    %v942 = vunpack.c.l.b16 %v619
    %v943 = vunpack.c.h.b16 %v619
    %v944 = vunpack.c.l.b16 %v620
    %v945 = vunpack.c.h.b16 %v620
    %v946 = vunpack.c.l.b16 %v621
    %v947 = vunpack.c.h.b16 %v621
    %v948 = vunpack.c.l.b16 %v622
    %v949 = vunpack.c.h.b16 %v622
    %v950 = vunpack.c.l.b16 %v623
    %v951 = vunpack.c.h.b16 %v623
    %v952 = vunpack.c.l.b16 %v624
    %v953 = vunpack.c.h.b16 %v624
    %v954 = vunpack.c.l.b16 %v625
    %v955 = vunpack.c.h.b16 %v625
    %v956 = vunpack.c.l.b16 %v626
    %v957 = vunpack.c.h.b16 %v626
    %v958 = vunpack.c.l.b16 %v627
    %v959 = vunpack.c.h.b16 %v627
    %v960 = vunpack.c.l.b16 %v628
    %v961 = vunpack.c.h.b16 %v628
    %v962 = vunpack.c.l.b16 %v629
    %v963 = vunpack.c.h.b16 %v629
    %v964 = vunpack.c.l.b16 %v630
    %v965 = vunpack.c.h.b16 %v630
    %v966 = vunpack.c.l.b16 %v631
    %v967 = vunpack.c.h.b16 %v631
    %v968 = vunpack.c.l.b16 %v632
    %v969 = vunpack.c.h.b16 %v632
    %v970 = vunpack.c.l.b16 %v633
    %v971 = vunpack.c.h.b16 %v633
    %v972 = vunpack.c.l.b16 %v634
    %v973 = vunpack.c.h.b16 %v634
    %v974 = vunpack.c.l.b16 %v635
    %v975 = vunpack.c.h.b16 %v635
    %v976 = vunpack.c.l.b16 %v636
    %v977 = vunpack.c.h.b16 %v636
    %v978 = vunpack.c.l.b16 %v637
    %v979 = vunpack.c.h.b16 %v637
    %v980 = vunpack.c.l.b16 %v638
    %v981 = vunpack.c.h.b16 %v638
    %v982 = vunpack.c.l.b16 %v639
    %v983 = vunpack.c.h.b16 %v639
    %v984 = vunpack.c.l.b16 %v640
    %v985 = vunpack.c.h.b16 %v640
    %v986 = vunpack.c.l.b16 %v641
    %v987 = vunpack.c.h.b16 %v641
    %v988 = vunpack.c.l.b16 %v642
    %v989 = vunpack.c.h.b16 %v642
    %v990 = vunpack.c.l.b16 %v643
    %v991 = vunpack.c.h.b16 %v643
    %v992 = vunpack.c.l.b16 %v644
    %v993 = vunpack.c.h.b16 %v644
    %v994 = vunpack.c.l.b16 %v645
    %v995 = vunpack.c.h.b16 %v645
    %v996 = vunpack.c.l.b16 %v646
    %v997 = vunpack.c.h.b16 %v646
    %v998 = vunpack.c.l.b16 %v647
    %v999 = vunpack.c.h.b16 %v647
    %v1000 = vunpack.c.l.b16 %v648
    %v1001 = vunpack.c.h.b16 %v648
    %v1002 = vunpack.c.l.b16 %v649
    %v1003 = vunpack.c.h.b16 %v649
    %v1004 = vunpack.c.l.b16 %v650
    %v1005 = vunpack.c.h.b16 %v650
    %v1006 = vunpack.c.l.b16 %v651
    %v1007 = vunpack.c.h.b16 %v651
    %v1008 = vunpack.c.l.b16 %v652
    %v1009 = vunpack.c.h.b16 %v652
    %v1010 = vunpack.c.l.b16 %v653
    %v1011 = vunpack.c.h.b16 %v653
    %v1012 = vunpack.c.l.b16 %v654
    %v1013 = vunpack.c.h.b16 %v654
    %v1014 = vunpack.c.l.b16 %v655
    %v1015 = vunpack.c.h.b16 %v655
    %v1016 = vunpack.c.l.b16 %v656
    %v1017 = vunpack.c.h.b16 %v656
    %v1018 = vunpack.c.l.b16 %v657
    %v1019 = vunpack.c.h.b16 %v657
    %v1020 = vunpack.c.l.b16 %v658
    %v1021 = vunpack.c.h.b16 %v658
    %v1022 = vunpack.c.l.b16 %v659
    %v1023 = vunpack.c.h.b16 %v659
    %v1024 = vunpack.c.l.b16 %v660
    %v1025 = vunpack.c.h.b16 %v660
    %v1026 = vunpack.c.l.b16 %v661
    %v1027 = vunpack.c.h.b16 %v661
    %v1028 = vunpack.c.l.b16 %v662
    %v1029 = vunpack.c.h.b16 %v662
    %v1030 = vunpack.c.l.b16 %v663
    %v1031 = vunpack.c.h.b16 %v663
    %v1032 = vunpack.c.l.b16 %v664
    %v1033 = vunpack.c.h.b16 %v664
    %v1034 = vunpack.c.l.b16 %v665
    %v1035 = vunpack.c.h.b16 %v665
    %v1036 = vunpack.c.l.b16 %v666
    %v1037 = vunpack.c.h.b16 %v666
    %v1038 = vunpack.c.l.b16 %v667
    %v1039 = vunpack.c.h.b16 %v667
    %v1040 = vunpack.c.l.b16 %v668
    %v1041 = vunpack.c.h.b16 %v668
    %v1042 = vunpack.c.l.b16 %v669
    %v1043 = vunpack.c.h.b16 %v669
    %v1044 = vunpack.c.l.b16 %v670
    %v1045 = vunpack.c.h.b16 %v670
    %v1046 = vunpack.c.l.b16 %v671
    %v1047 = vunpack.c.h.b16 %v671
    %v1048 = vunpack.c.l.b16 %v672
    %v1049 = vunpack.c.h.b16 %v672
    %v1050 = vunpack.c.l.b16 %v673
    %v1051 = vunpack.c.h.b16 %v673
    %v1052 = vunpack.c.l.b16 %v674
    %v1053 = vunpack.c.h.b16 %v674
    %v1054 = vunpack.c.l.b16 %v675
    %v1055 = vunpack.c.h.b16 %v675
    %v1056 = vunpack.c.l.b16 %v676
    %v1057 = vunpack.c.h.b16 %v676
    %v1058 = vunpack.c.l.b16 %v677
    %v1059 = vunpack.c.h.b16 %v677
    %v1060 = vunpack.c.l.b16 %v678
    %v1061 = vunpack.c.h.b16 %v678
    %v1062 = vunpack.c.l.b16 %v679
    %v1063 = vunpack.c.h.b16 %v679
    %v1064 = vunpack.c.l.b16 %v680
    %v1065 = vunpack.c.h.b16 %v680
    %v1066 = vunpack.c.l.b16 %v681
    %v1067 = vunpack.c.h.b16 %v681
    %v1068 = vunpack.c.l.b16 %v682
    %v1069 = vunpack.c.h.b16 %v682
    %v1070 = vunpack.c.l.b16 %v683
    %v1071 = vunpack.c.h.b16 %v683
    %v1072 = vunpack.c.l.b16 %v684
    %v1073 = vunpack.c.h.b16 %v684
    %v1074 = vunpack.c.l.b16 %v685
    %v1075 = vunpack.c.h.b16 %v685
    %v1076 = vunpack.c.l.b16 %v686
    %v1077 = vunpack.c.h.b16 %v686
    %v1078 = vunpack.c.l.b16 %v687
    %v1079 = vunpack.c.h.b16 %v687
    %v1080 = vunpack.c.l.b16 %v688
    %v1081 = vunpack.c.h.b16 %v688
    %v1082 = vunpack.c.l.b16 %v689
    %v1083 = vunpack.c.h.b16 %v689
    %v1084 = vpack.c.b16 %v832, %v828
    %v1085 = vpack.c.b16 %v833, %v829
    %v1086 = vpack.c.b16 %v834, %v830
    %v1087 = vpack.c.b16 %v835, %v831
    %v1088 = vpack.c.b16 %v840, %v836
    %v1089 = vpack.c.b16 %v841, %v837
    %v1090 = vpack.c.b16 %v842, %v838
    %v1091 = vpack.c.b16 %v843, %v839
    %v1092 = vpack.c.b16 %v848, %v844
    %v1093 = vpack.c.b16 %v849, %v845
    %v1094 = vpack.c.b16 %v850, %v846
    %v1095 = vpack.c.b16 %v851, %v847
    %v1096 = vpack.c.b16 %v856, %v852
    %v1097 = vpack.c.b16 %v857, %v853
    %v1098 = vpack.c.b16 %v858, %v854
    %v1099 = vpack.c.b16 %v859, %v855
    %v1100 = vpack.c.b16 %v864, %v860
    %v1101 = vpack.c.b16 %v865, %v861
    %v1102 = vpack.c.b16 %v866, %v862
    %v1103 = vpack.c.b16 %v867, %v863
    %v1104 = vpack.c.b16 %v872, %v868
    %v1105 = vpack.c.b16 %v873, %v869
    %v1106 = vpack.c.b16 %v874, %v870
    %v1107 = vpack.c.b16 %v875, %v871
    %v1108 = vpack.c.b16 %v880, %v876
    %v1109 = vpack.c.b16 %v881, %v877
    %v1110 = vpack.c.b16 %v882, %v878
    %v1111 = vpack.c.b16 %v883, %v879
    %v1112 = vpack.c.b16 %v888, %v884
    %v1113 = vpack.c.b16 %v889, %v885
    %v1114 = vpack.c.b16 %v890, %v886
    %v1115 = vpack.c.b16 %v891, %v887
    %v1116 = vpack.c.b16 %v896, %v892
    %v1117 = vpack.c.b16 %v897, %v893
    %v1118 = vpack.c.b16 %v898, %v894
    %v1119 = vpack.c.b16 %v899, %v895
    %v1120 = vpack.c.b16 %v904, %v900
    %v1121 = vpack.c.b16 %v905, %v901
    %v1122 = vpack.c.b16 %v906, %v902
    %v1123 = vpack.c.b16 %v907, %v903
    %v1124 = vpack.c.b16 %v912, %v908
    %v1125 = vpack.c.b16 %v913, %v909
    %v1126 = vpack.c.b16 %v914, %v910
    %v1127 = vpack.c.b16 %v915, %v911
    %v1128 = vpack.c.b16 %v920, %v916
    %v1129 = vpack.c.b16 %v921, %v917
    %v1130 = vpack.c.b16 %v922, %v918
    %v1131 = vpack.c.b16 %v923, %v919
    %v1132 = vpack.c.b16 %v928, %v924
    %v1133 = vpack.c.b16 %v929, %v925
    %v1134 = vpack.c.b16 %v930, %v926
    %v1135 = vpack.c.b16 %v931, %v927
    %v1136 = vpack.c.b16 %v936, %v932
    %v1137 = vpack.c.b16 %v937, %v933
    %v1138 = vpack.c.b16 %v938, %v934
    %v1139 = vpack.c.b16 %v939, %v935
    %v1140 = vpack.c.b16 %v944, %v940
    %v1141 = vpack.c.b16 %v945, %v941
    %v1142 = vpack.c.b16 %v946, %v942
    %v1143 = vpack.c.b16 %v947, %v943
    %v1144 = vpack.c.b16 %v952, %v948
    %v1145 = vpack.c.b16 %v953, %v949
    %v1146 = vpack.c.b16 %v954, %v950
    %v1147 = vpack.c.b16 %v955, %v951
    %v1148 = vpack.c.b16 %v960, %v956
    %v1149 = vpack.c.b16 %v961, %v957
    %v1150 = vpack.c.b16 %v962, %v958
    %v1151 = vpack.c.b16 %v963, %v959
    %v1152 = vpack.c.b16 %v968, %v964
    %v1153 = vpack.c.b16 %v969, %v965
    %v1154 = vpack.c.b16 %v970, %v966
    %v1155 = vpack.c.b16 %v971, %v967
    %v1156 = vpack.c.b16 %v976, %v972
    %v1157 = vpack.c.b16 %v977, %v973
    %v1158 = vpack.c.b16 %v978, %v974
    %v1159 = vpack.c.b16 %v979, %v975
    %v1160 = vpack.c.b16 %v984, %v980
    %v1161 = vpack.c.b16 %v985, %v981
    %v1162 = vpack.c.b16 %v986, %v982
    %v1163 = vpack.c.b16 %v987, %v983
    %v1164 = vpack.c.b16 %v992, %v988
    %v1165 = vpack.c.b16 %v993, %v989
    %v1166 = vpack.c.b16 %v994, %v990
    %v1167 = vpack.c.b16 %v995, %v991
    %v1168 = vpack.c.b16 %v1000, %v996
    %v1169 = vpack.c.b16 %v1001, %v997
    %v1170 = vpack.c.b16 %v1002, %v998
    %v1171 = vpack.c.b16 %v1003, %v999
    %v1172 = vpack.c.b16 %v1008, %v1004
    %v1173 = vpack.c.b16 %v1009, %v1005
    %v1174 = vpack.c.b16 %v1010, %v1006
    %v1175 = vpack.c.b16 %v1011, %v1007
    %v1176 = vpack.c.b16 %v1016, %v1012
    %v1177 = vpack.c.b16 %v1017, %v1013
    %v1178 = vpack.c.b16 %v1018, %v1014
    %v1179 = vpack.c.b16 %v1019, %v1015
    %v1180 = vpack.c.b16 %v1024, %v1020
    %v1181 = vpack.c.b16 %v1025, %v1021
    %v1182 = vpack.c.b16 %v1026, %v1022
    %v1183 = vpack.c.b16 %v1027, %v1023
    %v1184 = vpack.c.b16 %v1032, %v1028
    %v1185 = vpack.c.b16 %v1033, %v1029
    %v1186 = vpack.c.b16 %v1034, %v1030
    %v1187 = vpack.c.b16 %v1035, %v1031
    %v1188 = vpack.c.b16 %v1040, %v1036
    %v1189 = vpack.c.b16 %v1041, %v1037
    %v1190 = vpack.c.b16 %v1042, %v1038
    %v1191 = vpack.c.b16 %v1043, %v1039
    %v1192 = vpack.c.b16 %v1048, %v1044
    %v1193 = vpack.c.b16 %v1049, %v1045
    %v1194 = vpack.c.b16 %v1050, %v1046
    %v1195 = vpack.c.b16 %v1051, %v1047
    %v1196 = vpack.c.b16 %v1056, %v1052
    %v1197 = vpack.c.b16 %v1057, %v1053
    %v1198 = vpack.c.b16 %v1058, %v1054
    %v1199 = vpack.c.b16 %v1059, %v1055
    %v1200 = vpack.c.b16 %v1064, %v1060
    %v1201 = vpack.c.b16 %v1065, %v1061
    %v1202 = vpack.c.b16 %v1066, %v1062
    %v1203 = vpack.c.b16 %v1067, %v1063
    %v1204 = vpack.c.b16 %v1072, %v1068
    %v1205 = vpack.c.b16 %v1073, %v1069
    %v1206 = vpack.c.b16 %v1074, %v1070
    %v1207 = vpack.c.b16 %v1075, %v1071
    %v1208 = vpack.c.b16 %v1080, %v1076
    %v1209 = vpack.c.b16 %v1081, %v1077
    %v1210 = vpack.c.b16 %v1082, %v1078
    %v1211 = vpack.c.b16 %v1083, %v1079
    %1340 = vmatpush.bf16.msra.mxu0 %v1112
    %1341 = vmatpush.bf16.msra.mxu0 %v1108
    %1342 = vmatpush.bf16.msra.mxu0 %v1104
    %1343 = vmatpush.bf16.msra.mxu0 %v1100
    %1344 = vmatpush.bf16.msra.mxu0 %v1096
    %1345 = vmatpush.bf16.msra.mxu0 %v1092
    %1346 = vmatpush.bf16.msra.mxu0 %v1088
    %1347 = vmatpush.bf16.msra.mxu0 %v1084
    %1348 = vmatmul.bf16.gmra.mxu0 %v530
    %v1349 = vpop.f32.mrf.mxu0
    %v1350 = vadd.f32 %v692, %v1349
    %v1351 = vpop.f32.mrf.mxu0
    %v1352 = vadd.f32 %v692, %v1351
    %1353 = vmatmul.bf16.gmra.mxu0 %v534
    %v1354 = vpop.f32.mrf.mxu0
    %v1355 = vadd.f32 %v692, %v1354
    %v1356 = vpop.f32.mrf.mxu0
    %v1357 = vadd.f32 %v692, %v1356
    %1358 = vmatmul.bf16.gmra.mxu0 %v538
    %v1359 = vpop.f32.mrf.mxu0
    %v1360 = vadd.f32 %v692, %v1359
    %v1361 = vpop.f32.mrf.mxu0
    %v1362 = vadd.f32 %v692, %v1361
    %1363 = vmatmul.bf16.gmra.mxu0 %v542
    %v1364 = vpop.f32.mrf.mxu0
    %v1365 = vadd.f32 %v692, %v1364
    %v1366 = vpop.f32.mrf.mxu0
    %v1367 = vadd.f32 %v692, %v1366
    %1368 = vmatmul.bf16.gmra.mxu0 %v546
    %v1369 = vpop.f32.mrf.mxu0
    %v1370 = vadd.f32 %v692, %v1369
    %v1371 = vpop.f32.mrf.mxu0
    %v1372 = vadd.f32 %v692, %v1371
    %1373 = vmatmul.bf16.gmra.mxu0 %v550
    %v1374 = vpop.f32.mrf.mxu0
    %v1375 = vadd.f32 %v692, %v1374
    %v1376 = vpop.f32.mrf.mxu0
    %v1377 = vadd.f32 %v692, %v1376
    %1378 = vmatmul.bf16.gmra.mxu0 %v554
    %v1379 = vpop.f32.mrf.mxu0
    %v1380 = vadd.f32 %v692, %v1379
    %v1381 = vpop.f32.mrf.mxu0
    %v1382 = vadd.f32 %v692, %v1381
    %1383 = vmatmul.bf16.gmra.mxu0 %v558
    %v1384 = vpop.f32.mrf.mxu0
    %v1385 = vadd.f32 %v692, %v1384
    %v1386 = vpop.f32.mrf.mxu0
    %v1387 = vadd.f32 %v692, %v1386
    %1388 = vdwg.mxu0
    %1389 = vmatpush.bf16.msra.mxu0 %v1144
    %1390 = vmatpush.bf16.msra.mxu0 %v1140
    %1391 = vmatpush.bf16.msra.mxu0 %v1136
    %1392 = vmatpush.bf16.msra.mxu0 %v1132
    %1393 = vmatpush.bf16.msra.mxu0 %v1128
    %1394 = vmatpush.bf16.msra.mxu0 %v1124
    %1395 = vmatpush.bf16.msra.mxu0 %v1120
    %1396 = vmatpush.bf16.msra.mxu0 %v1116
    %1397 = vmatmul.bf16.gmra.mxu0 %v531
    %v1398 = vpop.f32.mrf.mxu0
    %v1399 = vadd.f32 %v1350, %v1398
    %v1400 = vpop.f32.mrf.mxu0
    %v1401 = vadd.f32 %v1352, %v1400
    %1402 = vmatmul.bf16.gmra.mxu0 %v535
    %v1403 = vpop.f32.mrf.mxu0
    %v1404 = vadd.f32 %v1355, %v1403
    %v1405 = vpop.f32.mrf.mxu0
    %v1406 = vadd.f32 %v1357, %v1405
    %1407 = vmatmul.bf16.gmra.mxu0 %v539
    %v1408 = vpop.f32.mrf.mxu0
    %v1409 = vadd.f32 %v1360, %v1408
    %v1410 = vpop.f32.mrf.mxu0
    %v1411 = vadd.f32 %v1362, %v1410
    %1412 = vmatmul.bf16.gmra.mxu0 %v543
    %v1413 = vpop.f32.mrf.mxu0
    %v1414 = vadd.f32 %v1365, %v1413
    %v1415 = vpop.f32.mrf.mxu0
    %v1416 = vadd.f32 %v1367, %v1415
    %1417 = vmatmul.bf16.gmra.mxu0 %v547
    %v1418 = vpop.f32.mrf.mxu0
    %v1419 = vadd.f32 %v1370, %v1418
    %v1420 = vpop.f32.mrf.mxu0
    %v1421 = vadd.f32 %v1372, %v1420
    %1422 = vmatmul.bf16.gmra.mxu0 %v551
    %v1423 = vpop.f32.mrf.mxu0
    %v1424 = vadd.f32 %v1375, %v1423
    %v1425 = vpop.f32.mrf.mxu0
    %v1426 = vadd.f32 %v1377, %v1425
    %1427 = vmatmul.bf16.gmra.mxu0 %v555
    %v1428 = vpop.f32.mrf.mxu0
    %v1429 = vadd.f32 %v1380, %v1428
    %v1430 = vpop.f32.mrf.mxu0
    %v1431 = vadd.f32 %v1382, %v1430
    %1432 = vmatmul.bf16.gmra.mxu0 %v559
    %v1433 = vpop.f32.mrf.mxu0
    %v1434 = vadd.f32 %v1385, %v1433
    %v1435 = vpop.f32.mrf.mxu0
    %v1436 = vadd.f32 %v1387, %v1435
    %1437 = vdwg.mxu0
    %1438 = vmatpush.bf16.msra.mxu0 %v1176
    %1439 = vmatpush.bf16.msra.mxu0 %v1172
    %1440 = vmatpush.bf16.msra.mxu0 %v1168
    %1441 = vmatpush.bf16.msra.mxu0 %v1164
    %1442 = vmatpush.bf16.msra.mxu0 %v1160
    %1443 = vmatpush.bf16.msra.mxu0 %v1156
    %1444 = vmatpush.bf16.msra.mxu0 %v1152
    %1445 = vmatpush.bf16.msra.mxu0 %v1148
    %1446 = vmatmul.bf16.gmra.mxu0 %v532
    %v1447 = vpop.f32.mrf.mxu0
    %v1448 = vadd.f32 %v1399, %v1447
    %v1449 = vpop.f32.mrf.mxu0
    %v1450 = vadd.f32 %v1401, %v1449
    %1451 = vmatmul.bf16.gmra.mxu0 %v536
    %v1452 = vpop.f32.mrf.mxu0
    %v1453 = vadd.f32 %v1404, %v1452
    %v1454 = vpop.f32.mrf.mxu0
    %v1455 = vadd.f32 %v1406, %v1454
    %1456 = vmatmul.bf16.gmra.mxu0 %v540
    %v1457 = vpop.f32.mrf.mxu0
    %v1458 = vadd.f32 %v1409, %v1457
    %v1459 = vpop.f32.mrf.mxu0
    %v1460 = vadd.f32 %v1411, %v1459
    %1461 = vmatmul.bf16.gmra.mxu0 %v544
    %v1462 = vpop.f32.mrf.mxu0
    %v1463 = vadd.f32 %v1414, %v1462
    %v1464 = vpop.f32.mrf.mxu0
    %v1465 = vadd.f32 %v1416, %v1464
    %1466 = vmatmul.bf16.gmra.mxu0 %v548
    %v1467 = vpop.f32.mrf.mxu0
    %v1468 = vadd.f32 %v1419, %v1467
    %v1469 = vpop.f32.mrf.mxu0
    %v1470 = vadd.f32 %v1421, %v1469
    %1471 = vmatmul.bf16.gmra.mxu0 %v552
    %v1472 = vpop.f32.mrf.mxu0
    %v1473 = vadd.f32 %v1424, %v1472
    %v1474 = vpop.f32.mrf.mxu0
    %v1475 = vadd.f32 %v1426, %v1474
    %1476 = vmatmul.bf16.gmra.mxu0 %v556
    %v1477 = vpop.f32.mrf.mxu0
    %v1478 = vadd.f32 %v1429, %v1477
    %v1479 = vpop.f32.mrf.mxu0
    %v1480 = vadd.f32 %v1431, %v1479
    %1481 = vmatmul.bf16.gmra.mxu0 %v560
    %v1482 = vpop.f32.mrf.mxu0
    %v1483 = vadd.f32 %v1434, %v1482
    %v1484 = vpop.f32.mrf.mxu0
    %v1485 = vadd.f32 %v1436, %v1484
    %1486 = vdwg.mxu0
    %1487 = vmatpush.bf16.msra.mxu0 %v1208
    %1488 = vmatpush.bf16.msra.mxu0 %v1204
    %1489 = vmatpush.bf16.msra.mxu0 %v1200
    %1490 = vmatpush.bf16.msra.mxu0 %v1196
    %1491 = vmatpush.bf16.msra.mxu0 %v1192
    %1492 = vmatpush.bf16.msra.mxu0 %v1188
    %1493 = vmatpush.bf16.msra.mxu0 %v1184
    %1494 = vmatpush.bf16.msra.mxu0 %v1180
    %1495 = vmatmul.bf16.gmra.mxu0 %v533
    %v1496 = vpop.f32.mrf.mxu0
    %v1497 = vadd.f32 %v1448, %v1496
    %v1498 = vpop.f32.mrf.mxu0
    %v1499 = vadd.f32 %v1450, %v1498
    %1500 = vmatmul.bf16.gmra.mxu0 %v537
    %v1501 = vpop.f32.mrf.mxu0
    %v1502 = vadd.f32 %v1453, %v1501
    %v1503 = vpop.f32.mrf.mxu0
    %v1504 = vadd.f32 %v1455, %v1503
    %1505 = vmatmul.bf16.gmra.mxu0 %v541
    %v1506 = vpop.f32.mrf.mxu0
    %v1507 = vadd.f32 %v1458, %v1506
    %v1508 = vpop.f32.mrf.mxu0
    %v1509 = vadd.f32 %v1460, %v1508
    %1510 = vmatmul.bf16.gmra.mxu0 %v545
    %v1511 = vpop.f32.mrf.mxu0
    %v1512 = vadd.f32 %v1463, %v1511
    %v1513 = vpop.f32.mrf.mxu0
    %v1514 = vadd.f32 %v1465, %v1513
    %1515 = vmatmul.bf16.gmra.mxu0 %v549
    %v1516 = vpop.f32.mrf.mxu0
    %v1517 = vadd.f32 %v1468, %v1516
    %v1518 = vpop.f32.mrf.mxu0
    %v1519 = vadd.f32 %v1470, %v1518
    %1520 = vmatmul.bf16.gmra.mxu0 %v553
    %v1521 = vpop.f32.mrf.mxu0
    %v1522 = vadd.f32 %v1473, %v1521
    %v1523 = vpop.f32.mrf.mxu0
    %v1524 = vadd.f32 %v1475, %v1523
    %1525 = vmatmul.bf16.gmra.mxu0 %v557
    %v1526 = vpop.f32.mrf.mxu0
    %v1527 = vadd.f32 %v1478, %v1526
    %v1528 = vpop.f32.mrf.mxu0
    %v1529 = vadd.f32 %v1480, %v1528
    %1530 = vmatmul.bf16.gmra.mxu0 %v561
    %v1531 = vpop.f32.mrf.mxu0
    %v1532 = vadd.f32 %v1483, %v1531
    %v1533 = vpop.f32.mrf.mxu0
    %v1534 = vadd.f32 %v1485, %v1533
    %1535 = vdwg.mxu0
    %1536 = vmatpush.bf16.msra.mxu0 %v1113
    %1537 = vmatpush.bf16.msra.mxu0 %v1109
    %1538 = vmatpush.bf16.msra.mxu0 %v1105
    %1539 = vmatpush.bf16.msra.mxu0 %v1101
    %1540 = vmatpush.bf16.msra.mxu0 %v1097
    %1541 = vmatpush.bf16.msra.mxu0 %v1093
    %1542 = vmatpush.bf16.msra.mxu0 %v1089
    %1543 = vmatpush.bf16.msra.mxu0 %v1085
    %1544 = vmatmul.bf16.gmra.mxu0 %v530
    %v1545 = vpop.f32.mrf.mxu0
    %v1546 = vadd.f32 %v693, %v1545
    %v1547 = vpop.f32.mrf.mxu0
    %v1548 = vadd.f32 %v693, %v1547
    %1549 = vmatmul.bf16.gmra.mxu0 %v534
    %v1550 = vpop.f32.mrf.mxu0
    %v1551 = vadd.f32 %v693, %v1550
    %v1552 = vpop.f32.mrf.mxu0
    %v1553 = vadd.f32 %v693, %v1552
    %1554 = vmatmul.bf16.gmra.mxu0 %v538
    %v1555 = vpop.f32.mrf.mxu0
    %v1556 = vadd.f32 %v693, %v1555
    %v1557 = vpop.f32.mrf.mxu0
    %v1558 = vadd.f32 %v693, %v1557
    %1559 = vmatmul.bf16.gmra.mxu0 %v542
    %v1560 = vpop.f32.mrf.mxu0
    %v1561 = vadd.f32 %v693, %v1560
    %v1562 = vpop.f32.mrf.mxu0
    %v1563 = vadd.f32 %v693, %v1562
    %1564 = vmatmul.bf16.gmra.mxu0 %v546
    %v1565 = vpop.f32.mrf.mxu0
    %v1566 = vadd.f32 %v693, %v1565
    %v1567 = vpop.f32.mrf.mxu0
    %v1568 = vadd.f32 %v693, %v1567
    %1569 = vmatmul.bf16.gmra.mxu0 %v550
    %v1570 = vpop.f32.mrf.mxu0
    %v1571 = vadd.f32 %v693, %v1570
    %v1572 = vpop.f32.mrf.mxu0
    %v1573 = vadd.f32 %v693, %v1572
    %1574 = vmatmul.bf16.gmra.mxu0 %v554
    %v1575 = vpop.f32.mrf.mxu0
    %v1576 = vadd.f32 %v693, %v1575
    %v1577 = vpop.f32.mrf.mxu0
    %v1578 = vadd.f32 %v693, %v1577
    %1579 = vmatmul.bf16.gmra.mxu0 %v558
    %v1580 = vpop.f32.mrf.mxu0
    %v1581 = vadd.f32 %v693, %v1580
    %v1582 = vpop.f32.mrf.mxu0
    %v1583 = vadd.f32 %v693, %v1582
    %1584 = vdwg.mxu0
    %1585 = vmatpush.bf16.msra.mxu0 %v1145
    %1586 = vmatpush.bf16.msra.mxu0 %v1141
    %1587 = vmatpush.bf16.msra.mxu0 %v1137
    %1588 = vmatpush.bf16.msra.mxu0 %v1133
    %1589 = vmatpush.bf16.msra.mxu0 %v1129
    %1590 = vmatpush.bf16.msra.mxu0 %v1125
    %1591 = vmatpush.bf16.msra.mxu0 %v1121
    %1592 = vmatpush.bf16.msra.mxu0 %v1117
    %1593 = vmatmul.bf16.gmra.mxu0 %v531
    %v1594 = vpop.f32.mrf.mxu0
    %v1595 = vadd.f32 %v1546, %v1594
    %v1596 = vpop.f32.mrf.mxu0
    %v1597 = vadd.f32 %v1548, %v1596
    %1598 = vmatmul.bf16.gmra.mxu0 %v535
    %v1599 = vpop.f32.mrf.mxu0
    %v1600 = vadd.f32 %v1551, %v1599
    %v1601 = vpop.f32.mrf.mxu0
    %v1602 = vadd.f32 %v1553, %v1601
    %1603 = vmatmul.bf16.gmra.mxu0 %v539
    %v1604 = vpop.f32.mrf.mxu0
    %v1605 = vadd.f32 %v1556, %v1604
    %v1606 = vpop.f32.mrf.mxu0
    %v1607 = vadd.f32 %v1558, %v1606
    %1608 = vmatmul.bf16.gmra.mxu0 %v543
    %v1609 = vpop.f32.mrf.mxu0
    %v1610 = vadd.f32 %v1561, %v1609
    %v1611 = vpop.f32.mrf.mxu0
    %v1612 = vadd.f32 %v1563, %v1611
    %1613 = vmatmul.bf16.gmra.mxu0 %v547
    %v1614 = vpop.f32.mrf.mxu0
    %v1615 = vadd.f32 %v1566, %v1614
    %v1616 = vpop.f32.mrf.mxu0
    %v1617 = vadd.f32 %v1568, %v1616
    %1618 = vmatmul.bf16.gmra.mxu0 %v551
    %v1619 = vpop.f32.mrf.mxu0
    %v1620 = vadd.f32 %v1571, %v1619
    %v1621 = vpop.f32.mrf.mxu0
    %v1622 = vadd.f32 %v1573, %v1621
    %1623 = vmatmul.bf16.gmra.mxu0 %v555
    %v1624 = vpop.f32.mrf.mxu0
    %v1625 = vadd.f32 %v1576, %v1624
    %v1626 = vpop.f32.mrf.mxu0
    %v1627 = vadd.f32 %v1578, %v1626
    %1628 = vmatmul.bf16.gmra.mxu0 %v559
    %v1629 = vpop.f32.mrf.mxu0
    %v1630 = vadd.f32 %v1581, %v1629
    %v1631 = vpop.f32.mrf.mxu0
    %v1632 = vadd.f32 %v1583, %v1631
    %1633 = vdwg.mxu0
    %1634 = vmatpush.bf16.msra.mxu0 %v1177
    %1635 = vmatpush.bf16.msra.mxu0 %v1173
    %1636 = vmatpush.bf16.msra.mxu0 %v1169
    %1637 = vmatpush.bf16.msra.mxu0 %v1165
    %1638 = vmatpush.bf16.msra.mxu0 %v1161
    %1639 = vmatpush.bf16.msra.mxu0 %v1157
    %1640 = vmatpush.bf16.msra.mxu0 %v1153
    %1641 = vmatpush.bf16.msra.mxu0 %v1149
    %1642 = vmatmul.bf16.gmra.mxu0 %v532
    %v1643 = vpop.f32.mrf.mxu0
    %v1644 = vadd.f32 %v1595, %v1643
    %v1645 = vpop.f32.mrf.mxu0
    %v1646 = vadd.f32 %v1597, %v1645
    %1647 = vmatmul.bf16.gmra.mxu0 %v536
    %v1648 = vpop.f32.mrf.mxu0
    %v1649 = vadd.f32 %v1600, %v1648
    %v1650 = vpop.f32.mrf.mxu0
    %v1651 = vadd.f32 %v1602, %v1650
    %1652 = vmatmul.bf16.gmra.mxu0 %v540
    %v1653 = vpop.f32.mrf.mxu0
    %v1654 = vadd.f32 %v1605, %v1653
    %v1655 = vpop.f32.mrf.mxu0
    %v1656 = vadd.f32 %v1607, %v1655
    %1657 = vmatmul.bf16.gmra.mxu0 %v544
    %v1658 = vpop.f32.mrf.mxu0
    %v1659 = vadd.f32 %v1610, %v1658
    %v1660 = vpop.f32.mrf.mxu0
    %v1661 = vadd.f32 %v1612, %v1660
    %1662 = vmatmul.bf16.gmra.mxu0 %v548
    %v1663 = vpop.f32.mrf.mxu0
    %v1664 = vadd.f32 %v1615, %v1663
    %v1665 = vpop.f32.mrf.mxu0
    %v1666 = vadd.f32 %v1617, %v1665
    %1667 = vmatmul.bf16.gmra.mxu0 %v552
    %v1668 = vpop.f32.mrf.mxu0
    %v1669 = vadd.f32 %v1620, %v1668
    %v1670 = vpop.f32.mrf.mxu0
    %v1671 = vadd.f32 %v1622, %v1670
    %1672 = vmatmul.bf16.gmra.mxu0 %v556
    %v1673 = vpop.f32.mrf.mxu0
    %v1674 = vadd.f32 %v1625, %v1673
    %v1675 = vpop.f32.mrf.mxu0
    %v1676 = vadd.f32 %v1627, %v1675
    %1677 = vmatmul.bf16.gmra.mxu0 %v560
    %v1678 = vpop.f32.mrf.mxu0
    %v1679 = vadd.f32 %v1630, %v1678
    %v1680 = vpop.f32.mrf.mxu0
    %v1681 = vadd.f32 %v1632, %v1680
    %1682 = vdwg.mxu0
    %1683 = vmatpush.bf16.msra.mxu0 %v1209
    %1684 = vmatpush.bf16.msra.mxu0 %v1205
    %1685 = vmatpush.bf16.msra.mxu0 %v1201
    %1686 = vmatpush.bf16.msra.mxu0 %v1197
    %1687 = vmatpush.bf16.msra.mxu0 %v1193
    %1688 = vmatpush.bf16.msra.mxu0 %v1189
    %1689 = vmatpush.bf16.msra.mxu0 %v1185
    %1690 = vmatpush.bf16.msra.mxu0 %v1181
    %1691 = vmatmul.bf16.gmra.mxu0 %v533
    %v1692 = vpop.f32.mrf.mxu0
    %v1693 = vadd.f32 %v1644, %v1692
    %v1694 = vpop.f32.mrf.mxu0
    %v1695 = vadd.f32 %v1646, %v1694
    %1696 = vmatmul.bf16.gmra.mxu0 %v537
    %v1697 = vpop.f32.mrf.mxu0
    %v1698 = vadd.f32 %v1649, %v1697
    %v1699 = vpop.f32.mrf.mxu0
    %v1700 = vadd.f32 %v1651, %v1699
    %1701 = vmatmul.bf16.gmra.mxu0 %v541
    %v1702 = vpop.f32.mrf.mxu0
    %v1703 = vadd.f32 %v1654, %v1702
    %v1704 = vpop.f32.mrf.mxu0
    %v1705 = vadd.f32 %v1656, %v1704
    %1706 = vmatmul.bf16.gmra.mxu0 %v545
    %v1707 = vpop.f32.mrf.mxu0
    %v1708 = vadd.f32 %v1659, %v1707
    %v1709 = vpop.f32.mrf.mxu0
    %v1710 = vadd.f32 %v1661, %v1709
    %1711 = vmatmul.bf16.gmra.mxu0 %v549
    %v1712 = vpop.f32.mrf.mxu0
    %v1713 = vadd.f32 %v1664, %v1712
    %v1714 = vpop.f32.mrf.mxu0
    %v1715 = vadd.f32 %v1666, %v1714
    %1716 = vmatmul.bf16.gmra.mxu0 %v553
    %v1717 = vpop.f32.mrf.mxu0
    %v1718 = vadd.f32 %v1669, %v1717
    %v1719 = vpop.f32.mrf.mxu0
    %v1720 = vadd.f32 %v1671, %v1719
    %1721 = vmatmul.bf16.gmra.mxu0 %v557
    %v1722 = vpop.f32.mrf.mxu0
    %v1723 = vadd.f32 %v1674, %v1722
    %v1724 = vpop.f32.mrf.mxu0
    %v1725 = vadd.f32 %v1676, %v1724
    %1726 = vmatmul.bf16.gmra.mxu0 %v561
    %v1727 = vpop.f32.mrf.mxu0
    %v1728 = vadd.f32 %v1679, %v1727
    %v1729 = vpop.f32.mrf.mxu0
    %v1730 = vadd.f32 %v1681, %v1729
    %1731 = vdwg.mxu0
    %1732 = vmatpush.bf16.msra.mxu0 %v1114
    %1733 = vmatpush.bf16.msra.mxu0 %v1110
    %1734 = vmatpush.bf16.msra.mxu0 %v1106
    %1735 = vmatpush.bf16.msra.mxu0 %v1102
    %1736 = vmatpush.bf16.msra.mxu0 %v1098
    %1737 = vmatpush.bf16.msra.mxu0 %v1094
    %1738 = vmatpush.bf16.msra.mxu0 %v1090
    %1739 = vmatpush.bf16.msra.mxu0 %v1086
    %1740 = vmatmul.bf16.gmra.mxu0 %v530
    %v1741 = vpop.f32.mrf.mxu0
    %v1742 = vadd.f32 %v694, %v1741
    %v1743 = vpop.f32.mrf.mxu0
    %v1744 = vadd.f32 %v694, %v1743
    %1745 = vmatmul.bf16.gmra.mxu0 %v534
    %v1746 = vpop.f32.mrf.mxu0
    %v1747 = vadd.f32 %v694, %v1746
    %v1748 = vpop.f32.mrf.mxu0
    %v1749 = vadd.f32 %v694, %v1748
    %1750 = vmatmul.bf16.gmra.mxu0 %v538
    %v1751 = vpop.f32.mrf.mxu0
    %v1752 = vadd.f32 %v694, %v1751
    %v1753 = vpop.f32.mrf.mxu0
    %v1754 = vadd.f32 %v694, %v1753
    %1755 = vmatmul.bf16.gmra.mxu0 %v542
    %v1756 = vpop.f32.mrf.mxu0
    %v1757 = vadd.f32 %v694, %v1756
    %v1758 = vpop.f32.mrf.mxu0
    %v1759 = vadd.f32 %v694, %v1758
    %1760 = vmatmul.bf16.gmra.mxu0 %v546
    %v1761 = vpop.f32.mrf.mxu0
    %v1762 = vadd.f32 %v694, %v1761
    %v1763 = vpop.f32.mrf.mxu0
    %v1764 = vadd.f32 %v694, %v1763
    %1765 = vmatmul.bf16.gmra.mxu0 %v550
    %v1766 = vpop.f32.mrf.mxu0
    %v1767 = vadd.f32 %v694, %v1766
    %v1768 = vpop.f32.mrf.mxu0
    %v1769 = vadd.f32 %v694, %v1768
    %1770 = vmatmul.bf16.gmra.mxu0 %v554
    %v1771 = vpop.f32.mrf.mxu0
    %v1772 = vadd.f32 %v694, %v1771
    %v1773 = vpop.f32.mrf.mxu0
    %v1774 = vadd.f32 %v694, %v1773
    %1775 = vmatmul.bf16.gmra.mxu0 %v558
    %v1776 = vpop.f32.mrf.mxu0
    %v1777 = vadd.f32 %v694, %v1776
    %v1778 = vpop.f32.mrf.mxu0
    %v1779 = vadd.f32 %v694, %v1778
    %1780 = vdwg.mxu0
    %1781 = vmatpush.bf16.msra.mxu0 %v1146
    %1782 = vmatpush.bf16.msra.mxu0 %v1142
    %1783 = vmatpush.bf16.msra.mxu0 %v1138
    %1784 = vmatpush.bf16.msra.mxu0 %v1134
    %1785 = vmatpush.bf16.msra.mxu0 %v1130
    %1786 = vmatpush.bf16.msra.mxu0 %v1126
    %1787 = vmatpush.bf16.msra.mxu0 %v1122
    %1788 = vmatpush.bf16.msra.mxu0 %v1118
    %1789 = vmatmul.bf16.gmra.mxu0 %v531
    %v1790 = vpop.f32.mrf.mxu0
    %v1791 = vadd.f32 %v1742, %v1790
    %v1792 = vpop.f32.mrf.mxu0
    %v1793 = vadd.f32 %v1744, %v1792
    %1794 = vmatmul.bf16.gmra.mxu0 %v535
    %v1795 = vpop.f32.mrf.mxu0
    %v1796 = vadd.f32 %v1747, %v1795
    %v1797 = vpop.f32.mrf.mxu0
    %v1798 = vadd.f32 %v1749, %v1797
    %1799 = vmatmul.bf16.gmra.mxu0 %v539
    %v1800 = vpop.f32.mrf.mxu0
    %v1801 = vadd.f32 %v1752, %v1800
    %v1802 = vpop.f32.mrf.mxu0
    %v1803 = vadd.f32 %v1754, %v1802
    %1804 = vmatmul.bf16.gmra.mxu0 %v543
    %v1805 = vpop.f32.mrf.mxu0
    %v1806 = vadd.f32 %v1757, %v1805
    %v1807 = vpop.f32.mrf.mxu0
    %v1808 = vadd.f32 %v1759, %v1807
    %1809 = vmatmul.bf16.gmra.mxu0 %v547
    %v1810 = vpop.f32.mrf.mxu0
    %v1811 = vadd.f32 %v1762, %v1810
    %v1812 = vpop.f32.mrf.mxu0
    %v1813 = vadd.f32 %v1764, %v1812
    %1814 = vmatmul.bf16.gmra.mxu0 %v551
    %v1815 = vpop.f32.mrf.mxu0
    %v1816 = vadd.f32 %v1767, %v1815
    %v1817 = vpop.f32.mrf.mxu0
    %v1818 = vadd.f32 %v1769, %v1817
    %1819 = vmatmul.bf16.gmra.mxu0 %v555
    %v1820 = vpop.f32.mrf.mxu0
    %v1821 = vadd.f32 %v1772, %v1820
    %v1822 = vpop.f32.mrf.mxu0
    %v1823 = vadd.f32 %v1774, %v1822
    %1824 = vmatmul.bf16.gmra.mxu0 %v559
    %v1825 = vpop.f32.mrf.mxu0
    %v1826 = vadd.f32 %v1777, %v1825
    %v1827 = vpop.f32.mrf.mxu0
    %v1828 = vadd.f32 %v1779, %v1827
    %1829 = vdwg.mxu0
    %1830 = vmatpush.bf16.msra.mxu0 %v1178
    %1831 = vmatpush.bf16.msra.mxu0 %v1174
    %1832 = vmatpush.bf16.msra.mxu0 %v1170
    %1833 = vmatpush.bf16.msra.mxu0 %v1166
    %1834 = vmatpush.bf16.msra.mxu0 %v1162
    %1835 = vmatpush.bf16.msra.mxu0 %v1158
    %1836 = vmatpush.bf16.msra.mxu0 %v1154
    %1837 = vmatpush.bf16.msra.mxu0 %v1150
    %1838 = vmatmul.bf16.gmra.mxu0 %v532
    %v1839 = vpop.f32.mrf.mxu0
    %v1840 = vadd.f32 %v1791, %v1839
    %v1841 = vpop.f32.mrf.mxu0
    %v1842 = vadd.f32 %v1793, %v1841
    %1843 = vmatmul.bf16.gmra.mxu0 %v536
    %v1844 = vpop.f32.mrf.mxu0
    %v1845 = vadd.f32 %v1796, %v1844
    %v1846 = vpop.f32.mrf.mxu0
    %v1847 = vadd.f32 %v1798, %v1846
    %1848 = vmatmul.bf16.gmra.mxu0 %v540
    %v1849 = vpop.f32.mrf.mxu0
    %v1850 = vadd.f32 %v1801, %v1849
    %v1851 = vpop.f32.mrf.mxu0
    %v1852 = vadd.f32 %v1803, %v1851
    %1853 = vmatmul.bf16.gmra.mxu0 %v544
    %v1854 = vpop.f32.mrf.mxu0
    %v1855 = vadd.f32 %v1806, %v1854
    %v1856 = vpop.f32.mrf.mxu0
    %v1857 = vadd.f32 %v1808, %v1856
    %1858 = vmatmul.bf16.gmra.mxu0 %v548
    %v1859 = vpop.f32.mrf.mxu0
    %v1860 = vadd.f32 %v1811, %v1859
    %v1861 = vpop.f32.mrf.mxu0
    %v1862 = vadd.f32 %v1813, %v1861
    %1863 = vmatmul.bf16.gmra.mxu0 %v552
    %v1864 = vpop.f32.mrf.mxu0
    %v1865 = vadd.f32 %v1816, %v1864
    %v1866 = vpop.f32.mrf.mxu0
    %v1867 = vadd.f32 %v1818, %v1866
    %1868 = vmatmul.bf16.gmra.mxu0 %v556
    %v1869 = vpop.f32.mrf.mxu0
    %v1870 = vadd.f32 %v1821, %v1869
    %v1871 = vpop.f32.mrf.mxu0
    %v1872 = vadd.f32 %v1823, %v1871
    %1873 = vmatmul.bf16.gmra.mxu0 %v560
    %v1874 = vpop.f32.mrf.mxu0
    %v1875 = vadd.f32 %v1826, %v1874
    %v1876 = vpop.f32.mrf.mxu0
    %v1877 = vadd.f32 %v1828, %v1876
    %1878 = vdwg.mxu0
    %1879 = vmatpush.bf16.msra.mxu0 %v1210
    %1880 = vmatpush.bf16.msra.mxu0 %v1206
    %1881 = vmatpush.bf16.msra.mxu0 %v1202
    %1882 = vmatpush.bf16.msra.mxu0 %v1198
    %1883 = vmatpush.bf16.msra.mxu0 %v1194
    %1884 = vmatpush.bf16.msra.mxu0 %v1190
    %1885 = vmatpush.bf16.msra.mxu0 %v1186
    %1886 = vmatpush.bf16.msra.mxu0 %v1182
    %1887 = vmatmul.bf16.gmra.mxu0 %v533
    %v1888 = vpop.f32.mrf.mxu0
    %v1889 = vadd.f32 %v1840, %v1888
    %v1890 = vpop.f32.mrf.mxu0
    %v1891 = vadd.f32 %v1842, %v1890
    %1892 = vmatmul.bf16.gmra.mxu0 %v537
    %v1893 = vpop.f32.mrf.mxu0
    %v1894 = vadd.f32 %v1845, %v1893
    %v1895 = vpop.f32.mrf.mxu0
    %v1896 = vadd.f32 %v1847, %v1895
    %1897 = vmatmul.bf16.gmra.mxu0 %v541
    %v1898 = vpop.f32.mrf.mxu0
    %v1899 = vadd.f32 %v1850, %v1898
    %v1900 = vpop.f32.mrf.mxu0
    %v1901 = vadd.f32 %v1852, %v1900
    %1902 = vmatmul.bf16.gmra.mxu0 %v545
    %v1903 = vpop.f32.mrf.mxu0
    %v1904 = vadd.f32 %v1855, %v1903
    %v1905 = vpop.f32.mrf.mxu0
    %v1906 = vadd.f32 %v1857, %v1905
    %1907 = vmatmul.bf16.gmra.mxu0 %v549
    %v1908 = vpop.f32.mrf.mxu0
    %v1909 = vadd.f32 %v1860, %v1908
    %v1910 = vpop.f32.mrf.mxu0
    %v1911 = vadd.f32 %v1862, %v1910
    %1912 = vmatmul.bf16.gmra.mxu0 %v553
    %v1913 = vpop.f32.mrf.mxu0
    %v1914 = vadd.f32 %v1865, %v1913
    %v1915 = vpop.f32.mrf.mxu0
    %v1916 = vadd.f32 %v1867, %v1915
    %1917 = vmatmul.bf16.gmra.mxu0 %v557
    %v1918 = vpop.f32.mrf.mxu0
    %v1919 = vadd.f32 %v1870, %v1918
    %v1920 = vpop.f32.mrf.mxu0
    %v1921 = vadd.f32 %v1872, %v1920
    %1922 = vmatmul.bf16.gmra.mxu0 %v561
    %v1923 = vpop.f32.mrf.mxu0
    %v1924 = vadd.f32 %v1875, %v1923
    %v1925 = vpop.f32.mrf.mxu0
    %v1926 = vadd.f32 %v1877, %v1925
    %1927 = vdwg.mxu0
    %1928 = vmatpush.bf16.msra.mxu0 %v1115
    %1929 = vmatpush.bf16.msra.mxu0 %v1111
    %1930 = vmatpush.bf16.msra.mxu0 %v1107
    %1931 = vmatpush.bf16.msra.mxu0 %v1103
    %1932 = vmatpush.bf16.msra.mxu0 %v1099
    %1933 = vmatpush.bf16.msra.mxu0 %v1095
    %1934 = vmatpush.bf16.msra.mxu0 %v1091
    %1935 = vmatpush.bf16.msra.mxu0 %v1087
    %1936 = vmatmul.bf16.gmra.mxu0 %v530
    %v1937 = vpop.f32.mrf.mxu0
    %v1938 = vadd.f32 %v695, %v1937
    %v1939 = vpop.f32.mrf.mxu0
    %v1940 = vadd.f32 %v695, %v1939
    %1941 = vmatmul.bf16.gmra.mxu0 %v534
    %v1942 = vpop.f32.mrf.mxu0
    %v1943 = vadd.f32 %v695, %v1942
    %v1944 = vpop.f32.mrf.mxu0
    %v1945 = vadd.f32 %v695, %v1944
    %1946 = vmatmul.bf16.gmra.mxu0 %v538
    %v1947 = vpop.f32.mrf.mxu0
    %v1948 = vadd.f32 %v695, %v1947
    %v1949 = vpop.f32.mrf.mxu0
    %v1950 = vadd.f32 %v695, %v1949
    %1951 = vmatmul.bf16.gmra.mxu0 %v542
    %v1952 = vpop.f32.mrf.mxu0
    %v1953 = vadd.f32 %v695, %v1952
    %v1954 = vpop.f32.mrf.mxu0
    %v1955 = vadd.f32 %v695, %v1954
    %1956 = vmatmul.bf16.gmra.mxu0 %v546
    %v1957 = vpop.f32.mrf.mxu0
    %v1958 = vadd.f32 %v695, %v1957
    %v1959 = vpop.f32.mrf.mxu0
    %v1960 = vadd.f32 %v695, %v1959
    %1961 = vmatmul.bf16.gmra.mxu0 %v550
    %v1962 = vpop.f32.mrf.mxu0
    %v1963 = vadd.f32 %v695, %v1962
    %v1964 = vpop.f32.mrf.mxu0
    %v1965 = vadd.f32 %v695, %v1964
    %1966 = vmatmul.bf16.gmra.mxu0 %v554
    %v1967 = vpop.f32.mrf.mxu0
    %v1968 = vadd.f32 %v695, %v1967
    %v1969 = vpop.f32.mrf.mxu0
    %v1970 = vadd.f32 %v695, %v1969
    %1971 = vmatmul.bf16.gmra.mxu0 %v558
    %v1972 = vpop.f32.mrf.mxu0
    %v1973 = vadd.f32 %v695, %v1972
    %v1974 = vpop.f32.mrf.mxu0
    %v1975 = vadd.f32 %v695, %v1974
    %1976 = vdwg.mxu0
    %1977 = vmatpush.bf16.msra.mxu0 %v1147
    %1978 = vmatpush.bf16.msra.mxu0 %v1143
    %1979 = vmatpush.bf16.msra.mxu0 %v1139
    %1980 = vmatpush.bf16.msra.mxu0 %v1135
    %1981 = vmatpush.bf16.msra.mxu0 %v1131
    %1982 = vmatpush.bf16.msra.mxu0 %v1127
    %1983 = vmatpush.bf16.msra.mxu0 %v1123
    %1984 = vmatpush.bf16.msra.mxu0 %v1119
    %1985 = vmatmul.bf16.gmra.mxu0 %v531
    %v1986 = vpop.f32.mrf.mxu0
    %v1987 = vadd.f32 %v1938, %v1986
    %v1988 = vpop.f32.mrf.mxu0
    %v1989 = vadd.f32 %v1940, %v1988
    %1990 = vmatmul.bf16.gmra.mxu0 %v535
    %v1991 = vpop.f32.mrf.mxu0
    %v1992 = vadd.f32 %v1943, %v1991
    %v1993 = vpop.f32.mrf.mxu0
    %v1994 = vadd.f32 %v1945, %v1993
    %1995 = vmatmul.bf16.gmra.mxu0 %v539
    %v1996 = vpop.f32.mrf.mxu0
    %v1997 = vadd.f32 %v1948, %v1996
    %v1998 = vpop.f32.mrf.mxu0
    %v1999 = vadd.f32 %v1950, %v1998
    %2000 = vmatmul.bf16.gmra.mxu0 %v543
    %v2001 = vpop.f32.mrf.mxu0
    %v2002 = vadd.f32 %v1953, %v2001
    %v2003 = vpop.f32.mrf.mxu0
    %v2004 = vadd.f32 %v1955, %v2003
    %2005 = vmatmul.bf16.gmra.mxu0 %v547
    %v2006 = vpop.f32.mrf.mxu0
    %v2007 = vadd.f32 %v1958, %v2006
    %v2008 = vpop.f32.mrf.mxu0
    %v2009 = vadd.f32 %v1960, %v2008
    %2010 = vmatmul.bf16.gmra.mxu0 %v551
    %v2011 = vpop.f32.mrf.mxu0
    %v2012 = vadd.f32 %v1963, %v2011
    %v2013 = vpop.f32.mrf.mxu0
    %v2014 = vadd.f32 %v1965, %v2013
    %2015 = vmatmul.bf16.gmra.mxu0 %v555
    %v2016 = vpop.f32.mrf.mxu0
    %v2017 = vadd.f32 %v1968, %v2016
    %v2018 = vpop.f32.mrf.mxu0
    %v2019 = vadd.f32 %v1970, %v2018
    %2020 = vmatmul.bf16.gmra.mxu0 %v559
    %v2021 = vpop.f32.mrf.mxu0
    %v2022 = vadd.f32 %v1973, %v2021
    %v2023 = vpop.f32.mrf.mxu0
    %v2024 = vadd.f32 %v1975, %v2023
    %2025 = vdwg.mxu0
    %2026 = vmatpush.bf16.msra.mxu0 %v1179
    %2027 = vmatpush.bf16.msra.mxu0 %v1175
    %2028 = vmatpush.bf16.msra.mxu0 %v1171
    %2029 = vmatpush.bf16.msra.mxu0 %v1167
    %2030 = vmatpush.bf16.msra.mxu0 %v1163
    %2031 = vmatpush.bf16.msra.mxu0 %v1159
    %2032 = vmatpush.bf16.msra.mxu0 %v1155
    %2033 = vmatpush.bf16.msra.mxu0 %v1151
    %2034 = vmatmul.bf16.gmra.mxu0 %v532
    %v2035 = vpop.f32.mrf.mxu0
    %v2036 = vadd.f32 %v1987, %v2035
    %v2037 = vpop.f32.mrf.mxu0
    %v2038 = vadd.f32 %v1989, %v2037
    %2039 = vmatmul.bf16.gmra.mxu0 %v536
    %v2040 = vpop.f32.mrf.mxu0
    %v2041 = vadd.f32 %v1992, %v2040
    %v2042 = vpop.f32.mrf.mxu0
    %v2043 = vadd.f32 %v1994, %v2042
    %2044 = vmatmul.bf16.gmra.mxu0 %v540
    %v2045 = vpop.f32.mrf.mxu0
    %v2046 = vadd.f32 %v1997, %v2045
    %v2047 = vpop.f32.mrf.mxu0
    %v2048 = vadd.f32 %v1999, %v2047
    %2049 = vmatmul.bf16.gmra.mxu0 %v544
    %v2050 = vpop.f32.mrf.mxu0
    %v2051 = vadd.f32 %v2002, %v2050
    %v2052 = vpop.f32.mrf.mxu0
    %v2053 = vadd.f32 %v2004, %v2052
    %2054 = vmatmul.bf16.gmra.mxu0 %v548
    %v2055 = vpop.f32.mrf.mxu0
    %v2056 = vadd.f32 %v2007, %v2055
    %v2057 = vpop.f32.mrf.mxu0
    %v2058 = vadd.f32 %v2009, %v2057
    %2059 = vmatmul.bf16.gmra.mxu0 %v552
    %v2060 = vpop.f32.mrf.mxu0
    %v2061 = vadd.f32 %v2012, %v2060
    %v2062 = vpop.f32.mrf.mxu0
    %v2063 = vadd.f32 %v2014, %v2062
    %2064 = vmatmul.bf16.gmra.mxu0 %v556
    %v2065 = vpop.f32.mrf.mxu0
    %v2066 = vadd.f32 %v2017, %v2065
    %v2067 = vpop.f32.mrf.mxu0
    %v2068 = vadd.f32 %v2019, %v2067
    %2069 = vmatmul.bf16.gmra.mxu0 %v560
    %v2070 = vpop.f32.mrf.mxu0
    %v2071 = vadd.f32 %v2022, %v2070
    %v2072 = vpop.f32.mrf.mxu0
    %v2073 = vadd.f32 %v2024, %v2072
    %2074 = vdwg.mxu0
    %2075 = vmatpush.bf16.msra.mxu0 %v1211
    %2076 = vmatpush.bf16.msra.mxu0 %v1207
    %2077 = vmatpush.bf16.msra.mxu0 %v1203
    %2078 = vmatpush.bf16.msra.mxu0 %v1199
    %2079 = vmatpush.bf16.msra.mxu0 %v1195
    %2080 = vmatpush.bf16.msra.mxu0 %v1191
    %2081 = vmatpush.bf16.msra.mxu0 %v1187
    %2082 = vmatpush.bf16.msra.mxu0 %v1183
    %2083 = vmatmul.bf16.gmra.mxu0 %v533
    %v2084 = vpop.f32.mrf.mxu0
    %v2085 = vadd.f32 %v2036, %v2084
    %v2086 = vpop.f32.mrf.mxu0
    %v2087 = vadd.f32 %v2038, %v2086
    %2088 = vmatmul.bf16.gmra.mxu0 %v537
    %v2089 = vpop.f32.mrf.mxu0
    %v2090 = vadd.f32 %v2041, %v2089
    %v2091 = vpop.f32.mrf.mxu0
    %v2092 = vadd.f32 %v2043, %v2091
    %2093 = vmatmul.bf16.gmra.mxu0 %v541
    %v2094 = vpop.f32.mrf.mxu0
    %v2095 = vadd.f32 %v2046, %v2094
    %v2096 = vpop.f32.mrf.mxu0
    %v2097 = vadd.f32 %v2048, %v2096
    %2098 = vmatmul.bf16.gmra.mxu0 %v545
    %v2099 = vpop.f32.mrf.mxu0
    %v2100 = vadd.f32 %v2051, %v2099
    %v2101 = vpop.f32.mrf.mxu0
    %v2102 = vadd.f32 %v2053, %v2101
    %2103 = vmatmul.bf16.gmra.mxu0 %v549
    %v2104 = vpop.f32.mrf.mxu0
    %v2105 = vadd.f32 %v2056, %v2104
    %v2106 = vpop.f32.mrf.mxu0
    %v2107 = vadd.f32 %v2058, %v2106
    %2108 = vmatmul.bf16.gmra.mxu0 %v553
    %v2109 = vpop.f32.mrf.mxu0
    %v2110 = vadd.f32 %v2061, %v2109
    %v2111 = vpop.f32.mrf.mxu0
    %v2112 = vadd.f32 %v2063, %v2111
    %2113 = vmatmul.bf16.gmra.mxu0 %v557
    %v2114 = vpop.f32.mrf.mxu0
    %v2115 = vadd.f32 %v2066, %v2114
    %v2116 = vpop.f32.mrf.mxu0
    %v2117 = vadd.f32 %v2068, %v2116
    %2118 = vmatmul.bf16.gmra.mxu0 %v561
    %v2119 = vpop.f32.mrf.mxu0
    %v2120 = vadd.f32 %v2071, %v2119
    %v2121 = vpop.f32.mrf.mxu0
    %v2122 = vadd.f32 %v2073, %v2121
    %2123 = vdwg.mxu0
    %v2124 = vpack.c.bf16 %v1693, %v1497
    %v2125 = vpack.c.bf16 %v2085, %v1889
    %v2126 = vpack.c.bf16 %v1695, %v1499
    %v2127 = vpack.c.bf16 %v2087, %v1891
    %v2128 = vpack.c.bf16 %v1698, %v1502
    %v2129 = vpack.c.bf16 %v2090, %v1894
    %v2130 = vpack.c.bf16 %v1700, %v1504
    %v2131 = vpack.c.bf16 %v2092, %v1896
    %v2132 = vpack.c.bf16 %v1703, %v1507
    %v2133 = vpack.c.bf16 %v2095, %v1899
    %v2134 = vpack.c.bf16 %v1705, %v1509
    %v2135 = vpack.c.bf16 %v2097, %v1901
    %v2136 = vpack.c.bf16 %v1708, %v1512
    %v2137 = vpack.c.bf16 %v2100, %v1904
    %v2138 = vpack.c.bf16 %v1710, %v1514
    %v2139 = vpack.c.bf16 %v2102, %v1906
    %v2140 = vpack.c.bf16 %v1713, %v1517
    %v2141 = vpack.c.bf16 %v2105, %v1909
    %v2142 = vpack.c.bf16 %v1715, %v1519
    %v2143 = vpack.c.bf16 %v2107, %v1911
    %v2144 = vpack.c.bf16 %v1718, %v1522
    %v2145 = vpack.c.bf16 %v2110, %v1914
    %v2146 = vpack.c.bf16 %v1720, %v1524
    %v2147 = vpack.c.bf16 %v2112, %v1916
    %v2148 = vpack.c.bf16 %v1723, %v1527
    %v2149 = vpack.c.bf16 %v2115, %v1919
    %v2150 = vpack.c.bf16 %v1725, %v1529
    %v2151 = vpack.c.bf16 %v2117, %v1921
    %v2152 = vpack.c.bf16 %v1728, %v1532
    %v2153 = vpack.c.bf16 %v2120, %v1924
    %v2154 = vpack.c.bf16 %v1730, %v1534
    %v2155 = vpack.c.bf16 %v2122, %v1926
    %v2156 = vunpack.c.l.bf16 %v2124
    %v2157 = vunpack.c.h.bf16 %v2124
    %v2158 = vunpack.c.l.bf16 %v2125
    %v2159 = vunpack.c.h.bf16 %v2125
    %v2160 = vunpack.c.l.bf16 %v2126
    %v2161 = vunpack.c.h.bf16 %v2126
    %v2162 = vunpack.c.l.bf16 %v2127
    %v2163 = vunpack.c.h.bf16 %v2127
    %v2164 = vunpack.c.l.bf16 %v2128
    %v2165 = vunpack.c.h.bf16 %v2128
    %v2166 = vunpack.c.l.bf16 %v2129
    %v2167 = vunpack.c.h.bf16 %v2129
    %v2168 = vunpack.c.l.bf16 %v2130
    %v2169 = vunpack.c.h.bf16 %v2130
    %v2170 = vunpack.c.l.bf16 %v2131
    %v2171 = vunpack.c.h.bf16 %v2131
    %v2172 = vunpack.c.l.bf16 %v2132
    %v2173 = vunpack.c.h.bf16 %v2132
    %v2174 = vunpack.c.l.bf16 %v2133
    %v2175 = vunpack.c.h.bf16 %v2133
    %v2176 = vunpack.c.l.bf16 %v2134
    %v2177 = vunpack.c.h.bf16 %v2134
    %v2178 = vunpack.c.l.bf16 %v2135
    %v2179 = vunpack.c.h.bf16 %v2135
    %v2180 = vunpack.c.l.bf16 %v2136
    %v2181 = vunpack.c.h.bf16 %v2136
    %v2182 = vunpack.c.l.bf16 %v2137
    %v2183 = vunpack.c.h.bf16 %v2137
    %v2184 = vunpack.c.l.bf16 %v2138
    %v2185 = vunpack.c.h.bf16 %v2138
    %v2186 = vunpack.c.l.bf16 %v2139
    %v2187 = vunpack.c.h.bf16 %v2139
    %v2188 = vunpack.c.l.bf16 %v2140
    %v2189 = vunpack.c.h.bf16 %v2140
    %v2190 = vunpack.c.l.bf16 %v2141
    %v2191 = vunpack.c.h.bf16 %v2141
    %v2192 = vunpack.c.l.bf16 %v2142
    %v2193 = vunpack.c.h.bf16 %v2142
    %v2194 = vunpack.c.l.bf16 %v2143
    %v2195 = vunpack.c.h.bf16 %v2143
    %v2196 = vunpack.c.l.bf16 %v2144
    %v2197 = vunpack.c.h.bf16 %v2144
    %v2198 = vunpack.c.l.bf16 %v2145
    %v2199 = vunpack.c.h.bf16 %v2145
    %v2200 = vunpack.c.l.bf16 %v2146
    %v2201 = vunpack.c.h.bf16 %v2146
    %v2202 = vunpack.c.l.bf16 %v2147
    %v2203 = vunpack.c.h.bf16 %v2147
    %v2204 = vunpack.c.l.bf16 %v2148
    %v2205 = vunpack.c.h.bf16 %v2148
    %v2206 = vunpack.c.l.bf16 %v2149
    %v2207 = vunpack.c.h.bf16 %v2149
    %v2208 = vunpack.c.l.bf16 %v2150
    %v2209 = vunpack.c.h.bf16 %v2150
    %v2210 = vunpack.c.l.bf16 %v2151
    %v2211 = vunpack.c.h.bf16 %v2151
    %v2212 = vunpack.c.l.bf16 %v2152
    %v2213 = vunpack.c.h.bf16 %v2152
    %v2214 = vunpack.c.l.bf16 %v2153
    %v2215 = vunpack.c.h.bf16 %v2153
    %v2216 = vunpack.c.l.bf16 %v2154
    %v2217 = vunpack.c.h.bf16 %v2154
    %v2218 = vunpack.c.l.bf16 %v2155
    %v2219 = vunpack.c.h.bf16 %v2155
    %v2220 = vmax.f32 %v2156, 0.0
    %v2221 = vmax.f32 %v2157, 0.0
    %v2222 = vmax.f32 %v2158, 0.0
    %v2223 = vmax.f32 %v2159, 0.0
    %v2224 = vmax.f32 %v2160, 0.0
    %v2225 = vmax.f32 %v2161, 0.0
    %v2226 = vmax.f32 %v2162, 0.0
    %v2227 = vmax.f32 %v2163, 0.0
    %v2228 = vmax.f32 %v2164, 0.0
    %v2229 = vmax.f32 %v2165, 0.0
    %v2230 = vmax.f32 %v2166, 0.0
    %v2231 = vmax.f32 %v2167, 0.0
    %v2232 = vmax.f32 %v2168, 0.0
    %v2233 = vmax.f32 %v2169, 0.0
    %v2234 = vmax.f32 %v2170, 0.0
    %v2235 = vmax.f32 %v2171, 0.0
    %v2236 = vmax.f32 %v2172, 0.0
    %v2237 = vmax.f32 %v2173, 0.0
    %v2238 = vmax.f32 %v2174, 0.0
    %v2239 = vmax.f32 %v2175, 0.0
    %v2240 = vmax.f32 %v2176, 0.0
    %v2241 = vmax.f32 %v2177, 0.0
    %v2242 = vmax.f32 %v2178, 0.0
    %v2243 = vmax.f32 %v2179, 0.0
    %v2244 = vmax.f32 %v2180, 0.0
    %v2245 = vmax.f32 %v2181, 0.0
    %v2246 = vmax.f32 %v2182, 0.0
    %v2247 = vmax.f32 %v2183, 0.0
    %v2248 = vmax.f32 %v2184, 0.0
    %v2249 = vmax.f32 %v2185, 0.0
    %v2250 = vmax.f32 %v2186, 0.0
    %v2251 = vmax.f32 %v2187, 0.0
    %v2252 = vmax.f32 %v2188, 0.0
    %v2253 = vmax.f32 %v2189, 0.0
    %v2254 = vmax.f32 %v2190, 0.0
    %v2255 = vmax.f32 %v2191, 0.0
    %v2256 = vmax.f32 %v2192, 0.0
    %v2257 = vmax.f32 %v2193, 0.0
    %v2258 = vmax.f32 %v2194, 0.0
    %v2259 = vmax.f32 %v2195, 0.0
    %v2260 = vmax.f32 %v2196, 0.0
    %v2261 = vmax.f32 %v2197, 0.0
    %v2262 = vmax.f32 %v2198, 0.0
    %v2263 = vmax.f32 %v2199, 0.0
    %v2264 = vmax.f32 %v2200, 0.0
    %v2265 = vmax.f32 %v2201, 0.0
    %v2266 = vmax.f32 %v2202, 0.0
    %v2267 = vmax.f32 %v2203, 0.0
    %v2268 = vmax.f32 %v2204, 0.0
    %v2269 = vmax.f32 %v2205, 0.0
    %v2270 = vmax.f32 %v2206, 0.0
    %v2271 = vmax.f32 %v2207, 0.0
    %v2272 = vmax.f32 %v2208, 0.0
    %v2273 = vmax.f32 %v2209, 0.0
    %v2274 = vmax.f32 %v2210, 0.0
    %v2275 = vmax.f32 %v2211, 0.0
    %v2276 = vmax.f32 %v2212, 0.0
    %v2277 = vmax.f32 %v2213, 0.0
    %v2278 = vmax.f32 %v2214, 0.0
    %v2279 = vmax.f32 %v2215, 0.0
    %v2280 = vmax.f32 %v2216, 0.0
    %v2281 = vmax.f32 %v2217, 0.0
    %v2282 = vmax.f32 %v2218, 0.0
    %v2283 = vmax.f32 %v2219, 0.0
    %v2284 = vpack.c.bf16 %v2224, %v2220
    %v2285 = vpack.c.bf16 %v2225, %v2221
    %v2286 = vpack.c.bf16 %v2226, %v2222
    %v2287 = vpack.c.bf16 %v2227, %v2223
    %v2288 = vpack.c.bf16 %v2232, %v2228
    %v2289 = vpack.c.bf16 %v2233, %v2229
    %v2290 = vpack.c.bf16 %v2234, %v2230
    %v2291 = vpack.c.bf16 %v2235, %v2231
    %v2292 = vpack.c.bf16 %v2240, %v2236
    %v2293 = vpack.c.bf16 %v2241, %v2237
    %v2294 = vpack.c.bf16 %v2242, %v2238
    %v2295 = vpack.c.bf16 %v2243, %v2239
    %v2296 = vpack.c.bf16 %v2248, %v2244
    %v2297 = vpack.c.bf16 %v2249, %v2245
    %v2298 = vpack.c.bf16 %v2250, %v2246
    %v2299 = vpack.c.bf16 %v2251, %v2247
    %v2300 = vpack.c.bf16 %v2256, %v2252
    %v2301 = vpack.c.bf16 %v2257, %v2253
    %v2302 = vpack.c.bf16 %v2258, %v2254
    %v2303 = vpack.c.bf16 %v2259, %v2255
    %v2304 = vpack.c.bf16 %v2264, %v2260
    %v2305 = vpack.c.bf16 %v2265, %v2261
    %v2306 = vpack.c.bf16 %v2266, %v2262
    %v2307 = vpack.c.bf16 %v2267, %v2263
    %v2308 = vpack.c.bf16 %v2272, %v2268
    %v2309 = vpack.c.bf16 %v2273, %v2269
    %v2310 = vpack.c.bf16 %v2274, %v2270
    %v2311 = vpack.c.bf16 %v2275, %v2271
    %v2312 = vpack.c.bf16 %v2280, %v2276
    %v2313 = vpack.c.bf16 %v2281, %v2277
    %v2314 = vpack.c.bf16 %v2282, %v2278
    %v2315 = vpack.c.bf16 %v2283, %v2279
    %v2316 = vld [vmem:[#allocation5] sm:$0xff]
    %v2317 = vld [vmem:[#allocation5 + $0x8] sm:$0xff]
    %v2318 = vld [vmem:[#allocation5 + $0x10] sm:$0xff]
    %v2319 = vld [vmem:[#allocation5 + $0x18] sm:$0xff]
    %v2320 = vld [vmem:[#allocation5 + $0x20] sm:$0xff]
    %v2321 = vld [vmem:[#allocation5 + $0x28] sm:$0xff]
    %v2322 = vld [vmem:[#allocation5 + $0x30] sm:$0xff]
    %v2323 = vld [vmem:[#allocation5 + $0x38] sm:$0xff]
    %v2324 = vld [vmem:[#allocation5 + $0x40] sm:$0xff]
    %v2325 = vld [vmem:[#allocation5 + $0x48] sm:$0xff]
    %v2326 = vld [vmem:[#allocation5 + $0x50] sm:$0xff]
    %v2327 = vld [vmem:[#allocation5 + $0x58] sm:$0xff]
    %v2328 = vld [vmem:[#allocation5 + $0x60] sm:$0xff]
    %v2329 = vld [vmem:[#allocation5 + $0x68] sm:$0xff]
    %v2330 = vld [vmem:[#allocation5 + $0x70] sm:$0xff]
    %v2331 = vld [vmem:[#allocation5 + $0x78] sm:$0xff]
    %v2332 = vld [vmem:[#allocation5 + $0x80] sm:$0xff]
    %v2333 = vld [vmem:[#allocation5 + $0x88] sm:$0xff]
    %v2334 = vld [vmem:[#allocation5 + $0x90] sm:$0xff]
    %v2335 = vld [vmem:[#allocation5 + $0x98] sm:$0xff]
    %v2336 = vld [vmem:[#allocation5 + $0xa0] sm:$0xff]
    %v2337 = vld [vmem:[#allocation5 + $0xa8] sm:$0xff]
    %v2338 = vld [vmem:[#allocation5 + $0xb0] sm:$0xff]
    %v2339 = vld [vmem:[#allocation5 + $0xb8] sm:$0xff]
    %v2340 = vld [vmem:[#allocation5 + $0xc0] sm:$0xff]
    %v2341 = vld [vmem:[#allocation5 + $0xc8] sm:$0xff]
    %v2342 = vld [vmem:[#allocation5 + $0xd0] sm:$0xff]
    %v2343 = vld [vmem:[#allocation5 + $0xd8] sm:$0xff]
    %v2344 = vld [vmem:[#allocation5 + $0xe0] sm:$0xff]
    %v2345 = vld [vmem:[#allocation5 + $0xe8] sm:$0xff]
    %v2346 = vld [vmem:[#allocation5 + $0xf0] sm:$0xff]
    %v2347 = vld [vmem:[#allocation5 + $0xf8] sm:$0xff]
    %v2348 = vld [vmem:[#allocation5 + $0x100] sm:$0xff]
    %v2349 = vld [vmem:[#allocation5 + $0x108] sm:$0xff]
    %v2350 = vld [vmem:[#allocation5 + $0x110] sm:$0xff]
    %v2351 = vld [vmem:[#allocation5 + $0x118] sm:$0xff]
    %v2352 = vld [vmem:[#allocation5 + $0x120] sm:$0xff]
    %v2353 = vld [vmem:[#allocation5 + $0x128] sm:$0xff]
    %v2354 = vld [vmem:[#allocation5 + $0x130] sm:$0xff]
    %v2355 = vld [vmem:[#allocation5 + $0x138] sm:$0xff]
    %v2356 = vld [vmem:[#allocation5 + $0x140] sm:$0xff]
    %v2357 = vld [vmem:[#allocation5 + $0x148] sm:$0xff]
    %v2358 = vld [vmem:[#allocation5 + $0x150] sm:$0xff]
    %v2359 = vld [vmem:[#allocation5 + $0x158] sm:$0xff]
    %v2360 = vld [vmem:[#allocation5 + $0x160] sm:$0xff]
    %v2361 = vld [vmem:[#allocation5 + $0x168] sm:$0xff]
    %v2362 = vld [vmem:[#allocation5 + $0x170] sm:$0xff]
    %v2363 = vld [vmem:[#allocation5 + $0x178] sm:$0xff]
    %v2364 = vld [vmem:[#allocation5 + $0x180] sm:$0xff]
    %v2365 = vld [vmem:[#allocation5 + $0x188] sm:$0xff]
    %v2366 = vld [vmem:[#allocation5 + $0x190] sm:$0xff]
    %v2367 = vld [vmem:[#allocation5 + $0x198] sm:$0xff]
    %v2368 = vld [vmem:[#allocation5 + $0x1a0] sm:$0xff]
    %v2369 = vld [vmem:[#allocation5 + $0x1a8] sm:$0xff]
    %v2370 = vld [vmem:[#allocation5 + $0x1b0] sm:$0xff]
    %v2371 = vld [vmem:[#allocation5 + $0x1b8] sm:$0xff]
    %v2372 = vld [vmem:[#allocation5 + $0x1c0] sm:$0xff]
    %v2373 = vld [vmem:[#allocation5 + $0x1c8] sm:$0xff]
    %v2374 = vld [vmem:[#allocation5 + $0x1d0] sm:$0xff]
    %v2375 = vld [vmem:[#allocation5 + $0x1d8] sm:$0xff]
    %v2376 = vld [vmem:[#allocation5 + $0x1e0] sm:$0xff]
    %v2377 = vld [vmem:[#allocation5 + $0x1e8] sm:$0xff]
    %v2378 = vld [vmem:[#allocation5 + $0x1f0] sm:$0xff]
    %v2379 = vld [vmem:[#allocation5 + $0x1f8] sm:$0xff]
    %v2380 = vld [vmem:[#allocation5 + $0x200] sm:$0xff]
    %v2381 = vld [vmem:[#allocation5 + $0x208] sm:$0xff]
    %v2382 = vld [vmem:[#allocation5 + $0x210] sm:$0xff]
    %v2383 = vld [vmem:[#allocation5 + $0x218] sm:$0xff]
    %v2384 = vld [vmem:[#allocation5 + $0x220] sm:$0xff]
    %v2385 = vld [vmem:[#allocation5 + $0x228] sm:$0xff]
    %v2386 = vld [vmem:[#allocation5 + $0x230] sm:$0xff]
    %v2387 = vld [vmem:[#allocation5 + $0x238] sm:$0xff]
    %v2388 = vld [vmem:[#allocation5 + $0x240] sm:$0xff]
    %v2389 = vld [vmem:[#allocation5 + $0x248] sm:$0xff]
    %v2390 = vld [vmem:[#allocation5 + $0x250] sm:$0xff]
    %v2391 = vld [vmem:[#allocation5 + $0x258] sm:$0xff]
    %v2392 = vld [vmem:[#allocation5 + $0x260] sm:$0xff]
    %v2393 = vld [vmem:[#allocation5 + $0x268] sm:$0xff]
    %v2394 = vld [vmem:[#allocation5 + $0x270] sm:$0xff]
    %v2395 = vld [vmem:[#allocation5 + $0x278] sm:$0xff]
    %v2396 = vld [vmem:[#allocation5 + $0x280] sm:$0xff]
    %v2397 = vld [vmem:[#allocation5 + $0x288] sm:$0xff]
    %v2398 = vld [vmem:[#allocation5 + $0x290] sm:$0xff]
    %v2399 = vld [vmem:[#allocation5 + $0x298] sm:$0xff]
    %v2400 = vld [vmem:[#allocation5 + $0x2a0] sm:$0xff]
    %v2401 = vld [vmem:[#allocation5 + $0x2a8] sm:$0xff]
    %v2402 = vld [vmem:[#allocation5 + $0x2b0] sm:$0xff]
    %v2403 = vld [vmem:[#allocation5 + $0x2b8] sm:$0xff]
    %v2404 = vld [vmem:[#allocation5 + $0x2c0] sm:$0xff]
    %v2405 = vld [vmem:[#allocation5 + $0x2c8] sm:$0xff]
    %v2406 = vld [vmem:[#allocation5 + $0x2d0] sm:$0xff]
    %v2407 = vld [vmem:[#allocation5 + $0x2d8] sm:$0xff]
    %v2408 = vld [vmem:[#allocation5 + $0x2e0] sm:$0xff]
    %v2409 = vld [vmem:[#allocation5 + $0x2e8] sm:$0xff]
    %v2410 = vld [vmem:[#allocation5 + $0x2f0] sm:$0xff]
    %v2411 = vld [vmem:[#allocation5 + $0x2f8] sm:$0xff]
    %v2412 = vld [vmem:[#allocation5 + $0x300] sm:$0xff]
    %v2413 = vld [vmem:[#allocation5 + $0x308] sm:$0xff]
    %v2414 = vld [vmem:[#allocation5 + $0x310] sm:$0xff]
    %v2415 = vld [vmem:[#allocation5 + $0x318] sm:$0xff]
    %v2416 = vld [vmem:[#allocation5 + $0x320] sm:$0xff]
    %v2417 = vld [vmem:[#allocation5 + $0x328] sm:$0xff]
    %v2418 = vld [vmem:[#allocation5 + $0x330] sm:$0xff]
    %v2419 = vld [vmem:[#allocation5 + $0x338] sm:$0xff]
    %v2420 = vld [vmem:[#allocation5 + $0x340] sm:$0xff]
    %v2421 = vld [vmem:[#allocation5 + $0x348] sm:$0xff]
    %v2422 = vld [vmem:[#allocation5 + $0x350] sm:$0xff]
    %v2423 = vld [vmem:[#allocation5 + $0x358] sm:$0xff]
    %v2424 = vld [vmem:[#allocation5 + $0x360] sm:$0xff]
    %v2425 = vld [vmem:[#allocation5 + $0x368] sm:$0xff]
    %v2426 = vld [vmem:[#allocation5 + $0x370] sm:$0xff]
    %v2427 = vld [vmem:[#allocation5 + $0x378] sm:$0xff]
    %v2428 = vld [vmem:[#allocation5 + $0x380] sm:$0xff]
    %v2429 = vld [vmem:[#allocation5 + $0x388] sm:$0xff]
    %v2430 = vld [vmem:[#allocation5 + $0x390] sm:$0xff]
    %v2431 = vld [vmem:[#allocation5 + $0x398] sm:$0xff]
    %v2432 = vld [vmem:[#allocation5 + $0x3a0] sm:$0xff]
    %v2433 = vld [vmem:[#allocation5 + $0x3a8] sm:$0xff]
    %v2434 = vld [vmem:[#allocation5 + $0x3b0] sm:$0xff]
    %v2435 = vld [vmem:[#allocation5 + $0x3b8] sm:$0xff]
    %v2436 = vld [vmem:[#allocation5 + $0x3c0] sm:$0xff]
    %v2437 = vld [vmem:[#allocation5 + $0x3c8] sm:$0xff]
    %v2438 = vld [vmem:[#allocation5 + $0x3d0] sm:$0xff]
    %v2439 = vld [vmem:[#allocation5 + $0x3d8] sm:$0xff]
    %v2440 = vld [vmem:[#allocation5 + $0x3e0] sm:$0xff]
    %v2441 = vld [vmem:[#allocation5 + $0x3e8] sm:$0xff]
    %v2442 = vld [vmem:[#allocation5 + $0x3f0] sm:$0xff]
    %v2443 = vld [vmem:[#allocation5 + $0x3f8] sm:$0xff]
    %v2444 = vld [vmem:[%s6] sm:$0xf]
    %v2446 = vperm.slane %v2444, 0
    %v2447 = vperm.slane %v2444, 1
    %v2448 = vperm.slane %v2444, 2
    %v2449 = vperm.slane %v2444, 3
    %v2582 = vunpack.c.l.b16 %v2316
    %v2583 = vunpack.c.h.b16 %v2316
    %v2584 = vunpack.c.l.b16 %v2317
    %v2585 = vunpack.c.h.b16 %v2317
    %v2586 = vunpack.c.l.b16 %v2318
    %v2587 = vunpack.c.h.b16 %v2318
    %v2588 = vunpack.c.l.b16 %v2319
    %v2589 = vunpack.c.h.b16 %v2319
    %v2590 = vunpack.c.l.b16 %v2320
    %v2591 = vunpack.c.h.b16 %v2320
    %v2592 = vunpack.c.l.b16 %v2321
    %v2593 = vunpack.c.h.b16 %v2321
    %v2594 = vunpack.c.l.b16 %v2322
    %v2595 = vunpack.c.h.b16 %v2322
    %v2596 = vunpack.c.l.b16 %v2323
    %v2597 = vunpack.c.h.b16 %v2323
    %v2598 = vunpack.c.l.b16 %v2324
    %v2599 = vunpack.c.h.b16 %v2324
    %v2600 = vunpack.c.l.b16 %v2325
    %v2601 = vunpack.c.h.b16 %v2325
    %v2602 = vunpack.c.l.b16 %v2326
    %v2603 = vunpack.c.h.b16 %v2326
    %v2604 = vunpack.c.l.b16 %v2327
    %v2605 = vunpack.c.h.b16 %v2327
    %v2606 = vunpack.c.l.b16 %v2328
    %v2607 = vunpack.c.h.b16 %v2328
    %v2608 = vunpack.c.l.b16 %v2329
    %v2609 = vunpack.c.h.b16 %v2329
    %v2610 = vunpack.c.l.b16 %v2330
    %v2611 = vunpack.c.h.b16 %v2330
    %v2612 = vunpack.c.l.b16 %v2331
    %v2613 = vunpack.c.h.b16 %v2331
    %v2614 = vunpack.c.l.b16 %v2332
    %v2615 = vunpack.c.h.b16 %v2332
    %v2616 = vunpack.c.l.b16 %v2333
    %v2617 = vunpack.c.h.b16 %v2333
    %v2618 = vunpack.c.l.b16 %v2334
    %v2619 = vunpack.c.h.b16 %v2334
    %v2620 = vunpack.c.l.b16 %v2335
    %v2621 = vunpack.c.h.b16 %v2335
    %v2622 = vunpack.c.l.b16 %v2336
    %v2623 = vunpack.c.h.b16 %v2336
    %v2624 = vunpack.c.l.b16 %v2337
    %v2625 = vunpack.c.h.b16 %v2337
    %v2626 = vunpack.c.l.b16 %v2338
    %v2627 = vunpack.c.h.b16 %v2338
    %v2628 = vunpack.c.l.b16 %v2339
    %v2629 = vunpack.c.h.b16 %v2339
    %v2630 = vunpack.c.l.b16 %v2340
    %v2631 = vunpack.c.h.b16 %v2340
    %v2632 = vunpack.c.l.b16 %v2341
    %v2633 = vunpack.c.h.b16 %v2341
    %v2634 = vunpack.c.l.b16 %v2342
    %v2635 = vunpack.c.h.b16 %v2342
    %v2636 = vunpack.c.l.b16 %v2343
    %v2637 = vunpack.c.h.b16 %v2343
    %v2638 = vunpack.c.l.b16 %v2344
    %v2639 = vunpack.c.h.b16 %v2344
    %v2640 = vunpack.c.l.b16 %v2345
    %v2641 = vunpack.c.h.b16 %v2345
    %v2642 = vunpack.c.l.b16 %v2346
    %v2643 = vunpack.c.h.b16 %v2346
    %v2644 = vunpack.c.l.b16 %v2347
    %v2645 = vunpack.c.h.b16 %v2347
    %v2646 = vunpack.c.l.b16 %v2348
    %v2647 = vunpack.c.h.b16 %v2348
    %v2648 = vunpack.c.l.b16 %v2349
    %v2649 = vunpack.c.h.b16 %v2349
    %v2650 = vunpack.c.l.b16 %v2350
    %v2651 = vunpack.c.h.b16 %v2350
    %v2652 = vunpack.c.l.b16 %v2351
    %v2653 = vunpack.c.h.b16 %v2351
    %v2654 = vunpack.c.l.b16 %v2352
    %v2655 = vunpack.c.h.b16 %v2352
    %v2656 = vunpack.c.l.b16 %v2353
    %v2657 = vunpack.c.h.b16 %v2353
    %v2658 = vunpack.c.l.b16 %v2354
    %v2659 = vunpack.c.h.b16 %v2354
    %v2660 = vunpack.c.l.b16 %v2355
    %v2661 = vunpack.c.h.b16 %v2355
    %v2662 = vunpack.c.l.b16 %v2356
    %v2663 = vunpack.c.h.b16 %v2356
    %v2664 = vunpack.c.l.b16 %v2357
    %v2665 = vunpack.c.h.b16 %v2357
    %v2666 = vunpack.c.l.b16 %v2358
    %v2667 = vunpack.c.h.b16 %v2358
    %v2668 = vunpack.c.l.b16 %v2359
    %v2669 = vunpack.c.h.b16 %v2359
    %v2670 = vunpack.c.l.b16 %v2360
    %v2671 = vunpack.c.h.b16 %v2360
    %v2672 = vunpack.c.l.b16 %v2361
    %v2673 = vunpack.c.h.b16 %v2361
    %v2674 = vunpack.c.l.b16 %v2362
    %v2675 = vunpack.c.h.b16 %v2362
    %v2676 = vunpack.c.l.b16 %v2363
    %v2677 = vunpack.c.h.b16 %v2363
    %v2678 = vunpack.c.l.b16 %v2364
    %v2679 = vunpack.c.h.b16 %v2364
    %v2680 = vunpack.c.l.b16 %v2365
    %v2681 = vunpack.c.h.b16 %v2365
    %v2682 = vunpack.c.l.b16 %v2366
    %v2683 = vunpack.c.h.b16 %v2366
    %v2684 = vunpack.c.l.b16 %v2367
    %v2685 = vunpack.c.h.b16 %v2367
    %v2686 = vunpack.c.l.b16 %v2368
    %v2687 = vunpack.c.h.b16 %v2368
    %v2688 = vunpack.c.l.b16 %v2369
    %v2689 = vunpack.c.h.b16 %v2369
    %v2690 = vunpack.c.l.b16 %v2370
    %v2691 = vunpack.c.h.b16 %v2370
    %v2692 = vunpack.c.l.b16 %v2371
    %v2693 = vunpack.c.h.b16 %v2371
    %v2694 = vunpack.c.l.b16 %v2372
    %v2695 = vunpack.c.h.b16 %v2372
    %v2696 = vunpack.c.l.b16 %v2373
    %v2697 = vunpack.c.h.b16 %v2373
    %v2698 = vunpack.c.l.b16 %v2374
    %v2699 = vunpack.c.h.b16 %v2374
    %v2700 = vunpack.c.l.b16 %v2375
    %v2701 = vunpack.c.h.b16 %v2375
    %v2702 = vunpack.c.l.b16 %v2376
    %v2703 = vunpack.c.h.b16 %v2376
    %v2704 = vunpack.c.l.b16 %v2377
    %v2705 = vunpack.c.h.b16 %v2377
    %v2706 = vunpack.c.l.b16 %v2378
    %v2707 = vunpack.c.h.b16 %v2378
    %v2708 = vunpack.c.l.b16 %v2379
    %v2709 = vunpack.c.h.b16 %v2379
    %v2710 = vunpack.c.l.b16 %v2380
    %v2711 = vunpack.c.h.b16 %v2380
    %v2712 = vunpack.c.l.b16 %v2381
    %v2713 = vunpack.c.h.b16 %v2381
    %v2714 = vunpack.c.l.b16 %v2382
    %v2715 = vunpack.c.h.b16 %v2382
    %v2716 = vunpack.c.l.b16 %v2383
    %v2717 = vunpack.c.h.b16 %v2383
    %v2718 = vunpack.c.l.b16 %v2384
    %v2719 = vunpack.c.h.b16 %v2384
    %v2720 = vunpack.c.l.b16 %v2385
    %v2721 = vunpack.c.h.b16 %v2385
    %v2722 = vunpack.c.l.b16 %v2386
    %v2723 = vunpack.c.h.b16 %v2386
    %v2724 = vunpack.c.l.b16 %v2387
    %v2725 = vunpack.c.h.b16 %v2387
    %v2726 = vunpack.c.l.b16 %v2388
    %v2727 = vunpack.c.h.b16 %v2388
    %v2728 = vunpack.c.l.b16 %v2389
    %v2729 = vunpack.c.h.b16 %v2389
    %v2730 = vunpack.c.l.b16 %v2390
    %v2731 = vunpack.c.h.b16 %v2390
    %v2732 = vunpack.c.l.b16 %v2391
    %v2733 = vunpack.c.h.b16 %v2391
    %v2734 = vunpack.c.l.b16 %v2392
    %v2735 = vunpack.c.h.b16 %v2392
    %v2736 = vunpack.c.l.b16 %v2393
    %v2737 = vunpack.c.h.b16 %v2393
    %v2738 = vunpack.c.l.b16 %v2394
    %v2739 = vunpack.c.h.b16 %v2394
    %v2740 = vunpack.c.l.b16 %v2395
    %v2741 = vunpack.c.h.b16 %v2395
    %v2742 = vunpack.c.l.b16 %v2396
    %v2743 = vunpack.c.h.b16 %v2396
    %v2744 = vunpack.c.l.b16 %v2397
    %v2745 = vunpack.c.h.b16 %v2397
    %v2746 = vunpack.c.l.b16 %v2398
    %v2747 = vunpack.c.h.b16 %v2398
    %v2748 = vunpack.c.l.b16 %v2399
    %v2749 = vunpack.c.h.b16 %v2399
    %v2750 = vunpack.c.l.b16 %v2400
    %v2751 = vunpack.c.h.b16 %v2400
    %v2752 = vunpack.c.l.b16 %v2401
    %v2753 = vunpack.c.h.b16 %v2401
    %v2754 = vunpack.c.l.b16 %v2402
    %v2755 = vunpack.c.h.b16 %v2402
    %v2756 = vunpack.c.l.b16 %v2403
    %v2757 = vunpack.c.h.b16 %v2403
    %v2758 = vunpack.c.l.b16 %v2404
    %v2759 = vunpack.c.h.b16 %v2404
    %v2760 = vunpack.c.l.b16 %v2405
    %v2761 = vunpack.c.h.b16 %v2405
    %v2762 = vunpack.c.l.b16 %v2406
    %v2763 = vunpack.c.h.b16 %v2406
    %v2764 = vunpack.c.l.b16 %v2407
    %v2765 = vunpack.c.h.b16 %v2407
    %v2766 = vunpack.c.l.b16 %v2408
    %v2767 = vunpack.c.h.b16 %v2408
    %v2768 = vunpack.c.l.b16 %v2409
    %v2769 = vunpack.c.h.b16 %v2409
    %v2770 = vunpack.c.l.b16 %v2410
    %v2771 = vunpack.c.h.b16 %v2410
    %v2772 = vunpack.c.l.b16 %v2411
    %v2773 = vunpack.c.h.b16 %v2411
    %v2774 = vunpack.c.l.b16 %v2412
    %v2775 = vunpack.c.h.b16 %v2412
    %v2776 = vunpack.c.l.b16 %v2413
    %v2777 = vunpack.c.h.b16 %v2413
    %v2778 = vunpack.c.l.b16 %v2414
    %v2779 = vunpack.c.h.b16 %v2414
    %v2780 = vunpack.c.l.b16 %v2415
    %v2781 = vunpack.c.h.b16 %v2415
    %v2782 = vunpack.c.l.b16 %v2416
    %v2783 = vunpack.c.h.b16 %v2416
    %v2784 = vunpack.c.l.b16 %v2417
    %v2785 = vunpack.c.h.b16 %v2417
    %v2786 = vunpack.c.l.b16 %v2418
    %v2787 = vunpack.c.h.b16 %v2418
    %v2788 = vunpack.c.l.b16 %v2419
    %v2789 = vunpack.c.h.b16 %v2419
    %v2790 = vunpack.c.l.b16 %v2420
    %v2791 = vunpack.c.h.b16 %v2420
    %v2792 = vunpack.c.l.b16 %v2421
    %v2793 = vunpack.c.h.b16 %v2421
    %v2794 = vunpack.c.l.b16 %v2422
    %v2795 = vunpack.c.h.b16 %v2422
    %v2796 = vunpack.c.l.b16 %v2423
    %v2797 = vunpack.c.h.b16 %v2423
    %v2798 = vunpack.c.l.b16 %v2424
    %v2799 = vunpack.c.h.b16 %v2424
    %v2800 = vunpack.c.l.b16 %v2425
    %v2801 = vunpack.c.h.b16 %v2425
    %v2802 = vunpack.c.l.b16 %v2426
    %v2803 = vunpack.c.h.b16 %v2426
    %v2804 = vunpack.c.l.b16 %v2427
    %v2805 = vunpack.c.h.b16 %v2427
    %v2806 = vunpack.c.l.b16 %v2428
    %v2807 = vunpack.c.h.b16 %v2428
    %v2808 = vunpack.c.l.b16 %v2429
    %v2809 = vunpack.c.h.b16 %v2429
    %v2810 = vunpack.c.l.b16 %v2430
    %v2811 = vunpack.c.h.b16 %v2430
    %v2812 = vunpack.c.l.b16 %v2431
    %v2813 = vunpack.c.h.b16 %v2431
    %v2814 = vunpack.c.l.b16 %v2432
    %v2815 = vunpack.c.h.b16 %v2432
    %v2816 = vunpack.c.l.b16 %v2433
    %v2817 = vunpack.c.h.b16 %v2433
    %v2818 = vunpack.c.l.b16 %v2434
    %v2819 = vunpack.c.h.b16 %v2434
    %v2820 = vunpack.c.l.b16 %v2435
    %v2821 = vunpack.c.h.b16 %v2435
    %v2822 = vunpack.c.l.b16 %v2436
    %v2823 = vunpack.c.h.b16 %v2436
    %v2824 = vunpack.c.l.b16 %v2437
    %v2825 = vunpack.c.h.b16 %v2437
    %v2826 = vunpack.c.l.b16 %v2438
    %v2827 = vunpack.c.h.b16 %v2438
    %v2828 = vunpack.c.l.b16 %v2439
    %v2829 = vunpack.c.h.b16 %v2439
    %v2830 = vunpack.c.l.b16 %v2440
    %v2831 = vunpack.c.h.b16 %v2440
    %v2832 = vunpack.c.l.b16 %v2441
    %v2833 = vunpack.c.h.b16 %v2441
    %v2834 = vunpack.c.l.b16 %v2442
    %v2835 = vunpack.c.h.b16 %v2442
    %v2836 = vunpack.c.l.b16 %v2443
    %v2837 = vunpack.c.h.b16 %v2443
    %v2838 = vpack.c.b16 %v2586, %v2582
    %v2839 = vpack.c.b16 %v2587, %v2583
    %v2840 = vpack.c.b16 %v2588, %v2584
    %v2841 = vpack.c.b16 %v2589, %v2585
    %v2842 = vpack.c.b16 %v2594, %v2590
    %v2843 = vpack.c.b16 %v2595, %v2591
    %v2844 = vpack.c.b16 %v2596, %v2592
    %v2845 = vpack.c.b16 %v2597, %v2593
    %v2846 = vpack.c.b16 %v2602, %v2598
    %v2847 = vpack.c.b16 %v2603, %v2599
    %v2848 = vpack.c.b16 %v2604, %v2600
    %v2849 = vpack.c.b16 %v2605, %v2601
    %v2850 = vpack.c.b16 %v2610, %v2606
    %v2851 = vpack.c.b16 %v2611, %v2607
    %v2852 = vpack.c.b16 %v2612, %v2608
    %v2853 = vpack.c.b16 %v2613, %v2609
    %v2854 = vpack.c.b16 %v2618, %v2614
    %v2855 = vpack.c.b16 %v2619, %v2615
    %v2856 = vpack.c.b16 %v2620, %v2616
    %v2857 = vpack.c.b16 %v2621, %v2617
    %v2858 = vpack.c.b16 %v2626, %v2622
    %v2859 = vpack.c.b16 %v2627, %v2623
    %v2860 = vpack.c.b16 %v2628, %v2624
    %v2861 = vpack.c.b16 %v2629, %v2625
    %v2862 = vpack.c.b16 %v2634, %v2630
    %v2863 = vpack.c.b16 %v2635, %v2631
    %v2864 = vpack.c.b16 %v2636, %v2632
    %v2865 = vpack.c.b16 %v2637, %v2633
    %v2866 = vpack.c.b16 %v2642, %v2638
    %v2867 = vpack.c.b16 %v2643, %v2639
    %v2868 = vpack.c.b16 %v2644, %v2640
    %v2869 = vpack.c.b16 %v2645, %v2641
    %v2870 = vpack.c.b16 %v2650, %v2646
    %v2871 = vpack.c.b16 %v2651, %v2647
    %v2872 = vpack.c.b16 %v2652, %v2648
    %v2873 = vpack.c.b16 %v2653, %v2649
    %v2874 = vpack.c.b16 %v2658, %v2654
    %v2875 = vpack.c.b16 %v2659, %v2655
    %v2876 = vpack.c.b16 %v2660, %v2656
    %v2877 = vpack.c.b16 %v2661, %v2657
    %v2878 = vpack.c.b16 %v2666, %v2662
    %v2879 = vpack.c.b16 %v2667, %v2663
    %v2880 = vpack.c.b16 %v2668, %v2664
    %v2881 = vpack.c.b16 %v2669, %v2665
    %v2882 = vpack.c.b16 %v2674, %v2670
    %v2883 = vpack.c.b16 %v2675, %v2671
    %v2884 = vpack.c.b16 %v2676, %v2672
    %v2885 = vpack.c.b16 %v2677, %v2673
    %v2886 = vpack.c.b16 %v2682, %v2678
    %v2887 = vpack.c.b16 %v2683, %v2679
    %v2888 = vpack.c.b16 %v2684, %v2680
    %v2889 = vpack.c.b16 %v2685, %v2681
    %v2890 = vpack.c.b16 %v2690, %v2686
    %v2891 = vpack.c.b16 %v2691, %v2687
    %v2892 = vpack.c.b16 %v2692, %v2688
    %v2893 = vpack.c.b16 %v2693, %v2689
    %v2894 = vpack.c.b16 %v2698, %v2694
    %v2895 = vpack.c.b16 %v2699, %v2695
    %v2896 = vpack.c.b16 %v2700, %v2696
    %v2897 = vpack.c.b16 %v2701, %v2697
    %v2898 = vpack.c.b16 %v2706, %v2702
    %v2899 = vpack.c.b16 %v2707, %v2703
    %v2900 = vpack.c.b16 %v2708, %v2704
    %v2901 = vpack.c.b16 %v2709, %v2705
    %v2902 = vpack.c.b16 %v2714, %v2710
    %v2903 = vpack.c.b16 %v2715, %v2711
    %v2904 = vpack.c.b16 %v2716, %v2712
    %v2905 = vpack.c.b16 %v2717, %v2713
    %v2906 = vpack.c.b16 %v2722, %v2718
    %v2907 = vpack.c.b16 %v2723, %v2719
    %v2908 = vpack.c.b16 %v2724, %v2720
    %v2909 = vpack.c.b16 %v2725, %v2721
    %v2910 = vpack.c.b16 %v2730, %v2726
    %v2911 = vpack.c.b16 %v2731, %v2727
    %v2912 = vpack.c.b16 %v2732, %v2728
    %v2913 = vpack.c.b16 %v2733, %v2729
    %v2914 = vpack.c.b16 %v2738, %v2734
    %v2915 = vpack.c.b16 %v2739, %v2735
    %v2916 = vpack.c.b16 %v2740, %v2736
    %v2917 = vpack.c.b16 %v2741, %v2737
    %v2918 = vpack.c.b16 %v2746, %v2742
    %v2919 = vpack.c.b16 %v2747, %v2743
    %v2920 = vpack.c.b16 %v2748, %v2744
    %v2921 = vpack.c.b16 %v2749, %v2745
    %v2922 = vpack.c.b16 %v2754, %v2750
    %v2923 = vpack.c.b16 %v2755, %v2751
    %v2924 = vpack.c.b16 %v2756, %v2752
    %v2925 = vpack.c.b16 %v2757, %v2753
    %v2926 = vpack.c.b16 %v2762, %v2758
    %v2927 = vpack.c.b16 %v2763, %v2759
    %v2928 = vpack.c.b16 %v2764, %v2760
    %v2929 = vpack.c.b16 %v2765, %v2761
    %v2930 = vpack.c.b16 %v2770, %v2766
    %v2931 = vpack.c.b16 %v2771, %v2767
    %v2932 = vpack.c.b16 %v2772, %v2768
    %v2933 = vpack.c.b16 %v2773, %v2769
    %v2934 = vpack.c.b16 %v2778, %v2774
    %v2935 = vpack.c.b16 %v2779, %v2775
    %v2936 = vpack.c.b16 %v2780, %v2776
    %v2937 = vpack.c.b16 %v2781, %v2777
    %v2938 = vpack.c.b16 %v2786, %v2782
    %v2939 = vpack.c.b16 %v2787, %v2783
    %v2940 = vpack.c.b16 %v2788, %v2784
    %v2941 = vpack.c.b16 %v2789, %v2785
    %v2942 = vpack.c.b16 %v2794, %v2790
    %v2943 = vpack.c.b16 %v2795, %v2791
    %v2944 = vpack.c.b16 %v2796, %v2792
    %v2945 = vpack.c.b16 %v2797, %v2793
    %v2946 = vpack.c.b16 %v2802, %v2798
    %v2947 = vpack.c.b16 %v2803, %v2799
    %v2948 = vpack.c.b16 %v2804, %v2800
    %v2949 = vpack.c.b16 %v2805, %v2801
    %v2950 = vpack.c.b16 %v2810, %v2806
    %v2951 = vpack.c.b16 %v2811, %v2807
    %v2952 = vpack.c.b16 %v2812, %v2808
    %v2953 = vpack.c.b16 %v2813, %v2809
    %v2954 = vpack.c.b16 %v2818, %v2814
    %v2955 = vpack.c.b16 %v2819, %v2815
    %v2956 = vpack.c.b16 %v2820, %v2816
    %v2957 = vpack.c.b16 %v2821, %v2817
    %v2958 = vpack.c.b16 %v2826, %v2822
    %v2959 = vpack.c.b16 %v2827, %v2823
    %v2960 = vpack.c.b16 %v2828, %v2824
    %v2961 = vpack.c.b16 %v2829, %v2825
    %v2962 = vpack.c.b16 %v2834, %v2830
    %v2963 = vpack.c.b16 %v2835, %v2831
    %v2964 = vpack.c.b16 %v2836, %v2832
    %v2965 = vpack.c.b16 %v2837, %v2833
    %3094 = vmatpush.bf16.msra.mxu0 %v2866
    %3095 = vmatpush.bf16.msra.mxu0 %v2862
    %3096 = vmatpush.bf16.msra.mxu0 %v2858
    %3097 = vmatpush.bf16.msra.mxu0 %v2854
    %3098 = vmatpush.bf16.msra.mxu0 %v2850
    %3099 = vmatpush.bf16.msra.mxu0 %v2846
    %3100 = vmatpush.bf16.msra.mxu0 %v2842
    %3101 = vmatpush.bf16.msra.mxu0 %v2838
    %3102 = vmatmul.bf16.gmra.mxu0 %v2284
    %v3103 = vpop.f32.mrf.mxu0
    %v3104 = vadd.f32 %v2446, %v3103
    %v3105 = vpop.f32.mrf.mxu0
    %v3106 = vadd.f32 %v2446, %v3105
    %3107 = vmatmul.bf16.gmra.mxu0 %v2288
    %v3108 = vpop.f32.mrf.mxu0
    %v3109 = vadd.f32 %v2446, %v3108
    %v3110 = vpop.f32.mrf.mxu0
    %v3111 = vadd.f32 %v2446, %v3110
    %3112 = vmatmul.bf16.gmra.mxu0 %v2292
    %v3113 = vpop.f32.mrf.mxu0
    %v3114 = vadd.f32 %v2446, %v3113
    %v3115 = vpop.f32.mrf.mxu0
    %v3116 = vadd.f32 %v2446, %v3115
    %3117 = vmatmul.bf16.gmra.mxu0 %v2296
    %v3118 = vpop.f32.mrf.mxu0
    %v3119 = vadd.f32 %v2446, %v3118
    %v3120 = vpop.f32.mrf.mxu0
    %v3121 = vadd.f32 %v2446, %v3120
    %3122 = vmatmul.bf16.gmra.mxu0 %v2300
    %v3123 = vpop.f32.mrf.mxu0
    %v3124 = vadd.f32 %v2446, %v3123
    %v3125 = vpop.f32.mrf.mxu0
    %v3126 = vadd.f32 %v2446, %v3125
    %3127 = vmatmul.bf16.gmra.mxu0 %v2304
    %v3128 = vpop.f32.mrf.mxu0
    %v3129 = vadd.f32 %v2446, %v3128
    %v3130 = vpop.f32.mrf.mxu0
    %v3131 = vadd.f32 %v2446, %v3130
    %3132 = vmatmul.bf16.gmra.mxu0 %v2308
    %v3133 = vpop.f32.mrf.mxu0
    %v3134 = vadd.f32 %v2446, %v3133
    %v3135 = vpop.f32.mrf.mxu0
    %v3136 = vadd.f32 %v2446, %v3135
    %3137 = vmatmul.bf16.gmra.mxu0 %v2312
    %v3138 = vpop.f32.mrf.mxu0
    %v3139 = vadd.f32 %v2446, %v3138
    %v3140 = vpop.f32.mrf.mxu0
    %v3141 = vadd.f32 %v2446, %v3140
    %3142 = vdwg.mxu0
    %3143 = vmatpush.bf16.msra.mxu0 %v2898
    %3144 = vmatpush.bf16.msra.mxu0 %v2894
    %3145 = vmatpush.bf16.msra.mxu0 %v2890
    %3146 = vmatpush.bf16.msra.mxu0 %v2886
    %3147 = vmatpush.bf16.msra.mxu0 %v2882
    %3148 = vmatpush.bf16.msra.mxu0 %v2878
    %3149 = vmatpush.bf16.msra.mxu0 %v2874
    %3150 = vmatpush.bf16.msra.mxu0 %v2870
    %3151 = vmatmul.bf16.gmra.mxu0 %v2285
    %v3152 = vpop.f32.mrf.mxu0
    %v3153 = vadd.f32 %v3104, %v3152
    %v3154 = vpop.f32.mrf.mxu0
    %v3155 = vadd.f32 %v3106, %v3154
    %3156 = vmatmul.bf16.gmra.mxu0 %v2289
    %v3157 = vpop.f32.mrf.mxu0
    %v3158 = vadd.f32 %v3109, %v3157
    %v3159 = vpop.f32.mrf.mxu0
    %v3160 = vadd.f32 %v3111, %v3159
    %3161 = vmatmul.bf16.gmra.mxu0 %v2293
    %v3162 = vpop.f32.mrf.mxu0
    %v3163 = vadd.f32 %v3114, %v3162
    %v3164 = vpop.f32.mrf.mxu0
    %v3165 = vadd.f32 %v3116, %v3164
    %3166 = vmatmul.bf16.gmra.mxu0 %v2297
    %v3167 = vpop.f32.mrf.mxu0
    %v3168 = vadd.f32 %v3119, %v3167
    %v3169 = vpop.f32.mrf.mxu0
    %v3170 = vadd.f32 %v3121, %v3169
    %3171 = vmatmul.bf16.gmra.mxu0 %v2301
    %v3172 = vpop.f32.mrf.mxu0
    %v3173 = vadd.f32 %v3124, %v3172
    %v3174 = vpop.f32.mrf.mxu0
    %v3175 = vadd.f32 %v3126, %v3174
    %3176 = vmatmul.bf16.gmra.mxu0 %v2305
    %v3177 = vpop.f32.mrf.mxu0
    %v3178 = vadd.f32 %v3129, %v3177
    %v3179 = vpop.f32.mrf.mxu0
    %v3180 = vadd.f32 %v3131, %v3179
    %3181 = vmatmul.bf16.gmra.mxu0 %v2309
    %v3182 = vpop.f32.mrf.mxu0
    %v3183 = vadd.f32 %v3134, %v3182
    %v3184 = vpop.f32.mrf.mxu0
    %v3185 = vadd.f32 %v3136, %v3184
    %3186 = vmatmul.bf16.gmra.mxu0 %v2313
    %v3187 = vpop.f32.mrf.mxu0
    %v3188 = vadd.f32 %v3139, %v3187
    %v3189 = vpop.f32.mrf.mxu0
    %v3190 = vadd.f32 %v3141, %v3189
    %3191 = vdwg.mxu0
    %3192 = vmatpush.bf16.msra.mxu0 %v2930
    %3193 = vmatpush.bf16.msra.mxu0 %v2926
    %3194 = vmatpush.bf16.msra.mxu0 %v2922
    %3195 = vmatpush.bf16.msra.mxu0 %v2918
    %3196 = vmatpush.bf16.msra.mxu0 %v2914
    %3197 = vmatpush.bf16.msra.mxu0 %v2910
    %3198 = vmatpush.bf16.msra.mxu0 %v2906
    %3199 = vmatpush.bf16.msra.mxu0 %v2902
    %3200 = vmatmul.bf16.gmra.mxu0 %v2286
    %v3201 = vpop.f32.mrf.mxu0
    %v3202 = vadd.f32 %v3153, %v3201
    %v3203 = vpop.f32.mrf.mxu0
    %v3204 = vadd.f32 %v3155, %v3203
    %3205 = vmatmul.bf16.gmra.mxu0 %v2290
    %v3206 = vpop.f32.mrf.mxu0
    %v3207 = vadd.f32 %v3158, %v3206
    %v3208 = vpop.f32.mrf.mxu0
    %v3209 = vadd.f32 %v3160, %v3208
    %3210 = vmatmul.bf16.gmra.mxu0 %v2294
    %v3211 = vpop.f32.mrf.mxu0
    %v3212 = vadd.f32 %v3163, %v3211
    %v3213 = vpop.f32.mrf.mxu0
    %v3214 = vadd.f32 %v3165, %v3213
    %3215 = vmatmul.bf16.gmra.mxu0 %v2298
    %v3216 = vpop.f32.mrf.mxu0
    %v3217 = vadd.f32 %v3168, %v3216
    %v3218 = vpop.f32.mrf.mxu0
    %v3219 = vadd.f32 %v3170, %v3218
    %3220 = vmatmul.bf16.gmra.mxu0 %v2302
    %v3221 = vpop.f32.mrf.mxu0
    %v3222 = vadd.f32 %v3173, %v3221
    %v3223 = vpop.f32.mrf.mxu0
    %v3224 = vadd.f32 %v3175, %v3223
    %3225 = vmatmul.bf16.gmra.mxu0 %v2306
    %v3226 = vpop.f32.mrf.mxu0
    %v3227 = vadd.f32 %v3178, %v3226
    %v3228 = vpop.f32.mrf.mxu0
    %v3229 = vadd.f32 %v3180, %v3228
    %3230 = vmatmul.bf16.gmra.mxu0 %v2310
    %v3231 = vpop.f32.mrf.mxu0
    %v3232 = vadd.f32 %v3183, %v3231
    %v3233 = vpop.f32.mrf.mxu0
    %v3234 = vadd.f32 %v3185, %v3233
    %3235 = vmatmul.bf16.gmra.mxu0 %v2314
    %v3236 = vpop.f32.mrf.mxu0
    %v3237 = vadd.f32 %v3188, %v3236
    %v3238 = vpop.f32.mrf.mxu0
    %v3239 = vadd.f32 %v3190, %v3238
    %3240 = vdwg.mxu0
    %3241 = vmatpush.bf16.msra.mxu0 %v2962
    %3242 = vmatpush.bf16.msra.mxu0 %v2958
    %3243 = vmatpush.bf16.msra.mxu0 %v2954
    %3244 = vmatpush.bf16.msra.mxu0 %v2950
    %3245 = vmatpush.bf16.msra.mxu0 %v2946
    %3246 = vmatpush.bf16.msra.mxu0 %v2942
    %3247 = vmatpush.bf16.msra.mxu0 %v2938
    %3248 = vmatpush.bf16.msra.mxu0 %v2934
    %3249 = vmatmul.bf16.gmra.mxu0 %v2287
    %v3250 = vpop.f32.mrf.mxu0
    %v3251 = vadd.f32 %v3202, %v3250
    %v3252 = vpop.f32.mrf.mxu0
    %v3253 = vadd.f32 %v3204, %v3252
    %3254 = vmatmul.bf16.gmra.mxu0 %v2291
    %v3255 = vpop.f32.mrf.mxu0
    %v3256 = vadd.f32 %v3207, %v3255
    %v3257 = vpop.f32.mrf.mxu0
    %v3258 = vadd.f32 %v3209, %v3257
    %3259 = vmatmul.bf16.gmra.mxu0 %v2295
    %v3260 = vpop.f32.mrf.mxu0
    %v3261 = vadd.f32 %v3212, %v3260
    %v3262 = vpop.f32.mrf.mxu0
    %v3263 = vadd.f32 %v3214, %v3262
    %3264 = vmatmul.bf16.gmra.mxu0 %v2299
    %v3265 = vpop.f32.mrf.mxu0
    %v3266 = vadd.f32 %v3217, %v3265
    %v3267 = vpop.f32.mrf.mxu0
    %v3268 = vadd.f32 %v3219, %v3267
    %3269 = vmatmul.bf16.gmra.mxu0 %v2303
    %v3270 = vpop.f32.mrf.mxu0
    %v3271 = vadd.f32 %v3222, %v3270
    %v3272 = vpop.f32.mrf.mxu0
    %v3273 = vadd.f32 %v3224, %v3272
    %3274 = vmatmul.bf16.gmra.mxu0 %v2307
    %v3275 = vpop.f32.mrf.mxu0
    %v3276 = vadd.f32 %v3227, %v3275
    %v3277 = vpop.f32.mrf.mxu0
    %v3278 = vadd.f32 %v3229, %v3277
    %3279 = vmatmul.bf16.gmra.mxu0 %v2311
    %v3280 = vpop.f32.mrf.mxu0
    %v3281 = vadd.f32 %v3232, %v3280
    %v3282 = vpop.f32.mrf.mxu0
    %v3283 = vadd.f32 %v3234, %v3282
    %3284 = vmatmul.bf16.gmra.mxu0 %v2315
    %v3285 = vpop.f32.mrf.mxu0
    %v3286 = vadd.f32 %v3237, %v3285
    %v3287 = vpop.f32.mrf.mxu0
    %v3288 = vadd.f32 %v3239, %v3287
    %3289 = vdwg.mxu0
    %3290 = vmatpush.bf16.msra.mxu0 %v2867
    %3291 = vmatpush.bf16.msra.mxu0 %v2863
    %3292 = vmatpush.bf16.msra.mxu0 %v2859
    %3293 = vmatpush.bf16.msra.mxu0 %v2855
    %3294 = vmatpush.bf16.msra.mxu0 %v2851
    %3295 = vmatpush.bf16.msra.mxu0 %v2847
    %3296 = vmatpush.bf16.msra.mxu0 %v2843
    %3297 = vmatpush.bf16.msra.mxu0 %v2839
    %3298 = vmatmul.bf16.gmra.mxu0 %v2284
    %v3299 = vpop.f32.mrf.mxu0
    %v3300 = vadd.f32 %v2447, %v3299
    %v3301 = vpop.f32.mrf.mxu0
    %v3302 = vadd.f32 %v2447, %v3301
    %3303 = vmatmul.bf16.gmra.mxu0 %v2288
    %v3304 = vpop.f32.mrf.mxu0
    %v3305 = vadd.f32 %v2447, %v3304
    %v3306 = vpop.f32.mrf.mxu0
    %v3307 = vadd.f32 %v2447, %v3306
    %3308 = vmatmul.bf16.gmra.mxu0 %v2292
    %v3309 = vpop.f32.mrf.mxu0
    %v3310 = vadd.f32 %v2447, %v3309
    %v3311 = vpop.f32.mrf.mxu0
    %v3312 = vadd.f32 %v2447, %v3311
    %3313 = vmatmul.bf16.gmra.mxu0 %v2296
    %v3314 = vpop.f32.mrf.mxu0
    %v3315 = vadd.f32 %v2447, %v3314
    %v3316 = vpop.f32.mrf.mxu0
    %v3317 = vadd.f32 %v2447, %v3316
    %3318 = vmatmul.bf16.gmra.mxu0 %v2300
    %v3319 = vpop.f32.mrf.mxu0
    %v3320 = vadd.f32 %v2447, %v3319
    %v3321 = vpop.f32.mrf.mxu0
    %v3322 = vadd.f32 %v2447, %v3321
    %3323 = vmatmul.bf16.gmra.mxu0 %v2304
    %v3324 = vpop.f32.mrf.mxu0
    %v3325 = vadd.f32 %v2447, %v3324
    %v3326 = vpop.f32.mrf.mxu0
    %v3327 = vadd.f32 %v2447, %v3326
    %3328 = vmatmul.bf16.gmra.mxu0 %v2308
    %v3329 = vpop.f32.mrf.mxu0
    %v3330 = vadd.f32 %v2447, %v3329
    %v3331 = vpop.f32.mrf.mxu0
    %v3332 = vadd.f32 %v2447, %v3331
    %3333 = vmatmul.bf16.gmra.mxu0 %v2312
    %v3334 = vpop.f32.mrf.mxu0
    %v3335 = vadd.f32 %v2447, %v3334
    %v3336 = vpop.f32.mrf.mxu0
    %v3337 = vadd.f32 %v2447, %v3336
    %3338 = vdwg.mxu0
    %3339 = vmatpush.bf16.msra.mxu0 %v2899
    %3340 = vmatpush.bf16.msra.mxu0 %v2895
    %3341 = vmatpush.bf16.msra.mxu0 %v2891
    %3342 = vmatpush.bf16.msra.mxu0 %v2887
    %3343 = vmatpush.bf16.msra.mxu0 %v2883
    %3344 = vmatpush.bf16.msra.mxu0 %v2879
    %3345 = vmatpush.bf16.msra.mxu0 %v2875
    %3346 = vmatpush.bf16.msra.mxu0 %v2871
    %3347 = vmatmul.bf16.gmra.mxu0 %v2285
    %v3348 = vpop.f32.mrf.mxu0
    %v3349 = vadd.f32 %v3300, %v3348
    %v3350 = vpop.f32.mrf.mxu0
    %v3351 = vadd.f32 %v3302, %v3350
    %3352 = vmatmul.bf16.gmra.mxu0 %v2289
    %v3353 = vpop.f32.mrf.mxu0
    %v3354 = vadd.f32 %v3305, %v3353
    %v3355 = vpop.f32.mrf.mxu0
    %v3356 = vadd.f32 %v3307, %v3355
    %3357 = vmatmul.bf16.gmra.mxu0 %v2293
    %v3358 = vpop.f32.mrf.mxu0
    %v3359 = vadd.f32 %v3310, %v3358
    %v3360 = vpop.f32.mrf.mxu0
    %v3361 = vadd.f32 %v3312, %v3360
    %3362 = vmatmul.bf16.gmra.mxu0 %v2297
    %v3363 = vpop.f32.mrf.mxu0
    %v3364 = vadd.f32 %v3315, %v3363
    %v3365 = vpop.f32.mrf.mxu0
    %v3366 = vadd.f32 %v3317, %v3365
    %3367 = vmatmul.bf16.gmra.mxu0 %v2301
    %v3368 = vpop.f32.mrf.mxu0
    %v3369 = vadd.f32 %v3320, %v3368
    %v3370 = vpop.f32.mrf.mxu0
    %v3371 = vadd.f32 %v3322, %v3370
    %3372 = vmatmul.bf16.gmra.mxu0 %v2305
    %v3373 = vpop.f32.mrf.mxu0
    %v3374 = vadd.f32 %v3325, %v3373
    %v3375 = vpop.f32.mrf.mxu0
    %v3376 = vadd.f32 %v3327, %v3375
    %3377 = vmatmul.bf16.gmra.mxu0 %v2309
    %v3378 = vpop.f32.mrf.mxu0
    %v3379 = vadd.f32 %v3330, %v3378
    %v3380 = vpop.f32.mrf.mxu0
    %v3381 = vadd.f32 %v3332, %v3380
    %3382 = vmatmul.bf16.gmra.mxu0 %v2313
    %v3383 = vpop.f32.mrf.mxu0
    %v3384 = vadd.f32 %v3335, %v3383
    %v3385 = vpop.f32.mrf.mxu0
    %v3386 = vadd.f32 %v3337, %v3385
    %3387 = vdwg.mxu0
    %3388 = vmatpush.bf16.msra.mxu0 %v2931
    %3389 = vmatpush.bf16.msra.mxu0 %v2927
    %3390 = vmatpush.bf16.msra.mxu0 %v2923
    %3391 = vmatpush.bf16.msra.mxu0 %v2919
    %3392 = vmatpush.bf16.msra.mxu0 %v2915
    %3393 = vmatpush.bf16.msra.mxu0 %v2911
    %3394 = vmatpush.bf16.msra.mxu0 %v2907
    %3395 = vmatpush.bf16.msra.mxu0 %v2903
    %3396 = vmatmul.bf16.gmra.mxu0 %v2286
    %v3397 = vpop.f32.mrf.mxu0
    %v3398 = vadd.f32 %v3349, %v3397
    %v3399 = vpop.f32.mrf.mxu0
    %v3400 = vadd.f32 %v3351, %v3399
    %3401 = vmatmul.bf16.gmra.mxu0 %v2290
    %v3402 = vpop.f32.mrf.mxu0
    %v3403 = vadd.f32 %v3354, %v3402
    %v3404 = vpop.f32.mrf.mxu0
    %v3405 = vadd.f32 %v3356, %v3404
    %3406 = vmatmul.bf16.gmra.mxu0 %v2294
    %v3407 = vpop.f32.mrf.mxu0
    %v3408 = vadd.f32 %v3359, %v3407
    %v3409 = vpop.f32.mrf.mxu0
    %v3410 = vadd.f32 %v3361, %v3409
    %3411 = vmatmul.bf16.gmra.mxu0 %v2298
    %v3412 = vpop.f32.mrf.mxu0
    %v3413 = vadd.f32 %v3364, %v3412
    %v3414 = vpop.f32.mrf.mxu0
    %v3415 = vadd.f32 %v3366, %v3414
    %3416 = vmatmul.bf16.gmra.mxu0 %v2302
    %v3417 = vpop.f32.mrf.mxu0
    %v3418 = vadd.f32 %v3369, %v3417
    %v3419 = vpop.f32.mrf.mxu0
    %v3420 = vadd.f32 %v3371, %v3419
    %3421 = vmatmul.bf16.gmra.mxu0 %v2306
    %v3422 = vpop.f32.mrf.mxu0
    %v3423 = vadd.f32 %v3374, %v3422
    %v3424 = vpop.f32.mrf.mxu0
    %v3425 = vadd.f32 %v3376, %v3424
    %3426 = vmatmul.bf16.gmra.mxu0 %v2310
    %v3427 = vpop.f32.mrf.mxu0
    %v3428 = vadd.f32 %v3379, %v3427
    %v3429 = vpop.f32.mrf.mxu0
    %v3430 = vadd.f32 %v3381, %v3429
    %3431 = vmatmul.bf16.gmra.mxu0 %v2314
    %v3432 = vpop.f32.mrf.mxu0
    %v3433 = vadd.f32 %v3384, %v3432
    %v3434 = vpop.f32.mrf.mxu0
    %v3435 = vadd.f32 %v3386, %v3434
    %3436 = vdwg.mxu0
    %3437 = vmatpush.bf16.msra.mxu0 %v2963
    %3438 = vmatpush.bf16.msra.mxu0 %v2959
    %3439 = vmatpush.bf16.msra.mxu0 %v2955
    %3440 = vmatpush.bf16.msra.mxu0 %v2951
    %3441 = vmatpush.bf16.msra.mxu0 %v2947
    %3442 = vmatpush.bf16.msra.mxu0 %v2943
    %3443 = vmatpush.bf16.msra.mxu0 %v2939
    %3444 = vmatpush.bf16.msra.mxu0 %v2935
    %3445 = vmatmul.bf16.gmra.mxu0 %v2287
    %v3446 = vpop.f32.mrf.mxu0
    %v3447 = vadd.f32 %v3398, %v3446
    %v3448 = vpop.f32.mrf.mxu0
    %v3449 = vadd.f32 %v3400, %v3448
    %3450 = vmatmul.bf16.gmra.mxu0 %v2291
    %v3451 = vpop.f32.mrf.mxu0
    %v3452 = vadd.f32 %v3403, %v3451
    %v3453 = vpop.f32.mrf.mxu0
    %v3454 = vadd.f32 %v3405, %v3453
    %3455 = vmatmul.bf16.gmra.mxu0 %v2295
    %v3456 = vpop.f32.mrf.mxu0
    %v3457 = vadd.f32 %v3408, %v3456
    %v3458 = vpop.f32.mrf.mxu0
    %v3459 = vadd.f32 %v3410, %v3458
    %3460 = vmatmul.bf16.gmra.mxu0 %v2299
    %v3461 = vpop.f32.mrf.mxu0
    %v3462 = vadd.f32 %v3413, %v3461
    %v3463 = vpop.f32.mrf.mxu0
    %v3464 = vadd.f32 %v3415, %v3463
    %3465 = vmatmul.bf16.gmra.mxu0 %v2303
    %v3466 = vpop.f32.mrf.mxu0
    %v3467 = vadd.f32 %v3418, %v3466
    %v3468 = vpop.f32.mrf.mxu0
    %v3469 = vadd.f32 %v3420, %v3468
    %3470 = vmatmul.bf16.gmra.mxu0 %v2307
    %v3471 = vpop.f32.mrf.mxu0
    %v3472 = vadd.f32 %v3423, %v3471
    %v3473 = vpop.f32.mrf.mxu0
    %v3474 = vadd.f32 %v3425, %v3473
    %3475 = vmatmul.bf16.gmra.mxu0 %v2311
    %v3476 = vpop.f32.mrf.mxu0
    %v3477 = vadd.f32 %v3428, %v3476
    %v3478 = vpop.f32.mrf.mxu0
    %v3479 = vadd.f32 %v3430, %v3478
    %3480 = vmatmul.bf16.gmra.mxu0 %v2315
    %v3481 = vpop.f32.mrf.mxu0
    %v3482 = vadd.f32 %v3433, %v3481
    %v3483 = vpop.f32.mrf.mxu0
    %v3484 = vadd.f32 %v3435, %v3483
    %3485 = vdwg.mxu0
    %3486 = vmatpush.bf16.msra.mxu0 %v2868
    %3487 = vmatpush.bf16.msra.mxu0 %v2864
    %3488 = vmatpush.bf16.msra.mxu0 %v2860
    %3489 = vmatpush.bf16.msra.mxu0 %v2856
    %3490 = vmatpush.bf16.msra.mxu0 %v2852
    %3491 = vmatpush.bf16.msra.mxu0 %v2848
    %3492 = vmatpush.bf16.msra.mxu0 %v2844
    %3493 = vmatpush.bf16.msra.mxu0 %v2840
    %3494 = vmatmul.bf16.gmra.mxu0 %v2284
    %v3495 = vpop.f32.mrf.mxu0
    %v3496 = vadd.f32 %v2448, %v3495
    %v3497 = vpop.f32.mrf.mxu0
    %v3498 = vadd.f32 %v2448, %v3497
    %3499 = vmatmul.bf16.gmra.mxu0 %v2288
    %v3500 = vpop.f32.mrf.mxu0
    %v3501 = vadd.f32 %v2448, %v3500
    %v3502 = vpop.f32.mrf.mxu0
    %v3503 = vadd.f32 %v2448, %v3502
    %3504 = vmatmul.bf16.gmra.mxu0 %v2292
    %v3505 = vpop.f32.mrf.mxu0
    %v3506 = vadd.f32 %v2448, %v3505
    %v3507 = vpop.f32.mrf.mxu0
    %v3508 = vadd.f32 %v2448, %v3507
    %3509 = vmatmul.bf16.gmra.mxu0 %v2296
    %v3510 = vpop.f32.mrf.mxu0
    %v3511 = vadd.f32 %v2448, %v3510
    %v3512 = vpop.f32.mrf.mxu0
    %v3513 = vadd.f32 %v2448, %v3512
    %3514 = vmatmul.bf16.gmra.mxu0 %v2300
    %v3515 = vpop.f32.mrf.mxu0
    %v3516 = vadd.f32 %v2448, %v3515
    %v3517 = vpop.f32.mrf.mxu0
    %v3518 = vadd.f32 %v2448, %v3517
    %3519 = vmatmul.bf16.gmra.mxu0 %v2304
    %v3520 = vpop.f32.mrf.mxu0
    %v3521 = vadd.f32 %v2448, %v3520
    %v3522 = vpop.f32.mrf.mxu0
    %v3523 = vadd.f32 %v2448, %v3522
    %3524 = vmatmul.bf16.gmra.mxu0 %v2308
    %v3525 = vpop.f32.mrf.mxu0
    %v3526 = vadd.f32 %v2448, %v3525
    %v3527 = vpop.f32.mrf.mxu0
    %v3528 = vadd.f32 %v2448, %v3527
    %3529 = vmatmul.bf16.gmra.mxu0 %v2312
    %v3530 = vpop.f32.mrf.mxu0
    %v3531 = vadd.f32 %v2448, %v3530
    %v3532 = vpop.f32.mrf.mxu0
    %v3533 = vadd.f32 %v2448, %v3532
    %3534 = vdwg.mxu0
    %3535 = vmatpush.bf16.msra.mxu0 %v2900
    %3536 = vmatpush.bf16.msra.mxu0 %v2896
    %3537 = vmatpush.bf16.msra.mxu0 %v2892
    %3538 = vmatpush.bf16.msra.mxu0 %v2888
    %3539 = vmatpush.bf16.msra.mxu0 %v2884
    %3540 = vmatpush.bf16.msra.mxu0 %v2880
    %3541 = vmatpush.bf16.msra.mxu0 %v2876
    %3542 = vmatpush.bf16.msra.mxu0 %v2872
    %3543 = vmatmul.bf16.gmra.mxu0 %v2285
    %v3544 = vpop.f32.mrf.mxu0
    %v3545 = vadd.f32 %v3496, %v3544
    %v3546 = vpop.f32.mrf.mxu0
    %v3547 = vadd.f32 %v3498, %v3546
    %3548 = vmatmul.bf16.gmra.mxu0 %v2289
    %v3549 = vpop.f32.mrf.mxu0
    %v3550 = vadd.f32 %v3501, %v3549
    %v3551 = vpop.f32.mrf.mxu0
    %v3552 = vadd.f32 %v3503, %v3551
    %3553 = vmatmul.bf16.gmra.mxu0 %v2293
    %v3554 = vpop.f32.mrf.mxu0
    %v3555 = vadd.f32 %v3506, %v3554
    %v3556 = vpop.f32.mrf.mxu0
    %v3557 = vadd.f32 %v3508, %v3556
    %3558 = vmatmul.bf16.gmra.mxu0 %v2297
    %v3559 = vpop.f32.mrf.mxu0
    %v3560 = vadd.f32 %v3511, %v3559
    %v3561 = vpop.f32.mrf.mxu0
    %v3562 = vadd.f32 %v3513, %v3561
    %3563 = vmatmul.bf16.gmra.mxu0 %v2301
    %v3564 = vpop.f32.mrf.mxu0
    %v3565 = vadd.f32 %v3516, %v3564
    %v3566 = vpop.f32.mrf.mxu0
    %v3567 = vadd.f32 %v3518, %v3566
    %3568 = vmatmul.bf16.gmra.mxu0 %v2305
    %v3569 = vpop.f32.mrf.mxu0
    %v3570 = vadd.f32 %v3521, %v3569
    %v3571 = vpop.f32.mrf.mxu0
    %v3572 = vadd.f32 %v3523, %v3571
    %3573 = vmatmul.bf16.gmra.mxu0 %v2309
    %v3574 = vpop.f32.mrf.mxu0
    %v3575 = vadd.f32 %v3526, %v3574
    %v3576 = vpop.f32.mrf.mxu0
    %v3577 = vadd.f32 %v3528, %v3576
    %3578 = vmatmul.bf16.gmra.mxu0 %v2313
    %v3579 = vpop.f32.mrf.mxu0
    %v3580 = vadd.f32 %v3531, %v3579
    %v3581 = vpop.f32.mrf.mxu0
    %v3582 = vadd.f32 %v3533, %v3581
    %3583 = vdwg.mxu0
    %3584 = vmatpush.bf16.msra.mxu0 %v2932
    %3585 = vmatpush.bf16.msra.mxu0 %v2928
    %3586 = vmatpush.bf16.msra.mxu0 %v2924
    %3587 = vmatpush.bf16.msra.mxu0 %v2920
    %3588 = vmatpush.bf16.msra.mxu0 %v2916
    %3589 = vmatpush.bf16.msra.mxu0 %v2912
    %3590 = vmatpush.bf16.msra.mxu0 %v2908
    %3591 = vmatpush.bf16.msra.mxu0 %v2904
    %3592 = vmatmul.bf16.gmra.mxu0 %v2286
    %v3593 = vpop.f32.mrf.mxu0
    %v3594 = vadd.f32 %v3545, %v3593
    %v3595 = vpop.f32.mrf.mxu0
    %v3596 = vadd.f32 %v3547, %v3595
    %3597 = vmatmul.bf16.gmra.mxu0 %v2290
    %v3598 = vpop.f32.mrf.mxu0
    %v3599 = vadd.f32 %v3550, %v3598
    %v3600 = vpop.f32.mrf.mxu0
    %v3601 = vadd.f32 %v3552, %v3600
    %3602 = vmatmul.bf16.gmra.mxu0 %v2294
    %v3603 = vpop.f32.mrf.mxu0
    %v3604 = vadd.f32 %v3555, %v3603
    %v3605 = vpop.f32.mrf.mxu0
    %v3606 = vadd.f32 %v3557, %v3605
    %3607 = vmatmul.bf16.gmra.mxu0 %v2298
    %v3608 = vpop.f32.mrf.mxu0
    %v3609 = vadd.f32 %v3560, %v3608
    %v3610 = vpop.f32.mrf.mxu0
    %v3611 = vadd.f32 %v3562, %v3610
    %3612 = vmatmul.bf16.gmra.mxu0 %v2302
    %v3613 = vpop.f32.mrf.mxu0
    %v3614 = vadd.f32 %v3565, %v3613
    %v3615 = vpop.f32.mrf.mxu0
    %v3616 = vadd.f32 %v3567, %v3615
    %3617 = vmatmul.bf16.gmra.mxu0 %v2306
    %v3618 = vpop.f32.mrf.mxu0
    %v3619 = vadd.f32 %v3570, %v3618
    %v3620 = vpop.f32.mrf.mxu0
    %v3621 = vadd.f32 %v3572, %v3620
    %3622 = vmatmul.bf16.gmra.mxu0 %v2310
    %v3623 = vpop.f32.mrf.mxu0
    %v3624 = vadd.f32 %v3575, %v3623
    %v3625 = vpop.f32.mrf.mxu0
    %v3626 = vadd.f32 %v3577, %v3625
    %3627 = vmatmul.bf16.gmra.mxu0 %v2314
    %v3628 = vpop.f32.mrf.mxu0
    %v3629 = vadd.f32 %v3580, %v3628
    %v3630 = vpop.f32.mrf.mxu0
    %v3631 = vadd.f32 %v3582, %v3630
    %3632 = vdwg.mxu0
    %3633 = vmatpush.bf16.msra.mxu0 %v2964
    %3634 = vmatpush.bf16.msra.mxu0 %v2960
    %3635 = vmatpush.bf16.msra.mxu0 %v2956
    %3636 = vmatpush.bf16.msra.mxu0 %v2952
    %3637 = vmatpush.bf16.msra.mxu0 %v2948
    %3638 = vmatpush.bf16.msra.mxu0 %v2944
    %3639 = vmatpush.bf16.msra.mxu0 %v2940
    %3640 = vmatpush.bf16.msra.mxu0 %v2936
    %3641 = vmatmul.bf16.gmra.mxu0 %v2287
    %v3642 = vpop.f32.mrf.mxu0
    %v3643 = vadd.f32 %v3594, %v3642
    %v3644 = vpop.f32.mrf.mxu0
    %v3645 = vadd.f32 %v3596, %v3644
    %3646 = vmatmul.bf16.gmra.mxu0 %v2291
    %v3647 = vpop.f32.mrf.mxu0
    %v3648 = vadd.f32 %v3599, %v3647
    %v3649 = vpop.f32.mrf.mxu0
    %v3650 = vadd.f32 %v3601, %v3649
    %3651 = vmatmul.bf16.gmra.mxu0 %v2295
    %v3652 = vpop.f32.mrf.mxu0
    %v3653 = vadd.f32 %v3604, %v3652
    %v3654 = vpop.f32.mrf.mxu0
    %v3655 = vadd.f32 %v3606, %v3654
    %3656 = vmatmul.bf16.gmra.mxu0 %v2299
    %v3657 = vpop.f32.mrf.mxu0
    %v3658 = vadd.f32 %v3609, %v3657
    %v3659 = vpop.f32.mrf.mxu0
    %v3660 = vadd.f32 %v3611, %v3659
    %3661 = vmatmul.bf16.gmra.mxu0 %v2303
    %v3662 = vpop.f32.mrf.mxu0
    %v3663 = vadd.f32 %v3614, %v3662
    %v3664 = vpop.f32.mrf.mxu0
    %v3665 = vadd.f32 %v3616, %v3664
    %3666 = vmatmul.bf16.gmra.mxu0 %v2307
    %v3667 = vpop.f32.mrf.mxu0
    %v3668 = vadd.f32 %v3619, %v3667
    %v3669 = vpop.f32.mrf.mxu0
    %v3670 = vadd.f32 %v3621, %v3669
    %3671 = vmatmul.bf16.gmra.mxu0 %v2311
    %v3672 = vpop.f32.mrf.mxu0
    %v3673 = vadd.f32 %v3624, %v3672
    %v3674 = vpop.f32.mrf.mxu0
    %v3675 = vadd.f32 %v3626, %v3674
    %3676 = vmatmul.bf16.gmra.mxu0 %v2315
    %v3677 = vpop.f32.mrf.mxu0
    %v3678 = vadd.f32 %v3629, %v3677
    %v3679 = vpop.f32.mrf.mxu0
    %v3680 = vadd.f32 %v3631, %v3679
    %3681 = vdwg.mxu0
    %3682 = vmatpush.bf16.msra.mxu0 %v2869
    %3683 = vmatpush.bf16.msra.mxu0 %v2865
    %3684 = vmatpush.bf16.msra.mxu0 %v2861
    %3685 = vmatpush.bf16.msra.mxu0 %v2857
    %3686 = vmatpush.bf16.msra.mxu0 %v2853
    %3687 = vmatpush.bf16.msra.mxu0 %v2849
    %3688 = vmatpush.bf16.msra.mxu0 %v2845
    %3689 = vmatpush.bf16.msra.mxu0 %v2841
    %3690 = vmatmul.bf16.gmra.mxu0 %v2284
    %v3691 = vpop.f32.mrf.mxu0
    %v3692 = vadd.f32 %v2449, %v3691
    %v3693 = vpop.f32.mrf.mxu0
    %v3694 = vadd.f32 %v2449, %v3693
    %3695 = vmatmul.bf16.gmra.mxu0 %v2288
    %v3696 = vpop.f32.mrf.mxu0
    %v3697 = vadd.f32 %v2449, %v3696
    %v3698 = vpop.f32.mrf.mxu0
    %v3699 = vadd.f32 %v2449, %v3698
    %3700 = vmatmul.bf16.gmra.mxu0 %v2292
    %v3701 = vpop.f32.mrf.mxu0
    %v3702 = vadd.f32 %v2449, %v3701
    %v3703 = vpop.f32.mrf.mxu0
    %v3704 = vadd.f32 %v2449, %v3703
    %3705 = vmatmul.bf16.gmra.mxu0 %v2296
    %v3706 = vpop.f32.mrf.mxu0
    %v3707 = vadd.f32 %v2449, %v3706
    %v3708 = vpop.f32.mrf.mxu0
    %v3709 = vadd.f32 %v2449, %v3708
    %3710 = vmatmul.bf16.gmra.mxu0 %v2300
    %v3711 = vpop.f32.mrf.mxu0
    %v3712 = vadd.f32 %v2449, %v3711
    %v3713 = vpop.f32.mrf.mxu0
    %v3714 = vadd.f32 %v2449, %v3713
    %3715 = vmatmul.bf16.gmra.mxu0 %v2304
    %v3716 = vpop.f32.mrf.mxu0
    %v3717 = vadd.f32 %v2449, %v3716
    %v3718 = vpop.f32.mrf.mxu0
    %v3719 = vadd.f32 %v2449, %v3718
    %3720 = vmatmul.bf16.gmra.mxu0 %v2308
    %v3721 = vpop.f32.mrf.mxu0
    %v3722 = vadd.f32 %v2449, %v3721
    %v3723 = vpop.f32.mrf.mxu0
    %v3724 = vadd.f32 %v2449, %v3723
    %3725 = vmatmul.bf16.gmra.mxu0 %v2312
    %v3726 = vpop.f32.mrf.mxu0
    %v3727 = vadd.f32 %v2449, %v3726
    %v3728 = vpop.f32.mrf.mxu0
    %v3729 = vadd.f32 %v2449, %v3728
    %3730 = vdwg.mxu0
    %3731 = vmatpush.bf16.msra.mxu0 %v2901
    %3732 = vmatpush.bf16.msra.mxu0 %v2897
    %3733 = vmatpush.bf16.msra.mxu0 %v2893
    %3734 = vmatpush.bf16.msra.mxu0 %v2889
    %3735 = vmatpush.bf16.msra.mxu0 %v2885
    %3736 = vmatpush.bf16.msra.mxu0 %v2881
    %3737 = vmatpush.bf16.msra.mxu0 %v2877
    %3738 = vmatpush.bf16.msra.mxu0 %v2873
    %3739 = vmatmul.bf16.gmra.mxu0 %v2285
    %v3740 = vpop.f32.mrf.mxu0
    %v3741 = vadd.f32 %v3692, %v3740
    %v3742 = vpop.f32.mrf.mxu0
    %v3743 = vadd.f32 %v3694, %v3742
    %3744 = vmatmul.bf16.gmra.mxu0 %v2289
    %v3745 = vpop.f32.mrf.mxu0
    %v3746 = vadd.f32 %v3697, %v3745
    %v3747 = vpop.f32.mrf.mxu0
    %v3748 = vadd.f32 %v3699, %v3747
    %3749 = vmatmul.bf16.gmra.mxu0 %v2293
    %v3750 = vpop.f32.mrf.mxu0
    %v3751 = vadd.f32 %v3702, %v3750
    %v3752 = vpop.f32.mrf.mxu0
    %v3753 = vadd.f32 %v3704, %v3752
    %3754 = vmatmul.bf16.gmra.mxu0 %v2297
    %v3755 = vpop.f32.mrf.mxu0
    %v3756 = vadd.f32 %v3707, %v3755
    %v3757 = vpop.f32.mrf.mxu0
    %v3758 = vadd.f32 %v3709, %v3757
    %3759 = vmatmul.bf16.gmra.mxu0 %v2301
    %v3760 = vpop.f32.mrf.mxu0
    %v3761 = vadd.f32 %v3712, %v3760
    %v3762 = vpop.f32.mrf.mxu0
    %v3763 = vadd.f32 %v3714, %v3762
    %3764 = vmatmul.bf16.gmra.mxu0 %v2305
    %v3765 = vpop.f32.mrf.mxu0
    %v3766 = vadd.f32 %v3717, %v3765
    %v3767 = vpop.f32.mrf.mxu0
    %v3768 = vadd.f32 %v3719, %v3767
    %3769 = vmatmul.bf16.gmra.mxu0 %v2309
    %v3770 = vpop.f32.mrf.mxu0
    %v3771 = vadd.f32 %v3722, %v3770
    %v3772 = vpop.f32.mrf.mxu0
    %v3773 = vadd.f32 %v3724, %v3772
    %3774 = vmatmul.bf16.gmra.mxu0 %v2313
    %v3775 = vpop.f32.mrf.mxu0
    %v3776 = vadd.f32 %v3727, %v3775
    %v3777 = vpop.f32.mrf.mxu0
    %v3778 = vadd.f32 %v3729, %v3777
    %3779 = vdwg.mxu0
    %3780 = vmatpush.bf16.msra.mxu0 %v2933
    %3781 = vmatpush.bf16.msra.mxu0 %v2929
    %3782 = vmatpush.bf16.msra.mxu0 %v2925
    %3783 = vmatpush.bf16.msra.mxu0 %v2921
    %3784 = vmatpush.bf16.msra.mxu0 %v2917
    %3785 = vmatpush.bf16.msra.mxu0 %v2913
    %3786 = vmatpush.bf16.msra.mxu0 %v2909
    %3787 = vmatpush.bf16.msra.mxu0 %v2905
    %3788 = vmatmul.bf16.gmra.mxu0 %v2286
    %v3789 = vpop.f32.mrf.mxu0
    %v3790 = vadd.f32 %v3741, %v3789
    %v3791 = vpop.f32.mrf.mxu0
    %v3792 = vadd.f32 %v3743, %v3791
    %3793 = vmatmul.bf16.gmra.mxu0 %v2290
    %v3794 = vpop.f32.mrf.mxu0
    %v3795 = vadd.f32 %v3746, %v3794
    %v3796 = vpop.f32.mrf.mxu0
    %v3797 = vadd.f32 %v3748, %v3796
    %3798 = vmatmul.bf16.gmra.mxu0 %v2294
    %v3799 = vpop.f32.mrf.mxu0
    %v3800 = vadd.f32 %v3751, %v3799
    %v3801 = vpop.f32.mrf.mxu0
    %v3802 = vadd.f32 %v3753, %v3801
    %3803 = vmatmul.bf16.gmra.mxu0 %v2298
    %v3804 = vpop.f32.mrf.mxu0
    %v3805 = vadd.f32 %v3756, %v3804
    %v3806 = vpop.f32.mrf.mxu0
    %v3807 = vadd.f32 %v3758, %v3806
    %3808 = vmatmul.bf16.gmra.mxu0 %v2302
    %v3809 = vpop.f32.mrf.mxu0
    %v3810 = vadd.f32 %v3761, %v3809
    %v3811 = vpop.f32.mrf.mxu0
    %v3812 = vadd.f32 %v3763, %v3811
    %3813 = vmatmul.bf16.gmra.mxu0 %v2306
    %v3814 = vpop.f32.mrf.mxu0
    %v3815 = vadd.f32 %v3766, %v3814
    %v3816 = vpop.f32.mrf.mxu0
    %v3817 = vadd.f32 %v3768, %v3816
    %3818 = vmatmul.bf16.gmra.mxu0 %v2310
    %v3819 = vpop.f32.mrf.mxu0
    %v3820 = vadd.f32 %v3771, %v3819
    %v3821 = vpop.f32.mrf.mxu0
    %v3822 = vadd.f32 %v3773, %v3821
    %3823 = vmatmul.bf16.gmra.mxu0 %v2314
    %v3824 = vpop.f32.mrf.mxu0
    %v3825 = vadd.f32 %v3776, %v3824
    %v3826 = vpop.f32.mrf.mxu0
    %v3827 = vadd.f32 %v3778, %v3826
    %3828 = vdwg.mxu0
    %3829 = vmatpush.bf16.msra.mxu0 %v2965
    %3830 = vmatpush.bf16.msra.mxu0 %v2961
    %3831 = vmatpush.bf16.msra.mxu0 %v2957
    %3832 = vmatpush.bf16.msra.mxu0 %v2953
    %3833 = vmatpush.bf16.msra.mxu0 %v2949
    %3834 = vmatpush.bf16.msra.mxu0 %v2945
    %3835 = vmatpush.bf16.msra.mxu0 %v2941
    %3836 = vmatpush.bf16.msra.mxu0 %v2937
    %3837 = vmatmul.bf16.gmra.mxu0 %v2287
    %v3838 = vpop.f32.mrf.mxu0
    %v3839 = vadd.f32 %v3790, %v3838
    %v3840 = vpop.f32.mrf.mxu0
    %v3841 = vadd.f32 %v3792, %v3840
    %3842 = vmatmul.bf16.gmra.mxu0 %v2291
    %v3843 = vpop.f32.mrf.mxu0
    %v3844 = vadd.f32 %v3795, %v3843
    %v3845 = vpop.f32.mrf.mxu0
    %v3846 = vadd.f32 %v3797, %v3845
    %3847 = vmatmul.bf16.gmra.mxu0 %v2295
    %v3848 = vpop.f32.mrf.mxu0
    %v3849 = vadd.f32 %v3800, %v3848
    %v3850 = vpop.f32.mrf.mxu0
    %v3851 = vadd.f32 %v3802, %v3850
    %3852 = vmatmul.bf16.gmra.mxu0 %v2299
    %v3853 = vpop.f32.mrf.mxu0
    %v3854 = vadd.f32 %v3805, %v3853
    %v3855 = vpop.f32.mrf.mxu0
    %v3856 = vadd.f32 %v3807, %v3855
    %3857 = vmatmul.bf16.gmra.mxu0 %v2303
    %v3858 = vpop.f32.mrf.mxu0
    %v3859 = vadd.f32 %v3810, %v3858
    %v3860 = vpop.f32.mrf.mxu0
    %v3861 = vadd.f32 %v3812, %v3860
    %3862 = vmatmul.bf16.gmra.mxu0 %v2307
    %v3863 = vpop.f32.mrf.mxu0
    %v3864 = vadd.f32 %v3815, %v3863
    %v3865 = vpop.f32.mrf.mxu0
    %v3866 = vadd.f32 %v3817, %v3865
    %3867 = vmatmul.bf16.gmra.mxu0 %v2311
    %v3868 = vpop.f32.mrf.mxu0
    %v3869 = vadd.f32 %v3820, %v3868
    %v3870 = vpop.f32.mrf.mxu0
    %v3871 = vadd.f32 %v3822, %v3870
    %3872 = vmatmul.bf16.gmra.mxu0 %v2315
    %v3873 = vpop.f32.mrf.mxu0
    %v3874 = vadd.f32 %v3825, %v3873
    %v3875 = vpop.f32.mrf.mxu0
    %v3876 = vadd.f32 %v3827, %v3875
    %3877 = vdwg.mxu0
    %v3878 = vadd.f32 %v3251, 3.0
    %v3879 = vadd.f32 %v3447, 3.0
    %v3880 = vadd.f32 %v3643, 3.0
    %v3881 = vadd.f32 %v3839, 3.0
    %v3882 = vadd.f32 %v3253, 3.0
    %v3883 = vadd.f32 %v3449, 3.0
    %v3884 = vadd.f32 %v3645, 3.0
    %v3885 = vadd.f32 %v3841, 3.0
    %v3886 = vadd.f32 %v3256, 3.0
    %v3887 = vadd.f32 %v3452, 3.0
    %v3888 = vadd.f32 %v3648, 3.0
    %v3889 = vadd.f32 %v3844, 3.0
    %v3890 = vadd.f32 %v3258, 3.0
    %v3891 = vadd.f32 %v3454, 3.0
    %v3892 = vadd.f32 %v3650, 3.0
    %v3893 = vadd.f32 %v3846, 3.0
    %v3894 = vadd.f32 %v3261, 3.0
    %v3895 = vadd.f32 %v3457, 3.0
    %v3896 = vadd.f32 %v3653, 3.0
    %v3897 = vadd.f32 %v3849, 3.0
    %v3898 = vadd.f32 %v3263, 3.0
    %v3899 = vadd.f32 %v3459, 3.0
    %v3900 = vadd.f32 %v3655, 3.0
    %v3901 = vadd.f32 %v3851, 3.0
    %v3902 = vadd.f32 %v3266, 3.0
    %v3903 = vadd.f32 %v3462, 3.0
    %v3904 = vadd.f32 %v3658, 3.0
    %v3905 = vadd.f32 %v3854, 3.0
    %v3906 = vadd.f32 %v3268, 3.0
    %v3907 = vadd.f32 %v3464, 3.0
    %v3908 = vadd.f32 %v3660, 3.0
    %v3909 = vadd.f32 %v3856, 3.0
    %v3910 = vadd.f32 %v3271, 3.0
    %v3911 = vadd.f32 %v3467, 3.0
    %v3912 = vadd.f32 %v3663, 3.0
    %v3913 = vadd.f32 %v3859, 3.0
    %v3914 = vadd.f32 %v3273, 3.0
    %v3915 = vadd.f32 %v3469, 3.0
    %v3916 = vadd.f32 %v3665, 3.0
    %v3917 = vadd.f32 %v3861, 3.0
    %v3918 = vadd.f32 %v3276, 3.0
    %v3919 = vadd.f32 %v3472, 3.0
    %v3920 = vadd.f32 %v3668, 3.0
    %v3921 = vadd.f32 %v3864, 3.0
    %v3922 = vadd.f32 %v3278, 3.0
    %v3923 = vadd.f32 %v3474, 3.0
    %v3924 = vadd.f32 %v3670, 3.0
    %v3925 = vadd.f32 %v3866, 3.0
    %v3926 = vadd.f32 %v3281, 3.0
    %v3927 = vadd.f32 %v3477, 3.0
    %v3928 = vadd.f32 %v3673, 3.0
    %v3929 = vadd.f32 %v3869, 3.0
    %v3930 = vadd.f32 %v3283, 3.0
    %v3931 = vadd.f32 %v3479, 3.0
    %v3932 = vadd.f32 %v3675, 3.0
    %v3933 = vadd.f32 %v3871, 3.0
    %v3934 = vadd.f32 %v3286, 3.0
    %v3935 = vadd.f32 %v3482, 3.0
    %v3936 = vadd.f32 %v3678, 3.0
    %v3937 = vadd.f32 %v3874, 3.0
    %v3938 = vadd.f32 %v3288, 3.0
    %v3939 = vadd.f32 %v3484, 3.0
    %v3940 = vadd.f32 %v3680, 3.0
    %v3941 = vadd.f32 %v3876, 3.0
    %v3942 = vmax.f32 %v3878, 0.0
    %v3943 = vmax.f32 %v3879, 0.0
    %v3944 = vmax.f32 %v3880, 0.0
    %v3945 = vmax.f32 %v3881, 0.0
    %v3946 = vmax.f32 %v3882, 0.0
    %v3947 = vmax.f32 %v3883, 0.0
    %v3948 = vmax.f32 %v3884, 0.0
    %v3949 = vmax.f32 %v3885, 0.0
    %v3950 = vmax.f32 %v3886, 0.0
    %v3951 = vmax.f32 %v3887, 0.0
    %v3952 = vmax.f32 %v3888, 0.0
    %v3953 = vmax.f32 %v3889, 0.0
    %v3954 = vmax.f32 %v3890, 0.0
    %v3955 = vmax.f32 %v3891, 0.0
    %v3956 = vmax.f32 %v3892, 0.0
    %v3957 = vmax.f32 %v3893, 0.0
    %v3958 = vmax.f32 %v3894, 0.0
    %v3959 = vmax.f32 %v3895, 0.0
    %v3960 = vmax.f32 %v3896, 0.0
    %v3961 = vmax.f32 %v3897, 0.0
    %v3962 = vmax.f32 %v3898, 0.0
    %v3963 = vmax.f32 %v3899, 0.0
    %v3964 = vmax.f32 %v3900, 0.0
    %v3965 = vmax.f32 %v3901, 0.0
    %v3966 = vmax.f32 %v3902, 0.0
    %v3967 = vmax.f32 %v3903, 0.0
    %v3968 = vmax.f32 %v3904, 0.0
    %v3969 = vmax.f32 %v3905, 0.0
    %v3970 = vmax.f32 %v3906, 0.0
    %v3971 = vmax.f32 %v3907, 0.0
    %v3972 = vmax.f32 %v3908, 0.0
    %v3973 = vmax.f32 %v3909, 0.0
    %v3974 = vmax.f32 %v3910, 0.0
    %v3975 = vmax.f32 %v3911, 0.0
    %v3976 = vmax.f32 %v3912, 0.0
    %v3977 = vmax.f32 %v3913, 0.0
    %v3978 = vmax.f32 %v3914, 0.0
    %v3979 = vmax.f32 %v3915, 0.0
    %v3980 = vmax.f32 %v3916, 0.0
    %v3981 = vmax.f32 %v3917, 0.0
    %v3982 = vmax.f32 %v3918, 0.0
    %v3983 = vmax.f32 %v3919, 0.0
    %v3984 = vmax.f32 %v3920, 0.0
    %v3985 = vmax.f32 %v3921, 0.0
    %v3986 = vmax.f32 %v3922, 0.0
    %v3987 = vmax.f32 %v3923, 0.0
    %v3988 = vmax.f32 %v3924, 0.0
    %v3989 = vmax.f32 %v3925, 0.0
    %v3990 = vmax.f32 %v3926, 0.0
    %v3991 = vmax.f32 %v3927, 0.0
    %v3992 = vmax.f32 %v3928, 0.0
    %v3993 = vmax.f32 %v3929, 0.0
    %v3994 = vmax.f32 %v3930, 0.0
    %v3995 = vmax.f32 %v3931, 0.0
    %v3996 = vmax.f32 %v3932, 0.0
    %v3997 = vmax.f32 %v3933, 0.0
    %v3998 = vmax.f32 %v3934, 0.0
    %v3999 = vmax.f32 %v3935, 0.0
    %v4000 = vmax.f32 %v3936, 0.0
    %v4001 = vmax.f32 %v3937, 0.0
    %v4002 = vmax.f32 %v3938, 0.0
    %v4003 = vmax.f32 %v3939, 0.0
    %v4004 = vmax.f32 %v3940, 0.0
    %v4005 = vmax.f32 %v3941, 0.0
    %v4006 = vmin.f32 %v3942, 6.0
    %v4007 = vmin.f32 %v3943, 6.0
    %v4008 = vmin.f32 %v3944, 6.0
    %v4009 = vmin.f32 %v3945, 6.0
    %v4010 = vmin.f32 %v3946, 6.0
    %v4011 = vmin.f32 %v3947, 6.0
    %v4012 = vmin.f32 %v3948, 6.0
    %v4013 = vmin.f32 %v3949, 6.0
    %v4014 = vmin.f32 %v3950, 6.0
    %v4015 = vmin.f32 %v3951, 6.0
    %v4016 = vmin.f32 %v3952, 6.0
    %v4017 = vmin.f32 %v3953, 6.0
    %v4018 = vmin.f32 %v3954, 6.0
    %v4019 = vmin.f32 %v3955, 6.0
    %v4020 = vmin.f32 %v3956, 6.0
    %v4021 = vmin.f32 %v3957, 6.0
    %v4022 = vmin.f32 %v3958, 6.0
    %v4023 = vmin.f32 %v3959, 6.0
    %v4024 = vmin.f32 %v3960, 6.0
    %v4025 = vmin.f32 %v3961, 6.0
    %v4026 = vmin.f32 %v3962, 6.0
    %v4027 = vmin.f32 %v3963, 6.0
    %v4028 = vmin.f32 %v3964, 6.0
    %v4029 = vmin.f32 %v3965, 6.0
    %v4030 = vmin.f32 %v3966, 6.0
    %v4031 = vmin.f32 %v3967, 6.0
    %v4032 = vmin.f32 %v3968, 6.0
    %v4033 = vmin.f32 %v3969, 6.0
    %v4034 = vmin.f32 %v3970, 6.0
    %v4035 = vmin.f32 %v3971, 6.0
    %v4036 = vmin.f32 %v3972, 6.0
    %v4037 = vmin.f32 %v3973, 6.0
    %v4038 = vmin.f32 %v3974, 6.0
    %v4039 = vmin.f32 %v3975, 6.0
    %v4040 = vmin.f32 %v3976, 6.0
    %v4041 = vmin.f32 %v3977, 6.0
    %v4042 = vmin.f32 %v3978, 6.0
    %v4043 = vmin.f32 %v3979, 6.0
    %v4044 = vmin.f32 %v3980, 6.0
    %v4045 = vmin.f32 %v3981, 6.0
    %v4046 = vmin.f32 %v3982, 6.0
    %v4047 = vmin.f32 %v3983, 6.0
    %v4048 = vmin.f32 %v3984, 6.0
    %v4049 = vmin.f32 %v3985, 6.0
    %v4050 = vmin.f32 %v3986, 6.0
    %v4051 = vmin.f32 %v3987, 6.0
    %v4052 = vmin.f32 %v3988, 6.0
    %v4053 = vmin.f32 %v3989, 6.0
    %v4054 = vmin.f32 %v3990, 6.0
    %v4055 = vmin.f32 %v3991, 6.0
    %v4056 = vmin.f32 %v3992, 6.0
    %v4057 = vmin.f32 %v3993, 6.0
    %v4058 = vmin.f32 %v3994, 6.0
    %v4059 = vmin.f32 %v3995, 6.0
    %v4060 = vmin.f32 %v3996, 6.0
    %v4061 = vmin.f32 %v3997, 6.0
    %v4062 = vmin.f32 %v3998, 6.0
    %v4063 = vmin.f32 %v3999, 6.0
    %v4064 = vmin.f32 %v4000, 6.0
    %v4065 = vmin.f32 %v4001, 6.0
    %v4066 = vmin.f32 %v4002, 6.0
    %v4067 = vmin.f32 %v4003, 6.0
    %v4068 = vmin.f32 %v4004, 6.0
    %v4069 = vmin.f32 %v4005, 6.0
    %v4070 = vmul.f32 %v3251, %v4006
    %v4071 = vmul.f32 %v3447, %v4007
    %v4072 = vmul.f32 %v3643, %v4008
    %v4073 = vmul.f32 %v3839, %v4009
    %v4074 = vmul.f32 %v3253, %v4010
    %v4075 = vmul.f32 %v3449, %v4011
    %v4076 = vmul.f32 %v3645, %v4012
    %v4077 = vmul.f32 %v3841, %v4013
    %v4078 = vmul.f32 %v3256, %v4014
    %v4079 = vmul.f32 %v3452, %v4015
    %v4080 = vmul.f32 %v3648, %v4016
    %v4081 = vmul.f32 %v3844, %v4017
    %v4082 = vmul.f32 %v3258, %v4018
    %v4083 = vmul.f32 %v3454, %v4019
    %v4084 = vmul.f32 %v3650, %v4020
    %v4085 = vmul.f32 %v3846, %v4021
    %v4086 = vmul.f32 %v3261, %v4022
    %v4087 = vmul.f32 %v3457, %v4023
    %v4088 = vmul.f32 %v3653, %v4024
    %v4089 = vmul.f32 %v3849, %v4025
    %v4090 = vmul.f32 %v3263, %v4026
    %v4091 = vmul.f32 %v3459, %v4027
    %v4092 = vmul.f32 %v3655, %v4028
    %v4093 = vmul.f32 %v3851, %v4029
    %v4094 = vmul.f32 %v3266, %v4030
    %v4095 = vmul.f32 %v3462, %v4031
    %v4096 = vmul.f32 %v3658, %v4032
    %v4097 = vmul.f32 %v3854, %v4033
    %v4098 = vmul.f32 %v3268, %v4034
    %v4099 = vmul.f32 %v3464, %v4035
    %v4100 = vmul.f32 %v3660, %v4036
    %v4101 = vmul.f32 %v3856, %v4037
    %v4102 = vmul.f32 %v3271, %v4038
    %v4103 = vmul.f32 %v3467, %v4039
    %v4104 = vmul.f32 %v3663, %v4040
    %v4105 = vmul.f32 %v3859, %v4041
    %v4106 = vmul.f32 %v3273, %v4042
    %v4107 = vmul.f32 %v3469, %v4043
    %v4108 = vmul.f32 %v3665, %v4044
    %v4109 = vmul.f32 %v3861, %v4045
    %v4110 = vmul.f32 %v3276, %v4046
    %v4111 = vmul.f32 %v3472, %v4047
    %v4112 = vmul.f32 %v3668, %v4048
    %v4113 = vmul.f32 %v3864, %v4049
    %v4114 = vmul.f32 %v3278, %v4050
    %v4115 = vmul.f32 %v3474, %v4051
    %v4116 = vmul.f32 %v3670, %v4052
    %v4117 = vmul.f32 %v3866, %v4053
    %v4118 = vmul.f32 %v3281, %v4054
    %v4119 = vmul.f32 %v3477, %v4055
    %v4120 = vmul.f32 %v3673, %v4056
    %v4121 = vmul.f32 %v3869, %v4057
    %v4122 = vmul.f32 %v3283, %v4058
    %v4123 = vmul.f32 %v3479, %v4059
    %v4124 = vmul.f32 %v3675, %v4060
    %v4125 = vmul.f32 %v3871, %v4061
    %v4126 = vmul.f32 %v3286, %v4062
    %v4127 = vmul.f32 %v3482, %v4063
    %v4128 = vmul.f32 %v3678, %v4064
    %v4129 = vmul.f32 %v3874, %v4065
    %v4130 = vmul.f32 %v3288, %v4066
    %v4131 = vmul.f32 %v3484, %v4067
    %v4132 = vmul.f32 %v3680, %v4068
    %v4133 = vmul.f32 %v3876, %v4069
    %v4134 = vld [vmem:[%s7] sm:$0xf]
    %v4136 = vperm.slane %v4134, 0
    %v4137 = vperm.slane %v4134, 1
    %v4138 = vperm.slane %v4134, 2
    %v4139 = vperm.slane %v4134, 3
    %v4144 = vmul.f32 %v4070, %v4136
    %v4145 = vmul.f32 %v4071, %v4137
    %v4146 = vmul.f32 %v4072, %v4138
    %v4147 = vmul.f32 %v4073, %v4139
    %v4148 = vmul.f32 %v4074, %v4136
    %v4149 = vmul.f32 %v4075, %v4137
    %v4150 = vmul.f32 %v4076, %v4138
    %v4151 = vmul.f32 %v4077, %v4139
    %v4152 = vmul.f32 %v4078, %v4136
    %v4153 = vmul.f32 %v4079, %v4137
    %v4154 = vmul.f32 %v4080, %v4138
    %v4155 = vmul.f32 %v4081, %v4139
    %v4156 = vmul.f32 %v4082, %v4136
    %v4157 = vmul.f32 %v4083, %v4137
    %v4158 = vmul.f32 %v4084, %v4138
    %v4159 = vmul.f32 %v4085, %v4139
    %v4160 = vmul.f32 %v4086, %v4136
    %v4161 = vmul.f32 %v4087, %v4137
    %v4162 = vmul.f32 %v4088, %v4138
    %v4163 = vmul.f32 %v4089, %v4139
    %v4164 = vmul.f32 %v4090, %v4136
    %v4165 = vmul.f32 %v4091, %v4137
    %v4166 = vmul.f32 %v4092, %v4138
    %v4167 = vmul.f32 %v4093, %v4139
    %v4168 = vmul.f32 %v4094, %v4136
    %v4169 = vmul.f32 %v4095, %v4137
    %v4170 = vmul.f32 %v4096, %v4138
    %v4171 = vmul.f32 %v4097, %v4139
    %v4172 = vmul.f32 %v4098, %v4136
    %v4173 = vmul.f32 %v4099, %v4137
    %v4174 = vmul.f32 %v4100, %v4138
    %v4175 = vmul.f32 %v4101, %v4139
    %v4176 = vmul.f32 %v4102, %v4136
    %v4177 = vmul.f32 %v4103, %v4137
    %v4178 = vmul.f32 %v4104, %v4138
    %v4179 = vmul.f32 %v4105, %v4139
    %v4180 = vmul.f32 %v4106, %v4136
    %v4181 = vmul.f32 %v4107, %v4137
    %v4182 = vmul.f32 %v4108, %v4138
    %v4183 = vmul.f32 %v4109, %v4139
    %v4184 = vmul.f32 %v4110, %v4136
    %v4185 = vmul.f32 %v4111, %v4137
    %v4186 = vmul.f32 %v4112, %v4138
    %v4187 = vmul.f32 %v4113, %v4139
    %v4188 = vmul.f32 %v4114, %v4136
    %v4189 = vmul.f32 %v4115, %v4137
    %v4190 = vmul.f32 %v4116, %v4138
    %v4191 = vmul.f32 %v4117, %v4139
    %v4192 = vmul.f32 %v4118, %v4136
    %v4193 = vmul.f32 %v4119, %v4137
    %v4194 = vmul.f32 %v4120, %v4138
    %v4195 = vmul.f32 %v4121, %v4139
    %v4196 = vmul.f32 %v4122, %v4136
    %v4197 = vmul.f32 %v4123, %v4137
    %v4198 = vmul.f32 %v4124, %v4138
    %v4199 = vmul.f32 %v4125, %v4139
    %v4200 = vmul.f32 %v4126, %v4136
    %v4201 = vmul.f32 %v4127, %v4137
    %v4202 = vmul.f32 %v4128, %v4138
    %v4203 = vmul.f32 %v4129, %v4139
    %v4204 = vmul.f32 %v4130, %v4136
    %v4205 = vmul.f32 %v4131, %v4137
    %v4206 = vmul.f32 %v4132, %v4138
    %v4207 = vmul.f32 %v4133, %v4139
    %v4208 = vadd.f32 %v4144, %v4145
    %v4209 = vadd.f32 %v4208, %v4146
    %v4210 = vadd.f32 %v4209, %v4147
    %4211 = vadd.xlane.f32.xlu0 %v4210
    %v4212 = vpop.xlane.xlu0 %4211
    %v4213 = vadd.f32 %v4148, %v4149
    %v4214 = vadd.f32 %v4213, %v4150
    %v4215 = vadd.f32 %v4214, %v4151
    %4216 = vadd.xlane.f32.xlu0 %v4215
    %v4217 = vpop.xlane.xlu0 %4216
    %v4218 = vadd.f32 %v4152, %v4153
    %v4219 = vadd.f32 %v4218, %v4154
    %v4220 = vadd.f32 %v4219, %v4155
    %4221 = vadd.xlane.f32.xlu0 %v4220
    %v4222 = vpop.xlane.xlu0 %4221
    %v4223 = vadd.f32 %v4156, %v4157
    %v4224 = vadd.f32 %v4223, %v4158
    %v4225 = vadd.f32 %v4224, %v4159
    %4226 = vadd.xlane.f32.xlu0 %v4225
    %v4227 = vpop.xlane.xlu0 %4226
    %v4228 = vadd.f32 %v4160, %v4161
    %v4229 = vadd.f32 %v4228, %v4162
    %v4230 = vadd.f32 %v4229, %v4163
    %4231 = vadd.xlane.f32.xlu0 %v4230
    %v4232 = vpop.xlane.xlu0 %4231
    %v4233 = vadd.f32 %v4164, %v4165
    %v4234 = vadd.f32 %v4233, %v4166
    %v4235 = vadd.f32 %v4234, %v4167
    %4236 = vadd.xlane.f32.xlu0 %v4235
    %v4237 = vpop.xlane.xlu0 %4236
    %v4238 = vadd.f32 %v4168, %v4169
    %v4239 = vadd.f32 %v4238, %v4170
    %v4240 = vadd.f32 %v4239, %v4171
    %4241 = vadd.xlane.f32.xlu0 %v4240
    %v4242 = vpop.xlane.xlu0 %4241
    %v4243 = vadd.f32 %v4172, %v4173
    %v4244 = vadd.f32 %v4243, %v4174
    %v4245 = vadd.f32 %v4244, %v4175
    %4246 = vadd.xlane.f32.xlu0 %v4245
    %v4247 = vpop.xlane.xlu0 %4246
    %v4248 = vadd.f32 %v4176, %v4177
    %v4249 = vadd.f32 %v4248, %v4178
    %v4250 = vadd.f32 %v4249, %v4179
    %4251 = vadd.xlane.f32.xlu0 %v4250
    %v4252 = vpop.xlane.xlu0 %4251
    %v4253 = vadd.f32 %v4180, %v4181
    %v4254 = vadd.f32 %v4253, %v4182
    %v4255 = vadd.f32 %v4254, %v4183
    %4256 = vadd.xlane.f32.xlu0 %v4255
    %v4257 = vpop.xlane.xlu0 %4256
    %v4258 = vadd.f32 %v4184, %v4185
    %v4259 = vadd.f32 %v4258, %v4186
    %v4260 = vadd.f32 %v4259, %v4187
    %4261 = vadd.xlane.f32.xlu0 %v4260
    %v4262 = vpop.xlane.xlu0 %4261
    %v4263 = vadd.f32 %v4188, %v4189
    %v4264 = vadd.f32 %v4263, %v4190
    %v4265 = vadd.f32 %v4264, %v4191
    %4266 = vadd.xlane.f32.xlu0 %v4265
    %v4267 = vpop.xlane.xlu0 %4266
    %v4268 = vadd.f32 %v4192, %v4193
    %v4269 = vadd.f32 %v4268, %v4194
    %v4270 = vadd.f32 %v4269, %v4195
    %4271 = vadd.xlane.f32.xlu0 %v4270
    %v4272 = vpop.xlane.xlu0 %4271
    %v4273 = vadd.f32 %v4196, %v4197
    %v4274 = vadd.f32 %v4273, %v4198
    %v4275 = vadd.f32 %v4274, %v4199
    %4276 = vadd.xlane.f32.xlu0 %v4275
    %v4277 = vpop.xlane.xlu0 %4276
    %v4278 = vadd.f32 %v4200, %v4201
    %v4279 = vadd.f32 %v4278, %v4202
    %v4280 = vadd.f32 %v4279, %v4203
    %4281 = vadd.xlane.f32.xlu0 %v4280
    %v4282 = vpop.xlane.xlu0 %4281
    %v4283 = vadd.f32 %v4204, %v4205
    %v4284 = vadd.f32 %v4283, %v4206
    %v4285 = vadd.f32 %v4284, %v4207
    %4286 = vadd.xlane.f32.xlu0 %v4285
    %v4287 = vpop.xlane.xlu0 %4286
    %v4288 = vld [vmem:[#allocation2] sm:$0x1]
    %v4290 = vperm.slane %v4288, 0
    %v4292 = vadd.f32 %v4212, %v4290
    %v4293 = vadd.f32 %v4217, %v4290
    %v4294 = vadd.f32 %v4222, %v4290
    %v4295 = vadd.f32 %v4227, %v4290
    %v4296 = vadd.f32 %v4232, %v4290
    %v4297 = vadd.f32 %v4237, %v4290
    %v4298 = vadd.f32 %v4242, %v4290
    %v4299 = vadd.f32 %v4247, %v4290
    %v4300 = vadd.f32 %v4252, %v4290
    %v4301 = vadd.f32 %v4257, %v4290
    %v4302 = vadd.f32 %v4262, %v4290
    %v4303 = vadd.f32 %v4267, %v4290
    %v4304 = vadd.f32 %v4272, %v4290
    %v4305 = vadd.f32 %v4277, %v4290
    %v4306 = vadd.f32 %v4282, %v4290
    %v4307 = vadd.f32 %v4287, %v4290
    %vm4308 = vcmask 7168
    %4309 = vst.msk [vmem:[%s9] sm:$0xff] %vm4308, %v4292
    %4310 = vst.msk [vmem:[%s9 + $0x8] sm:$0xff] %vm4308, %v4293
    %4311 = vst.msk [vmem:[%s9 + $0x10] sm:$0xff] %vm4308, %v4294
    %4312 = vst.msk [vmem:[%s9 + $0x18] sm:$0xff] %vm4308, %v4295
    %4313 = vst.msk [vmem:[%s9 + $0x20] sm:$0xff] %vm4308, %v4296
    %4314 = vst.msk [vmem:[%s9 + $0x28] sm:$0xff] %vm4308, %v4297
    %4315 = vst.msk [vmem:[%s9 + $0x30] sm:$0xff] %vm4308, %v4298
    %4316 = vst.msk [vmem:[%s9 + $0x38] sm:$0xff] %vm4308, %v4299
    %4317 = vst.msk [vmem:[%s9 + $0x40] sm:$0xff] %vm4308, %v4300
    %4318 = vst.msk [vmem:[%s9 + $0x48] sm:$0xff] %vm4308, %v4301
    %4319 = vst.msk [vmem:[%s9 + $0x50] sm:$0xff] %vm4308, %v4302
    %4320 = vst.msk [vmem:[%s9 + $0x58] sm:$0xff] %vm4308, %v4303
    %4321 = vst.msk [vmem:[%s9 + $0x60] sm:$0xff] %vm4308, %v4304
    %4322 = vst.msk [vmem:[%s9 + $0x68] sm:$0xff] %vm4308, %v4305
    %4323 = vst.msk [vmem:[%s9 + $0x70] sm:$0xff] %vm4308, %v4306
    %4324 = vst.msk [vmem:[%s9 + $0x78] sm:$0xff] %vm4308, %v4307
    // Predicated region
    $region46: #{tpu_custom_call.1} parent=1 // pred_check
      _
    $region47: #{tpu_custom_call.1} parent=1 // pred_check_branch
      %4326 = sbr.rel (0) target = $region49
    $region48: #{tpu_custom_call.1} parent=1 // pred_region
      _
    $region49: #{tpu_custom_call.1} parent=1 // pred_fallthru
      _
    // Predicated region
    $region50: #{tpu_custom_call.1} parent=1 // pred_check
      _
    $region51: #{tpu_custom_call.1} parent=1 // pred_check_branch
      %4328 = sbr.rel (0) target = $region53
    $region52: #{tpu_custom_call.1} parent=1 // pred_region
      _
    $region53: #{tpu_custom_call.1} parent=1 // pred_fallthru
      _
    %4329 = vsyncpa [#allocation4], 1
    %4330 = vsyncpa [#allocation6], 1

</llo_original>
